<compile_context>
chip_gen: v5e
topology: v5e:2x2
jax: 0.10.0
libtpu: 0.0.40
codegen_flags: <defaults>
</compile_context>

<pallas_src>
import jax
import jax.numpy as jnp
from jax import lax
from jax.experimental import pallas as pl
from jax.experimental.pallas import tpu as pltpu

_SQRT1_2 = 0.7071067811865476   # 1/sqrt(2)
_LN_EPS = 1e-5                  # torch.nn.LayerNorm default eps
_NEG_INIT = -1.0e30             # finite "-inf" init for the running max (NaN-safe)


def _attention_pooling_kernel(x_ref, mask_ref, w1_ref, b1_ref, g_ref, beta_ref,
                              w2_ref, b2_ref, out_ref, m_sc, l_sc, acc_sc):
    s_idx = pl.program_id(1)

    @pl.when(s_idx == 0)
    def _init():
        m_sc[...] = jnp.full_like(m_sc, _NEG_INIT)
        l_sc[...] = jnp.zeros_like(l_sc)
        acc_sc[...] = jnp.zeros_like(acc_sc)

    x3 = x_ref[...]                                   # (TB, TS, H) bf16
    TB, TS, H = x3.shape
    x2 = x3.reshape(TB * TS, H)

    # ---- Linear(H, H): bf16 operands on the MXU, f32 accumulation ----------
    h = jnp.dot(x2, w1_ref[...], preferred_element_type=jnp.float32) + b1_ref[...]

    # ---- LayerNorm over the feature axis (f32) ------------------------------
    mu = jnp.mean(h, axis=-1, keepdims=True)
    var = jnp.mean(jnp.square(h - mu), axis=-1, keepdims=True)
    hn = (h - mu) * lax.rsqrt(var + _LN_EPS) * g_ref[...] + beta_ref[...]

    # ---- GELU (exact erf form; matches torch.nn.GELU() default) ------------
    ge = 0.5 * hn * (1.0 + lax.erf(hn * _SQRT1_2))

    # ---- per-token score, lane-dense layout: (TB, TS), S on lanes -----------
    scores = jnp.sum(ge.reshape(TB, TS, H) * w2_ref[...], axis=-1) + b2_ref[0]
    scores = jnp.where(mask_ref[...] == 0.0, -jnp.inf, scores)    # (TB, TS)

    # ---- online softmax update (flash-style) --------------------------------
    m_prev = m_sc[...]                                            # (TB, 1)
    m_new = jnp.maximum(m_prev, jnp.max(scores, axis=-1, keepdims=True))
    alpha = jnp.exp(m_prev - m_new)                               # <= 1, never NaN
    p = jnp.exp(scores - m_new)                                   # masked -> exp(-inf) = 0
    l_sc[...] = alpha * l_sc[...] + jnp.sum(p, axis=-1, keepdims=True)

    # weighted partial sum of hidden states on the MXU (batched (1,TS)x(TS,H))
    pv = jnp.einsum('bqt,bth->bqh',
                    p.reshape(TB, 1, TS).astype(x3.dtype), x3,
                    preferred_element_type=jnp.float32)
    acc_sc[...] = alpha * acc_sc[...] + pv.reshape(TB, H)
    m_sc[...] = m_new

    @pl.when(s_idx == pl.num_programs(1) - 1)
    def _finalize():
        # TODO(synk): a fully-masked row yields l == 0 (0 * inf), i.e. the same
        # NaN-ish degenerate case as PyTorch; guard here if padding-only rows occur.
        out_ref[...] = (acc_sc[...] *
                        pl.reciprocal(l_sc[...], approx=True)).astype(out_ref.dtype)


def attention_pooling(last_hidden_state, attention_mask, params,
                      *, block_b=None, block_s=None):
    """last_hidden_state: (B, S, H) float; attention_mask: (B, S) int/float."""
    w1, b1, gamma, beta, w2, b2 = params
    B, S, H = last_hidden_state.shape

    TB = B if block_b is None else block_b
    TS = S if block_s is None else block_s
    assert B % TB == 0 and S % TS == 0, "block sizes must divide (B, S)"
    grid = (B // TB, S // TS)

    x_bf16 = last_hidden_state.astype(jnp.bfloat16)   # bf16 MXU operand, half HBM traffic
    w1_bf16 = w1.astype(jnp.bfloat16)                 # half W1 VMEM residency
    mask2 = attention_mask.astype(jnp.float32).reshape(B, S)   # lane-dense mask
    b2_smem = b2.astype(jnp.float32).reshape(1)       # scalar bias -> SMEM

    cost = pl.CostEstimate(
        flops=2 * B * S * H * H + 16 * B * S * H,
        transcendentals=B * S * H + 2 * B * S,
        bytes_accessed=2 * B * S * H + 4 * B * S + 2 * H * H + 16 * H + 4 * B * H + 4,
    )

    return pl.pallas_call(
        _attention_pooling_kernel,
        out_shape=jax.ShapeDtypeStruct((B, H), jnp.float32),
        grid_spec=pltpu.PrefetchScalarGridSpec(
            num_scalar_prefetch=0,
            grid=grid,
            in_specs=[
                pl.BlockSpec((TB, TS, H), lambda b, s: (b, s, 0)),   # hidden states (bf16)
                pl.BlockSpec((TB, TS), lambda b, s: (b, s)),         # mask, lane-dense
                pl.BlockSpec((H, H), lambda b, s: (0, 0)),           # W1 (in, out), bf16
                pl.BlockSpec((1, H), lambda b, s: (0, 0)),           # b1
                pl.BlockSpec((1, H), lambda b, s: (0, 0)),           # LN gamma
                pl.BlockSpec((1, H), lambda b, s: (0, 0)),           # LN beta
                pl.BlockSpec((1, H), lambda b, s: (0, 0)),           # W2 (row vector)
                pl.BlockSpec(memory_space=pltpu.MemorySpace.SMEM),   # b2 scalar
            ],
            out_specs=pl.BlockSpec((TB, H), lambda b, s: (b, 0)),
            scratch_shapes=[
                pltpu.VMEM((TB, 1), jnp.float32),    # running max   m
                pltpu.VMEM((TB, 1), jnp.float32),    # running denom l
                pltpu.VMEM((TB, H), jnp.float32),    # running weighted sum
            ],
        ),
        compiler_params=pltpu.CompilerParams(
            dimension_semantics=("parallel", "arbitrary")),
        cost_estimate=cost,
    )(x_bf16, mask2, w1_bf16,
      b1.astype(jnp.float32), gamma.astype(jnp.float32),
      beta.astype(jnp.float32), w2.astype(jnp.float32), b2_smem)


def _reference(last_hidden_state, attention_mask, params):
    """Pure-JAX f32 reference mirroring the PyTorch forward."""
    w1, b1, gamma, beta, w2, b2 = params
    h = last_hidden_state @ w1 + b1
    mu = jnp.mean(h, axis=-1, keepdims=True)
    var = jnp.mean(jnp.square(h - mu), axis=-1, keepdims=True)
    hn = (h - mu) / jnp.sqrt(var + _LN_EPS) * gamma + beta
    ge = 0.5 * hn * (1.0 + lax.erf(hn * _SQRT1_2))
    w = jnp.sum(ge * w2, axis=-1, keepdims=True) + b2[0, 0]       # (B, S, 1)
    w = jnp.where(attention_mask[..., None] == 0, -jnp.inf, w)
    w = jax.nn.softmax(w, axis=1)
    return jnp.sum(w * last_hidden_state, axis=1)


def init_params(key, in_dim):
    k1, k2, k3, k4 = jax.random.split(key, 4)
    scale = 0.05
    w1 = scale * jax.random.normal(k1, (in_dim, in_dim), jnp.float32)
    b1 = scale * jax.random.normal(k2, (1, in_dim), jnp.float32)
    gamma = jnp.ones((1, in_dim), jnp.float32)
    beta = jnp.zeros((1, in_dim), jnp.float32)
    w2 = scale * jax.random.normal(k3, (1, in_dim), jnp.float32)
    b2 = scale * jax.random.normal(k4, (1, 1), jnp.float32)
    return (w1, b1, gamma, beta, w2, b2)


if __name__ == "__main__":
    B, S, H = 4, 256, 128
    key = jax.random.PRNGKey(0)
    kx, kp = jax.random.split(key)

    last_hidden_state = jax.random.normal(kx, (B, S, H), jnp.float32)
    # deterministic per-row valid lengths; row 3 leaves its second S-tile fully
    # masked, exercising the online-softmax masked-tile path.
    lengths = jnp.array([S, 200, 129, 64], dtype=jnp.int32)
    attention_mask = (jnp.arange(S)[None, :] < lengths[:, None]).astype(jnp.int32)

    params = init_params(kp, H)

    # block_s=128 -> grid (1, 2): two sequence tiles per batch block.
    out = attention_pooling(last_hidden_state, attention_mask, params, block_s=128)
    out = jax.block_until_ready(out)

    ref = _reference(last_hidden_state, attention_mask, params)
    assert out.shape == (B, H)
    err = jnp.max(jnp.abs(out - ref))
    # bf16 MXU operands + approx reciprocal -> looser tolerance vs f32 reference.
    assert jnp.allclose(out, ref, atol=2e-2, rtol=2e-2), f"mismatch: max abs err {err}"

    print("KERNEL_OK")
</pallas_src>

<mosaic_0001>
module attributes {stable_mosaic.version = 11 : i64} {
  func.func @_attention_pooling_kernel(%arg0: i32, %arg1: i32, %arg2: memref<4x128x128xbf16, #tpu.memory_space<vmem>>, %arg3: memref<4x128xf32, #tpu.memory_space<vmem>>, %arg4: memref<128x128xbf16, #tpu.memory_space<vmem>>, %arg5: memref<1x128xf32, #tpu.memory_space<vmem>>, %arg6: memref<1x128xf32, #tpu.memory_space<vmem>>, %arg7: memref<1x128xf32, #tpu.memory_space<vmem>>, %arg8: memref<1x128xf32, #tpu.memory_space<vmem>>, %arg9: memref<1xf32, #tpu.memory_space<smem>>, %arg10: memref<4x128xf32, #tpu.memory_space<vmem>>, %arg11: memref<4x1xf32, #tpu.memory_space<vmem>>, %arg12: memref<4x1xf32, #tpu.memory_space<vmem>>, %arg13: memref<4x128xf32, #tpu.memory_space<vmem>>) attributes {dimension_semantics = [#tpu.dimension_semantics<parallel>, #tpu.dimension_semantics<arbitrary>], iteration_bounds = array<i64: 1, 2>, scalar_prefetch = 0 : i64, scratch_operands = 3 : i64, tpu.core_type = #tpu.core_type<tc>, window_params = [{transform_indices = @transform_0, window_bounds = array<i64: 4, 128, 128>}, {transform_indices = @transform_1, window_bounds = array<i64: 4, 128>}, {pipeline_mode = #tpu.pipeline_mode<synchronous>, transform_indices = @transform_2, window_bounds = array<i64: 128, 128>}, {pipeline_mode = #tpu.pipeline_mode<synchronous>, transform_indices = @transform_3, window_bounds = array<i64: 1, 128>}, {pipeline_mode = #tpu.pipeline_mode<synchronous>, transform_indices = @transform_4, window_bounds = array<i64: 1, 128>}, {pipeline_mode = #tpu.pipeline_mode<synchronous>, transform_indices = @transform_5, window_bounds = array<i64: 1, 128>}, {pipeline_mode = #tpu.pipeline_mode<synchronous>, transform_indices = @transform_6, window_bounds = array<i64: 1, 128>}, {transform_indices = @transform_7, window_bounds = array<i64: 1>}, {transform_indices = @transform_8, window_bounds = array<i64: 4, 128>}]} {
    %c0_i32 = arith.constant 0 : i32
    %0 = arith.cmpi eq, %arg1, %c0_i32 : i32
    %1 = arith.extui %0 : i1 to i32
    %c0_i32_0 = arith.constant 0 : i32
    %2 = arith.cmpi ne, %1, %c0_i32_0 : i32
    scf.if %2 {
      %cst_43 = arith.constant -1.000000e+30 : f32
      %84 = vector.broadcast %cst_43 : f32 to vector<4x1xf32>
      %c0_44 = arith.constant 0 : index
      %c0_45 = arith.constant 0 : index
      %85 = vector.load %arg11[%c0_44, %c0_45] : memref<4x1xf32, #tpu.memory_space<vmem>>, vector<4x1xf32>
      tpu.vector_store %arg11[%c0_44, %c0_45], %84 {strides = array<i32>} : memref<4x1xf32, #tpu.memory_space<vmem>>, vector<4x1xf32>,
      %cst_46 = arith.constant 0.000000e+00 : f32
      %86 = vector.broadcast %cst_46 : f32 to vector<4x1xf32>
      %c0_47 = arith.constant 0 : index
      %c0_48 = arith.constant 0 : index
      %87 = vector.load %arg12[%c0_47, %c0_48] : memref<4x1xf32, #tpu.memory_space<vmem>>, vector<4x1xf32>
      tpu.vector_store %arg12[%c0_47, %c0_48], %86 {strides = array<i32>} : memref<4x1xf32, #tpu.memory_space<vmem>>, vector<4x1xf32>,
      %cst_49 = arith.constant 0.000000e+00 : f32
      %88 = vector.broadcast %cst_49 : f32 to vector<4x128xf32>
      %c0_50 = arith.constant 0 : index
      %c0_51 = arith.constant 0 : index
      %89 = vector.load %arg13[%c0_50, %c0_51] : memref<4x128xf32, #tpu.memory_space<vmem>>, vector<4x128xf32>
      tpu.vector_store %arg13[%c0_50, %c0_51], %88 {strides = array<i32>} : memref<4x128xf32, #tpu.memory_space<vmem>>, vector<4x128xf32>,
    } else {
    }
    %c0 = arith.constant 0 : index
    %c0_1 = arith.constant 0 : index
    %c0_2 = arith.constant 0 : index
    %3 = vector.load %arg2[%c0, %c0_1, %c0_2] : memref<4x128x128xbf16, #tpu.memory_space<vmem>>, vector<4x128x128xbf16>
    %4 = vector.shape_cast %3 : vector<4x128x128xbf16> to vector<512x128xbf16>
    %c0_3 = arith.constant 0 : index
    %c0_4 = arith.constant 0 : index
    %5 = vector.load %arg4[%c0_3, %c0_4] : memref<128x128xbf16, #tpu.memory_space<vmem>>, vector<128x128xbf16>
    %cst = arith.constant dense<0.000000e+00> : vector<512x128xf32>
    %6 = tpu.matmul %4, %5, %cst {dimension_numbers = #tpu.dot_dimension_numbers<[1], [0], [0], [1], [0, 0, 1, 1], [], []>} : vector<512x128xbf16>, vector<128x128xbf16>, vector<512x128xf32> -> vector<512x128xf32>
    %c0_5 = arith.constant 0 : index
    %c0_6 = arith.constant 0 : index
    %7 = vector.load %arg5[%c0_5, %c0_6] : memref<1x128xf32, #tpu.memory_space<vmem>>, vector<1x128xf32>
    %8 = vector.broadcast %7 : vector<1x128xf32> to vector<512x128xf32>
    %9 = arith.addf %6, %8 : vector<512x128xf32>
    %cst_7 = arith.constant dense<0.000000e+00> : vector<512xf32>
    %10 = vector.multi_reduction <add>, %9, %cst_7 [1] : vector<512x128xf32> to vector<512xf32>
    %11 = vector.shape_cast %10 : vector<512xf32> to vector<512x1xf32>
    %cst_8 = arith.constant 1.280000e+02 : f32
    %12 = vector.broadcast %cst_8 : f32 to vector<512x1xf32>
    %13 = arith.divf %11, %12 : vector<512x1xf32>
    %14 = vector.broadcast %13 : vector<512x1xf32> to vector<512x128xf32>
    %15 = arith.subf %9, %14 : vector<512x128xf32>
    %16 = arith.mulf %15, %15 : vector<512x128xf32>
    %cst_9 = arith.constant dense<0.000000e+00> : vector<512xf32>
    %17 = vector.multi_reduction <add>, %16, %cst_9 [1] : vector<512x128xf32> to vector<512xf32>
    %18 = vector.shape_cast %17 : vector<512xf32> to vector<512x1xf32>
    %cst_10 = arith.constant 1.280000e+02 : f32
    %19 = vector.broadcast %cst_10 : f32 to vector<512x1xf32>
    %20 = arith.divf %18, %19 : vector<512x1xf32>
    %21 = vector.broadcast %13 : vector<512x1xf32> to vector<512x128xf32>
    %22 = arith.subf %9, %21 : vector<512x128xf32>
    %cst_11 = arith.constant 9.99999974E-6 : f32
    %23 = vector.broadcast %cst_11 : f32 to vector<512x1xf32>
    %24 = arith.addf %20, %23 : vector<512x1xf32>
    %25 = math.rsqrt %24 : vector<512x1xf32>
    %26 = vector.broadcast %25 : vector<512x1xf32> to vector<512x128xf32>
    %27 = arith.mulf %22, %26 : vector<512x128xf32>
    %c0_12 = arith.constant 0 : index
    %c0_13 = arith.constant 0 : index
    %28 = vector.load %arg6[%c0_12, %c0_13] : memref<1x128xf32, #tpu.memory_space<vmem>>, vector<1x128xf32>
    %29 = vector.broadcast %28 : vector<1x128xf32> to vector<512x128xf32>
    %30 = arith.mulf %27, %29 : vector<512x128xf32>
    %c0_14 = arith.constant 0 : index
    %c0_15 = arith.constant 0 : index
    %31 = vector.load %arg7[%c0_14, %c0_15] : memref<1x128xf32, #tpu.memory_space<vmem>>, vector<1x128xf32>
    %32 = vector.broadcast %31 : vector<1x128xf32> to vector<512x128xf32>
    %33 = arith.addf %30, %32 : vector<512x128xf32>
    %cst_16 = arith.constant 5.000000e-01 : f32
    %34 = vector.broadcast %cst_16 : f32 to vector<512x128xf32>
    %35 = arith.mulf %34, %33 : vector<512x128xf32>
    %cst_17 = arith.constant 0.707106769 : f32
    %36 = vector.broadcast %cst_17 : f32 to vector<512x128xf32>
    %37 = arith.mulf %33, %36 : vector<512x128xf32>
    %38 = math.erf %37 : vector<512x128xf32>
    %cst_18 = arith.constant 1.000000e+00 : f32
    %39 = vector.broadcast %cst_18 : f32 to vector<512x128xf32>
    %40 = arith.addf %39, %38 : vector<512x128xf32>
    %41 = arith.mulf %35, %40 : vector<512x128xf32>
    %42 = vector.shape_cast %41 : vector<512x128xf32> to vector<4x128x128xf32>
    %c0_19 = arith.constant 0 : index
    %c0_20 = arith.constant 0 : index
    %43 = vector.load %arg8[%c0_19, %c0_20] : memref<1x128xf32, #tpu.memory_space<vmem>>, vector<1x128xf32>
    %44 = vector.shape_cast %43 : vector<1x128xf32> to vector<1x1x128xf32>
    %45 = vector.broadcast %44 : vector<1x1x128xf32> to vector<4x128x128xf32>
    %46 = arith.mulf %42, %45 : vector<4x128x128xf32>
    %cst_21 = arith.constant dense<0.000000e+00> : vector<4x128xf32>
    %47 = vector.multi_reduction <add>, %46, %cst_21 [2] : vector<4x128x128xf32> to vector<4x128xf32>
    %c0_22 = arith.constant 0 : index
    %48 = memref.load %arg9[%c0_22] : memref<1xf32, #tpu.memory_space<smem>>
    %49 = vector.broadcast %48 : f32 to vector<4x128xf32>
    %50 = arith.addf %47, %49 : vector<4x128xf32>
    %c0_23 = arith.constant 0 : index
    %c0_24 = arith.constant 0 : index
    %51 = vector.load %arg3[%c0_23, %c0_24] : memref<4x128xf32, #tpu.memory_space<vmem>>, vector<4x128xf32>
    %cst_25 = arith.constant 0.000000e+00 : f32
    %52 = vector.broadcast %cst_25 : f32 to vector<4x128xf32>
    %53 = arith.cmpf oeq, %51, %52 : vector<4x128xf32>
    %cst_26 = arith.constant 0xFF800000 : f32
    %54 = vector.broadcast %cst_26 : f32 to vector<4x128xf32>
    %55 = arith.select %53, %54, %50 : vector<4x128xi1>, vector<4x128xf32>
    %c0_27 = arith.constant 0 : index
    %c0_28 = arith.constant 0 : index
    %56 = vector.load %arg11[%c0_27, %c0_28] : memref<4x1xf32, #tpu.memory_space<vmem>>, vector<4x1xf32>
    %cst_29 = arith.constant dense<0xFF800000> : vector<4xf32>
    %57 = vector.multi_reduction <maximumf>, %55, %cst_29 [1] : vector<4x128xf32> to vector<4xf32>
    %58 = vector.shape_cast %57 : vector<4xf32> to vector<4x1xf32>
    %59 = arith.maximumf %56, %58 : vector<4x1xf32>
    %60 = arith.subf %56, %59 : vector<4x1xf32>
    %61 = math.exp %60 : vector<4x1xf32>
    %62 = vector.broadcast %59 : vector<4x1xf32> to vector<4x128xf32>
    %63 = arith.subf %55, %62 : vector<4x128xf32>
    %64 = math.exp %63 : vector<4x128xf32>
    %c0_30 = arith.constant 0 : index
    %c0_31 = arith.constant 0 : index
    %65 = vector.load %arg12[%c0_30, %c0_31] : memref<4x1xf32, #tpu.memory_space<vmem>>, vector<4x1xf32>
    %66 = arith.mulf %61, %65 : vector<4x1xf32>
    %cst_32 = arith.constant dense<0.000000e+00> : vector<4xf32>
    %67 = vector.multi_reduction <add>, %64, %cst_32 [1] : vector<4x128xf32> to vector<4xf32>
    %68 = vector.shape_cast %67 : vector<4xf32> to vector<4x1xf32>
    %69 = arith.addf %66, %68 : vector<4x1xf32>
    %c0_33 = arith.constant 0 : index
    %c0_34 = arith.constant 0 : index
    %70 = vector.load %arg12[%c0_33, %c0_34] : memref<4x1xf32, #tpu.memory_space<vmem>>, vector<4x1xf32>
    tpu.vector_store %arg12[%c0_33, %c0_34], %69 {strides = array<i32>} : memref<4x1xf32, #tpu.memory_space<vmem>>, vector<4x1xf32>,
    %71 = vector.shape_cast %64 : vector<4x128xf32> to vector<4x1x128xf32>
    %72 = arith.truncf %71 : vector<4x1x128xf32> to vector<4x1x128xbf16>
    "tpu.trace_start"() <{level = 10 : i32, message = "bqt,bth->bqh"}> : () -> ()
    %cst_35 = arith.constant dense<0.000000e+00> : vector<4x1x128xf32>
    %73 = tpu.matmul %72, %3, %cst_35 {dimension_numbers = #tpu.dot_dimension_numbers<[2], [1], [1], [2], [0, 0, 0, 1, 1, 2], [0], [0]>} : vector<4x1x128xbf16>, vector<4x128x128xbf16>, vector<4x1x128xf32> -> vector<4x1x128xf32>
    "tpu.trace_stop"() : () -> ()
    %c0_36 = arith.constant 0 : index
    %c0_37 = arith.constant 0 : index
    %74 = vector.load %arg13[%c0_36, %c0_37] : memref<4x128xf32, #tpu.memory_space<vmem>>, vector<4x128xf32>
    %75 = vector.broadcast %61 : vector<4x1xf32> to vector<4x128xf32>
    %76 = arith.mulf %75, %74 : vector<4x128xf32>
    %77 = vector.shape_cast %73 : vector<4x1x128xf32> to vector<4x128xf32>
    %78 = arith.addf %76, %77 : vector<4x128xf32>
    %c0_38 = arith.constant 0 : index
    %c0_39 = arith.constant 0 : index
    %79 = vector.load %arg13[%c0_38, %c0_39] : memref<4x128xf32, #tpu.memory_space<vmem>>, vector<4x128xf32>
    tpu.vector_store %arg13[%c0_38, %c0_39], %78 {strides = array<i32>} : memref<4x128xf32, #tpu.memory_space<vmem>>, vector<4x128xf32>,
    %c0_40 = arith.constant 0 : index
    %c0_41 = arith.constant 0 : index
    %80 = vector.load %arg11[%c0_40, %c0_41] : memref<4x1xf32, #tpu.memory_space<vmem>>, vector<4x1xf32>
    tpu.vector_store %arg11[%c0_40, %c0_41], %59 {strides = array<i32>} : memref<4x1xf32, #tpu.memory_space<vmem>>, vector<4x1xf32>,
    %c1_i32 = arith.constant 1 : i32
    %81 = arith.cmpi eq, %arg1, %c1_i32 : i32
    %82 = arith.extui %81 : i1 to i32
    %c0_i32_42 = arith.constant 0 : i32
    %83 = arith.cmpi ne, %82, %c0_i32_42 : i32
    scf.if %83 {
      %c0_43 = arith.constant 0 : index
      %c0_44 = arith.constant 0 : index
      %84 = vector.load %arg13[%c0_43, %c0_44] : memref<4x128xf32, #tpu.memory_space<vmem>>, vector<4x128xf32>
      %c0_45 = arith.constant 0 : index
      %c0_46 = arith.constant 0 : index
      %85 = vector.load %arg12[%c0_45, %c0_46] : memref<4x1xf32, #tpu.memory_space<vmem>>, vector<4x1xf32>
      %86 = tpu.reciprocal %85 {approx = true} : vector<4x1xf32> -> vector<4x1xf32>
      %87 = vector.broadcast %86 : vector<4x1xf32> to vector<4x128xf32>
      %88 = arith.mulf %84, %87 : vector<4x128xf32>
      %c0_47 = arith.constant 0 : index
      %c0_48 = arith.constant 0 : index
      %89 = vector.load %arg10[%c0_47, %c0_48] : memref<4x128xf32, #tpu.memory_space<vmem>>, vector<4x128xf32>
      tpu.vector_store %arg10[%c0_47, %c0_48], %88 {strides = array<i32>} : memref<4x128xf32, #tpu.memory_space<vmem>>, vector<4x128xf32>,
    } else {
    }
    return
  }
  func.func @transform_0(%arg0: i32, %arg1: i32) -> (i32, i32, i32) {
    %c0_i32 = arith.constant 0 : i32
    %c0_i32_0 = arith.constant 0 : i32
    return %arg0, %arg1, %c0_i32 : i32, i32, i32
  }
  func.func @transform_1(%arg0: i32, %arg1: i32) -> (i32, i32) {
    %c0_i32 = arith.constant 0 : i32
    return %arg0, %arg1 : i32, i32
  }
  func.func @transform_2(%arg0: i32, %arg1: i32) -> (i32, i32) {
    %c0_i32 = arith.constant 0 : i32
    %c0_i32_0 = arith.constant 0 : i32
    %c0_i32_1 = arith.constant 0 : i32
    return %c0_i32, %c0_i32_0 : i32, i32
  }
  func.func @transform_3(%arg0: i32, %arg1: i32) -> (i32, i32) {
    %c0_i32 = arith.constant 0 : i32
    %c0_i32_0 = arith.constant 0 : i32
    %c0_i32_1 = arith.constant 0 : i32
    return %c0_i32, %c0_i32_0 : i32, i32
  }
  func.func @transform_4(%arg0: i32, %arg1: i32) -> (i32, i32) {
    %c0_i32 = arith.constant 0 : i32
    %c0_i32_0 = arith.constant 0 : i32
    %c0_i32_1 = arith.constant 0 : i32
    return %c0_i32, %c0_i32_0 : i32, i32
  }
  func.func @transform_5(%arg0: i32, %arg1: i32) -> (i32, i32) {
    %c0_i32 = arith.constant 0 : i32
    %c0_i32_0 = arith.constant 0 : i32
    %c0_i32_1 = arith.constant 0 : i32
    return %c0_i32, %c0_i32_0 : i32, i32
  }
  func.func @transform_6(%arg0: i32, %arg1: i32) -> (i32, i32) {
    %c0_i32 = arith.constant 0 : i32
    %c0_i32_0 = arith.constant 0 : i32
    %c0_i32_1 = arith.constant 0 : i32
    return %c0_i32, %c0_i32_0 : i32, i32
  }
  func.func @transform_7(%arg0: i32, %arg1: i32) -> i32 {
    %c0_i32 = arith.constant 0 : i32
    %c0_i32_0 = arith.constant 0 : i32
    return %c0_i32 : i32
  }
  func.func @transform_8(%arg0: i32, %arg1: i32) -> (i32, i32) {
    %c0_i32 = arith.constant 0 : i32
    %c0_i32_0 = arith.constant 0 : i32
    return %arg0, %c0_i32 : i32, i32
  }
}

</mosaic_0001>

<llo_original>
// kernel: tpu_custom_call.1
$region0: #{tpu_custom_call.1}
  #allocation0 [shape = 'u32[]', space=smem, size = 0x4, offset = 0x4, fixed_abs, tag = 'smem constant byte address 0x4 - core index']
  #allocation1 [shape = 'u32[72,128]{1,0:T(1,128)}', space=vmem, size = 0x9000, scoped, tag = 'internal scratch']
  #allocation2 [shape = 'f32[4,1]{1,0:T(4,128)}', space=vmem, size = 0x800, scoped, tag = 'scratch operand']
  #allocation3 [shape = 'f32[4,1]{1,0:T(4,128)}', space=vmem, size = 0x800, scoped, tag = 'scratch operand']
  #allocation4 [shape = 'f32[4,128]{1,0:T(4,128)}', space=vmem, size = 0x800, scoped, tag = 'scratch operand']
  #allocation5 [shape = 'f32[1]{0:T(128)S(6)}', space=smem, size = 0x200, scoped, tag = 'scoped memory for tpu_custom_call.1']
  #allocation13 [shape = 's32[]', space=sflag, size = 0x4, offset = 0, fixed_abs, tag = 'sflag constant byte address 0x0 - dummy sync flag']
  %s0 = inlined_call_operand.hbm [shape: bf16[4,256,128], index: 0, kind: input, shape index: {}]
  %s1 = inlined_call_operand.hbm [shape: f32[4,256], index: 1, kind: input, shape index: {}]
  %s2 = inlined_call_operand.hbm [shape: bf16[128,128], index: 2, kind: input, shape index: {}]
  %s3 = inlined_call_operand.vmem [shape: f32[1,128], index: 3, kind: input, shape index: {}]
  %s4 = inlined_call_operand.vmem [shape: f32[1,128], index: 4, kind: input, shape index: {}]
  %s5 = inlined_call_operand.vmem [shape: f32[1,128], index: 5, kind: input, shape index: {}]
  %s6 = inlined_call_operand.vmem [shape: f32[1,128], index: 6, kind: input, shape index: {}]
  %s7 = inlined_call_operand.<no memory space> [shape: f32[1], index: 7, kind: input, shape index: {}]
  %s8 = inlined_call_operand.hbm [shape: f32[4,128], index: 8, kind: output, shape index: {}]
  %s9 = sld [smem:[#allocation0]]
  $region85: #{tpu_custom_call.1} parent=0
    _
  %s11 = ssub.s32 1, %s9
  %s12 = scalar_select 0, %s11, %s9
  %13 = sst [smem:[#allocation5]] %s7
  $region1: #{tpu_custom_call.1} parent=0
    #allocation6 [shape = 'u8[262144]{0}', space=vmem, size = 0x40000, scoped, tag = 'input window, operand 0']
    #allocation7 [shape = 's32[2]{0}', space=sflag, size = 0x8, scoped, tag = 'scoped memory for tpu_custom_call.1']
    #allocation8 [shape = 's32[2]{0}', space=sflag, size = 0x8, scoped, tag = 'scoped memory for tpu_custom_call.1']
    #allocation9 [shape = 'u8[4096]{0}', space=vmem, size = 0x1000, scoped, tag = 'input window, operand 1']
    #allocation10 [shape = 's32[2]{0}', space=sflag, size = 0x8, scoped, tag = 'scoped memory for tpu_custom_call.1']
    #allocation11 [shape = 'u8[32768]{0}', space=vmem, size = 0x8000, scoped, tag = 'input window, operand 2, single buffered']
    #allocation12 [shape = 'u8[2048]{0}', space=vmem, size = 0x800, scoped, tag = 'output window, operand 0, single buffered']
    %14 = vsyncpa [#allocation7], 0
    %s15 = scalar_lea.sflag [#allocation7], 1
    %16 = vsyncpa %s15, 0
    %17 = vsyncpa [#allocation10], 0
    %s18 = scalar_lea.sflag [#allocation10], 1
    %19 = vsyncpa %s18, 0
    %20 = vsyncpa [#allocation8], 0
    loop: start=0, step=1, limit=4
    $region2: #{tpu_custom_call.1} parent=1 // loop_pre_header
      _
    $region3: #{tpu_custom_call.1} parent=1 // loop_header
      %s22 = sphi 0, %s26
      %p23 = scmp.ge.s32.totalorder %s22, 4
      %s29 = sphi 0, %s41
      %s30 = sphi 0, %s37
      %s31 = sphi 0, %s29
      %s32 = sphi 0, %s30
      %s33 = sphi 0, %s31
      %s34 = sphi 0, %s32
      %s46 = sphi 0, %s48
      %s49 = sphi 0, %s46
      %s50 = sphi 0, %s49
      %s66 = sphi 0, %s50
      %s74 = sphi 0, %s76
      %s77 = sphi 0, %s74
      %s78 = sphi 0, %s77
      %s94 = sphi 0, %s78
      %s98 = sphi 0, %s98
      %s100 = sphi 0, %s98
      %s101 = sphi 0, %s100
      %s115 = sphi 0, %s101
      %s119 = sphi 0, %s119
      %s121 = sphi 0, %s119
      %s122 = sphi 0, %s121
      %s136 = sphi 0, %s122
      %s140 = sphi 0, %s140
      %s142 = sphi 0, %s140
      %s143 = sphi 0, %s142
      %s157 = sphi 0, %s143
      %s161 = sphi 0, %s161
      %s163 = sphi 0, %s161
      %s164 = sphi 0, %s163
      %s178 = sphi 0, %s164
      %s182 = sphi 0, %s182
      %s184 = sphi 0, %s182
      %s185 = sphi 0, %s184
      %s199 = sphi 0, %s185
      %s203 = sphi 0, %s203
      %s205 = sphi 0, %s203
      %s206 = sphi 0, %s205
      %s220 = sphi 0, %s206
      %s226 = sphi 0, %s228
      %s229 = sphi 0, %s226
      %s230 = sphi 0, %s229
      %s246 = sphi 0, %s230
    $region4: #{tpu_custom_call.1} parent=1 // loop_header_branch
      %25 = sbr.rel (%p23) target = $region8
    $region5: #{tpu_custom_call.1} parent=1 // loop_body
      %s27 = ssub.s32 %s22, 1
      %s28 = ssub.s32 %s22, 2
      %s35 = sadd.s32 1, %s30
      %p36 = scmp.ge.s32.totalorder %s35, 2
      %s37 = scalar_select %p36, 0, %s35
      %s38 = sadd.s32 1, %s29
      %s39 = scalar_select %p36, %s38, %s29
      %p40 = scmp.ge.s32.totalorder %s39, 1
      %s41 = scalar_select %p40, 0, %s39
      %s42 = ssub.s32 %s29, %s41
      %s43 = ssub.s32 %s30, %s37
      %s44 = sor.u32 %s42, %s43
      %p45 = scmp.eq.s32.totalorder %s44, 0
      %s47 = sadd.s32 %s46, 1
      %s48 = scalar_select %p45, %s46, %s47
      %p51 = pneg %p45
      %p52 = scmp.eq.s32.totalorder %s22, 1
      %p53 = por %p51, %p52
      %p54 = scmp.ne.s32.totalorder %s46, %s49
      %p55 = scmp.eq.s32.totalorder %s22, 0
      %p56 = por %p54, %p55
      %p57 = scmp.ne.s32.totalorder %s46, %s49
      %p58 = scmp.eq.s32.totalorder %s27, 1
      %p59 = por %p57, %p58
      %p60 = scmp.ne.s32.totalorder %s49, %s50
      %p61 = scmp.eq.s32.totalorder %s27, 0
      %p62 = por %p60, %p61
      %p63 = scmp.ne.s32.totalorder %s49, %s50
      %p64 = scmp.eq.s32.totalorder %s28, 1
      %p65 = por %p63, %p64
      %p67 = scmp.ne.s32.totalorder %s50, %s66
      %p68 = scmp.eq.s32.totalorder %s28, 0
      %p69 = por %p67, %p68
      %s70 = ssub.s32 %s29, %s41
      %s71 = ssub.s32 %s30, %s37
      %s72 = sor.u32 %s70, %s71
      %p73 = scmp.eq.s32.totalorder %s72, 0
      %s75 = sadd.s32 %s74, 1
      %s76 = scalar_select %p73, %s74, %s75
      %p79 = pneg %p73
      %p80 = scmp.eq.s32.totalorder %s22, 1
      %p81 = por %p79, %p80
      %p82 = scmp.ne.s32.totalorder %s74, %s77
      %p83 = scmp.eq.s32.totalorder %s22, 0
      %p84 = por %p82, %p83
      %p85 = scmp.ne.s32.totalorder %s74, %s77
      %p86 = scmp.eq.s32.totalorder %s27, 1
      %p87 = por %p85, %p86
      %p88 = scmp.ne.s32.totalorder %s77, %s78
      %p89 = scmp.eq.s32.totalorder %s27, 0
      %p90 = por %p88, %p89
      %p91 = scmp.ne.s32.totalorder %s77, %s78
      %p92 = scmp.eq.s32.totalorder %s28, 1
      %p93 = por %p91, %p92
      %p95 = scmp.ne.s32.totalorder %s78, %s94
      %p96 = scmp.eq.s32.totalorder %s28, 0
      %p97 = por %p95, %p96
      %s99 = sadd.s32 %s98, 1
      %p102 = scmp.eq.s32.totalorder %s22, 1
      %p103 = scmp.ne.s32.totalorder %s98, %s100
      %p104 = scmp.eq.s32.totalorder %s22, 0
      %p105 = por %p103, %p104
      %p106 = scmp.ne.s32.totalorder %s98, %s100
      %p107 = scmp.eq.s32.totalorder %s27, 1
      %p108 = por %p106, %p107
      %p109 = scmp.ne.s32.totalorder %s100, %s101
      %p110 = scmp.eq.s32.totalorder %s27, 0
      %p111 = por %p109, %p110
      %p112 = scmp.ne.s32.totalorder %s100, %s101
      %p113 = scmp.eq.s32.totalorder %s28, 1
      %p114 = por %p112, %p113
      %p116 = scmp.ne.s32.totalorder %s101, %s115
      %p117 = scmp.eq.s32.totalorder %s28, 0
      %p118 = por %p116, %p117
      %s120 = sadd.s32 %s119, 1
      %p123 = scmp.eq.s32.totalorder %s22, 1
      %p124 = scmp.ne.s32.totalorder %s119, %s121
      %p125 = scmp.eq.s32.totalorder %s22, 0
      %p126 = por %p124, %p125
      %p127 = scmp.ne.s32.totalorder %s119, %s121
      %p128 = scmp.eq.s32.totalorder %s27, 1
      %p129 = por %p127, %p128
      %p130 = scmp.ne.s32.totalorder %s121, %s122
      %p131 = scmp.eq.s32.totalorder %s27, 0
      %p132 = por %p130, %p131
      %p133 = scmp.ne.s32.totalorder %s121, %s122
      %p134 = scmp.eq.s32.totalorder %s28, 1
      %p135 = por %p133, %p134
      %p137 = scmp.ne.s32.totalorder %s122, %s136
      %p138 = scmp.eq.s32.totalorder %s28, 0
      %p139 = por %p137, %p138
      %s141 = sadd.s32 %s140, 1
      %p144 = scmp.eq.s32.totalorder %s22, 1
      %p145 = scmp.ne.s32.totalorder %s140, %s142
      %p146 = scmp.eq.s32.totalorder %s22, 0
      %p147 = por %p145, %p146
      %p148 = scmp.ne.s32.totalorder %s140, %s142
      %p149 = scmp.eq.s32.totalorder %s27, 1
      %p150 = por %p148, %p149
      %p151 = scmp.ne.s32.totalorder %s142, %s143
      %p152 = scmp.eq.s32.totalorder %s27, 0
      %p153 = por %p151, %p152
      %p154 = scmp.ne.s32.totalorder %s142, %s143
      %p155 = scmp.eq.s32.totalorder %s28, 1
      %p156 = por %p154, %p155
      %p158 = scmp.ne.s32.totalorder %s143, %s157
      %p159 = scmp.eq.s32.totalorder %s28, 0
      %p160 = por %p158, %p159
      %s162 = sadd.s32 %s161, 1
      %p165 = scmp.eq.s32.totalorder %s22, 1
      %p166 = scmp.ne.s32.totalorder %s161, %s163
      %p167 = scmp.eq.s32.totalorder %s22, 0
      %p168 = por %p166, %p167
      %p169 = scmp.ne.s32.totalorder %s161, %s163
      %p170 = scmp.eq.s32.totalorder %s27, 1
      %p171 = por %p169, %p170
      %p172 = scmp.ne.s32.totalorder %s163, %s164
      %p173 = scmp.eq.s32.totalorder %s27, 0
      %p174 = por %p172, %p173
      %p175 = scmp.ne.s32.totalorder %s163, %s164
      %p176 = scmp.eq.s32.totalorder %s28, 1
      %p177 = por %p175, %p176
      %p179 = scmp.ne.s32.totalorder %s164, %s178
      %p180 = scmp.eq.s32.totalorder %s28, 0
      %p181 = por %p179, %p180
      %s183 = sadd.s32 %s182, 1
      %p186 = scmp.eq.s32.totalorder %s22, 1
      %p187 = scmp.ne.s32.totalorder %s182, %s184
      %p188 = scmp.eq.s32.totalorder %s22, 0
      %p189 = por %p187, %p188
      %p190 = scmp.ne.s32.totalorder %s182, %s184
      %p191 = scmp.eq.s32.totalorder %s27, 1
      %p192 = por %p190, %p191
      %p193 = scmp.ne.s32.totalorder %s184, %s185
      %p194 = scmp.eq.s32.totalorder %s27, 0
      %p195 = por %p193, %p194
      %p196 = scmp.ne.s32.totalorder %s184, %s185
      %p197 = scmp.eq.s32.totalorder %s28, 1
      %p198 = por %p196, %p197
      %p200 = scmp.ne.s32.totalorder %s185, %s199
      %p201 = scmp.eq.s32.totalorder %s28, 0
      %p202 = por %p200, %p201
      %s204 = sadd.s32 %s203, 1
      %p207 = scmp.eq.s32.totalorder %s22, 1
      %p208 = scmp.ne.s32.totalorder %s203, %s205
      %p209 = scmp.eq.s32.totalorder %s22, 0
      %p210 = por %p208, %p209
      %p211 = scmp.ne.s32.totalorder %s203, %s205
      %p212 = scmp.eq.s32.totalorder %s27, 1
      %p213 = por %p211, %p212
      %p214 = scmp.ne.s32.totalorder %s205, %s206
      %p215 = scmp.eq.s32.totalorder %s27, 0
      %p216 = por %p214, %p215
      %p217 = scmp.ne.s32.totalorder %s205, %s206
      %p218 = scmp.eq.s32.totalorder %s28, 1
      %p219 = por %p217, %p218
      %p221 = scmp.ne.s32.totalorder %s206, %s220
      %p222 = scmp.eq.s32.totalorder %s28, 0
      %p223 = por %p221, %p222
      %s224 = ssub.s32 %s29, %s41
      %p225 = scmp.eq.s32.totalorder %s224, 0
      %s227 = sadd.s32 %s226, 1
      %s228 = scalar_select %p225, %s226, %s227
      %p231 = pneg %p225
      %p232 = scmp.eq.s32.totalorder %s22, 1
      %p233 = por %p231, %p232
      %p234 = scmp.ne.s32.totalorder %s226, %s229
      %p235 = scmp.eq.s32.totalorder %s22, 0
      %p236 = por %p234, %p235
      %p237 = scmp.ne.s32.totalorder %s226, %s229
      %p238 = scmp.eq.s32.totalorder %s27, 1
      %p239 = por %p237, %p238
      %p240 = scmp.ne.s32.totalorder %s229, %s230
      %p241 = scmp.eq.s32.totalorder %s27, 0
      %p242 = por %p240, %p241
      %p243 = scmp.ne.s32.totalorder %s229, %s230
      %p244 = scmp.eq.s32.totalorder %s28, 1
      %p245 = por %p243, %p244
      %p247 = scmp.ne.s32.totalorder %s230, %s246
      %p248 = scmp.eq.s32.totalorder %s28, 0
      %p249 = por %p247, %p248
      %p250 = scmp.le.s32.totalorder 1, %s22
      %p251 = scmp.lt.s32.totalorder %s22, 3
      %p252 = pnand %p250, %p251
      %p253 = pneg %p252
      // Predicated region
      $region9: #{tpu_custom_call.1} parent=5 // pred_check
        _
      $region10: #{tpu_custom_call.1} parent=5 // pred_check_branch
        %255 = sbr.rel (%p252) target = $region12
      $region11: #{tpu_custom_call.1} parent=5 // pred_region
        %s256 = ssub.s32 %s22, 1
        // Predicated region
        $region13: #{tpu_custom_call.1} parent=11 // pred_check
          %p257 = pneg %p111
        $region14: #{tpu_custom_call.1} parent=11 // pred_check_branch
          %259 = sbr.rel (%p257) target = $region16
        $region15: #{tpu_custom_call.1} parent=11 // pred_region
          %261 = vsyncadd [#allocation10], 0
          %s262 = sshll.u32 %s2, 4
          %s263 = int_to_ptr.hbm [resolvable:$true] %s262
          %s264 = sshll.u32 [#allocation11], 4
          %s265 = int_to_ptr.vmem [resolvable:$true] %s264
          %270 = dma.hbm_to_vmem [thread:$0]  %s263, 1024, %s265, [#allocation10], 64, 64, 4
        $region16: #{tpu_custom_call.1} parent=11 // pred_fallthru
          _
        // Predicated region
        $region17: #{tpu_custom_call.1} parent=11 // pred_check
          %p271 = pneg %p132
        $region18: #{tpu_custom_call.1} parent=11 // pred_check_branch
          %273 = sbr.rel (%p271) target = $region20
        $region19: #{tpu_custom_call.1} parent=11 // pred_region
          _
        $region20: #{tpu_custom_call.1} parent=11 // pred_fallthru
          _
        // Predicated region
        $region21: #{tpu_custom_call.1} parent=11 // pred_check
          %p274 = pneg %p153
        $region22: #{tpu_custom_call.1} parent=11 // pred_check_branch
          %276 = sbr.rel (%p274) target = $region24
        $region23: #{tpu_custom_call.1} parent=11 // pred_region
          _
        $region24: #{tpu_custom_call.1} parent=11 // pred_fallthru
          _
        // Predicated region
        $region25: #{tpu_custom_call.1} parent=11 // pred_check
          %p277 = pneg %p174
        $region26: #{tpu_custom_call.1} parent=11 // pred_check_branch
          %279 = sbr.rel (%p277) target = $region28
        $region27: #{tpu_custom_call.1} parent=11 // pred_region
          _
        $region28: #{tpu_custom_call.1} parent=11 // pred_fallthru
          _
        // Predicated region
        $region29: #{tpu_custom_call.1} parent=11 // pred_check
          %p280 = pneg %p195
        $region30: #{tpu_custom_call.1} parent=11 // pred_check_branch
          %282 = sbr.rel (%p280) target = $region32
        $region31: #{tpu_custom_call.1} parent=11 // pred_region
          _
        $region32: #{tpu_custom_call.1} parent=11 // pred_fallthru
          _
        // Predicated region
        $region33: #{tpu_custom_call.1} parent=11 // pred_check
          %p283 = pneg %p216
        $region34: #{tpu_custom_call.1} parent=11 // pred_check_branch
          %285 = sbr.rel (%p283) target = $region36
        $region35: #{tpu_custom_call.1} parent=11 // pred_region
          _
        $region36: #{tpu_custom_call.1} parent=11 // pred_fallthru
          _
      $region12: #{tpu_custom_call.1} parent=5 // pred_fallthru
        _
      %p286 = scmp.lt.s32.totalorder %s22, 2
      // Predicated region
      $region37: #{tpu_custom_call.1} parent=5 // pred_check
        %p287 = pneg %p286
      $region38: #{tpu_custom_call.1} parent=5 // pred_check_branch
        %289 = sbr.rel (%p287) target = $region40
      $region39: #{tpu_custom_call.1} parent=5 // pred_region
        // Predicated region
        $region41: #{tpu_custom_call.1} parent=39 // pred_check
          %p290 = pneg %p56
        $region42: #{tpu_custom_call.1} parent=39 // pred_check_branch
          %292 = sbr.rel (%p290) target = $region44
        $region43: #{tpu_custom_call.1} parent=39 // pred_region
          #allocation14 [shape = 'u32[6]{0}', space=smem, size = 0x18, scoped, tag = 'DMA stride descriptor']
          %s293 = sand.u32 %s46, 1
          %s294 = scalar_lea.sflag [#allocation7], %s293
          %s295 = sand.u32 %s46, 1
          %s296 = smul.addr %s295, 256
          %s297 = scalar_lea.vmem [#allocation6], %s296
          %s298 = smul.u32 4, %s29
          %s299 = smul.u32 16, %s30
          %301 = vsyncadd %s294, 0
          %s302 = smul.addr %s298, 32
          %s303 = sadd.s32 %s299, %s302
          %s304 = smul.addr %s303, 4
          %s305 = scalar_lea.hbm %s0, %s304
          %s307 = sshll.u32 1, 14
          %s308 = sxor.u32 4294967295, %s307
          %s310 = sld [smem:[#allocation0]]
          %s311 = sadd.s32 2, %s310
          %s313 = sshll.u32 7, 26
          %s314 = sxor.u32 4294967295, %s313
          %s315 = sand.u32 0, %s314
          %s316 = sshll.u32 %s311, 26
          %s317 = sor.u32 %s315, %s316
          %s318 = sshll.u32 %s305, 4
          %s319 = int_to_ptr.hbm [resolvable:$true] %s318
          %s320 = sshll.u32 %s297, 4
          %s321 = int_to_ptr.vmem [resolvable:$true] %s320
          %327 = sst [smem:[#allocation14]] 2048
          %s328 = scalar_lea.smem [#allocation14], 1
          %329 = sst [smem:[%s328]] 1024
          %s330 = scalar_lea.smem [#allocation14], 2
          %331 = sst [smem:[%s330]] 16
          %s332 = scalar_lea.smem [#allocation14], 3
          %333 = sst [smem:[%s332]] 64
          %s334 = scalar_lea.smem [#allocation14], 4
          %335 = sst [smem:[%s334]] 64
          %s336 = scalar_lea.smem [#allocation14], 5
          %337 = sst [smem:[%s336]] 4
          %339 = dma.general %s319, 4096, %s321, %s294, [#allocation13], [#allocation14], %s317, 0
        $region44: #{tpu_custom_call.1} parent=39 // pred_fallthru
          _
        // Predicated region
        $region45: #{tpu_custom_call.1} parent=39 // pred_check
          %p340 = pneg %p84
        $region46: #{tpu_custom_call.1} parent=39 // pred_check_branch
          %342 = sbr.rel (%p340) target = $region48
        $region47: #{tpu_custom_call.1} parent=39 // pred_region
          %s343 = sand.u32 %s22, 1
          %s344 = scalar_lea.sflag [#allocation10], %s343
          %s345 = sand.u32 %s74, 1
          %s346 = smul.addr %s345, 4
          %s347 = scalar_lea.vmem [#allocation9], %s346
          %349 = vsyncadd %s344, 0
          %s350 = smul.addr %s29, 2
          %s351 = sadd.s32 %s30, %s350
          %s352 = smul.addr %s351, 4
          %s353 = scalar_lea.hbm %s1, %s352
          %s355 = sshll.u32 %s353, 4
          %s356 = int_to_ptr.hbm [resolvable:$true] %s355
          %s357 = sshll.u32 %s347, 4
          %s358 = int_to_ptr.vmem [resolvable:$true] %s357
          %360 = dma.hbm_to_vmem [thread:$0]  %s356, 64, %s358, %s344
        $region48: #{tpu_custom_call.1} parent=39 // pred_fallthru
          _
      $region40: #{tpu_custom_call.1} parent=5 // pred_fallthru
        _
      %p361 = scmp.le.s32.totalorder 1, %s22
      %p362 = scmp.lt.s32.totalorder %s22, 3
      %p363 = pnand %p361, %p362
      %p364 = pneg %p363
      // Predicated region
      $region49: #{tpu_custom_call.1} parent=5 // pred_check
        _
      $region50: #{tpu_custom_call.1} parent=5 // pred_check_branch
        %366 = sbr.rel (%p363) target = $region52
      $region51: #{tpu_custom_call.1} parent=5 // pred_region
        %s367 = ssub.s32 %s22, 1
        %s368 = sand.u32 %s49, 1
        %s369 = scalar_lea.sflag [#allocation7], %s368
        %s370 = sand.u32 %s49, 1
        %s371 = smul.addr %s370, 256
        %s372 = scalar_lea.vmem [#allocation6], %s371
        // Predicated region
        $region53: #{tpu_custom_call.1} parent=51 // pred_check
          %p373 = pneg %p62
        $region54: #{tpu_custom_call.1} parent=51 // pred_check_branch
          %375 = sbr.rel (%p373) target = $region56
        $region55: #{tpu_custom_call.1} parent=51 // pred_region
          %377 = dma.done %s369, 4096
        $region56: #{tpu_custom_call.1} parent=51 // pred_fallthru
          _
        %s378 = sand.u32 %s27, 1
        %s379 = scalar_lea.sflag [#allocation10], %s378
        %s380 = sand.u32 %s77, 1
        %s381 = smul.addr %s380, 4
        %s382 = scalar_lea.vmem [#allocation9], %s381
        // Predicated region
        $region57: #{tpu_custom_call.1} parent=51 // pred_check
          %p383 = pneg %p90
        $region58: #{tpu_custom_call.1} parent=51 // pred_check_branch
          %385 = sbr.rel (%p383) target = $region60
        $region59: #{tpu_custom_call.1} parent=51 // pred_region
          %387 = dma.done %s379, 64
        $region60: #{tpu_custom_call.1} parent=51 // pred_fallthru
          _
        // Predicated region
        $region61: #{tpu_custom_call.1} parent=51 // pred_check
          %p388 = pneg %p111
        $region62: #{tpu_custom_call.1} parent=51 // pred_check_branch
          %390 = sbr.rel (%p388) target = $region64
        $region63: #{tpu_custom_call.1} parent=51 // pred_region
          %392 = dma.done [#allocation10], 1024
        $region64: #{tpu_custom_call.1} parent=51 // pred_fallthru
          _
        %s393 = sand.u32 %s49, 1
        %s394 = scalar_lea.sflag [#allocation7], %s393
        %s395 = sand.u32 %s49, 1
        %s396 = smul.addr %s395, 256
        %s397 = scalar_lea.vmem [#allocation6], %s396
        %p398 = pneg %p62
        %p399 = pneg %p59
        %s400 = sand.u32 %s27, 1
        %s401 = scalar_lea.sflag [#allocation10], %s400
        %s402 = sand.u32 %s77, 1
        %s403 = smul.addr %s402, 4
        %s404 = scalar_lea.vmem [#allocation9], %s403
        %p405 = pneg %p90
        %p406 = pneg %p87
        %p407 = pneg %p111
        %p408 = pneg %p108
        %p409 = pneg %p132
        %p410 = pneg %p129
        %p411 = pneg %p153
        %p412 = pneg %p150
        %p413 = pneg %p174
        %p414 = pneg %p171
        %p415 = pneg %p195
        %p416 = pneg %p192
        %p417 = pneg %p216
        %p418 = pneg %p213
        %p419 = pneg %p242
        %p420 = pneg %p239
        %s421 = smul.u32 4, %s31
        %s422 = smul.u32 16, %s32
        %p423 = scmp.eq.s32.totalorder %s32, 0
        // Predicated region
        $region65: #{tpu_custom_call.1} parent=51 // pred_check
          %p424 = pneg %p423
        $region66: #{tpu_custom_call.1} parent=51 // pred_check_branch
          %426 = sbr.rel (%p424) target = $region68
        $region67: #{tpu_custom_call.1} parent=51 // pred_region
          %vm427 = vcmask 3072
          %428 = vst.msk [vmem:[#allocation2] sm:$0xf] %vm427, -1e+30
          %429 = vst.msk [vmem:[#allocation3] sm:$0xf] %vm427, 0.0
          %430 = vst [vmem:[#allocation4] sm:$0xf] 0.0
        $region68: #{tpu_custom_call.1} parent=51 // pred_fallthru
          _
        %v431 = vld [vmem:[%s372] sm:$0xf]
        %v432 = vld [vmem:[%s372 + $0x4] sm:$0xf]
        %v433 = vld [vmem:[%s372 + $0x8] sm:$0xf]
        %v434 = vld [vmem:[%s372 + $0xc] sm:$0xf]
        %v435 = vld [vmem:[%s372 + $0x10] sm:$0xf]
        %v436 = vld [vmem:[%s372 + $0x14] sm:$0xf]
        %v437 = vld [vmem:[%s372 + $0x18] sm:$0xf]
        %v438 = vld [vmem:[%s372 + $0x1c] sm:$0xf]
        %v439 = vld [vmem:[%s372 + $0x20] sm:$0xf]
        %v440 = vld [vmem:[%s372 + $0x24] sm:$0xf]
        %v441 = vld [vmem:[%s372 + $0x28] sm:$0xf]
        %v442 = vld [vmem:[%s372 + $0x2c] sm:$0xf]
        %v443 = vld [vmem:[%s372 + $0x30] sm:$0xf]
        %v444 = vld [vmem:[%s372 + $0x34] sm:$0xf]
        %v445 = vld [vmem:[%s372 + $0x38] sm:$0xf]
        %v446 = vld [vmem:[%s372 + $0x3c] sm:$0xf]
        %v447 = vld [vmem:[%s372 + $0x40] sm:$0xf]
        %v448 = vld [vmem:[%s372 + $0x44] sm:$0xf]
        %v449 = vld [vmem:[%s372 + $0x48] sm:$0xf]
        %v450 = vld [vmem:[%s372 + $0x4c] sm:$0xf]
        %v451 = vld [vmem:[%s372 + $0x50] sm:$0xf]
        %v452 = vld [vmem:[%s372 + $0x54] sm:$0xf]
        %v453 = vld [vmem:[%s372 + $0x58] sm:$0xf]
        %v454 = vld [vmem:[%s372 + $0x5c] sm:$0xf]
        %v455 = vld [vmem:[%s372 + $0x60] sm:$0xf]
        %v456 = vld [vmem:[%s372 + $0x64] sm:$0xf]
        %v457 = vld [vmem:[%s372 + $0x68] sm:$0xf]
        %v458 = vld [vmem:[%s372 + $0x6c] sm:$0xf]
        %v459 = vld [vmem:[%s372 + $0x70] sm:$0xf]
        %v460 = vld [vmem:[%s372 + $0x74] sm:$0xf]
        %v461 = vld [vmem:[%s372 + $0x78] sm:$0xf]
        %v462 = vld [vmem:[%s372 + $0x7c] sm:$0xf]
        %v463 = vld [vmem:[%s372 + $0x80] sm:$0xf]
        %v464 = vld [vmem:[%s372 + $0x84] sm:$0xf]
        %v465 = vld [vmem:[%s372 + $0x88] sm:$0xf]
        %v466 = vld [vmem:[%s372 + $0x8c] sm:$0xf]
        %v467 = vld [vmem:[%s372 + $0x90] sm:$0xf]
        %v468 = vld [vmem:[%s372 + $0x94] sm:$0xf]
        %v469 = vld [vmem:[%s372 + $0x98] sm:$0xf]
        %v470 = vld [vmem:[%s372 + $0x9c] sm:$0xf]
        %v471 = vld [vmem:[%s372 + $0xa0] sm:$0xf]
        %v472 = vld [vmem:[%s372 + $0xa4] sm:$0xf]
        %v473 = vld [vmem:[%s372 + $0xa8] sm:$0xf]
        %v474 = vld [vmem:[%s372 + $0xac] sm:$0xf]
        %v475 = vld [vmem:[%s372 + $0xb0] sm:$0xf]
        %v476 = vld [vmem:[%s372 + $0xb4] sm:$0xf]
        %v477 = vld [vmem:[%s372 + $0xb8] sm:$0xf]
        %v478 = vld [vmem:[%s372 + $0xbc] sm:$0xf]
        %v479 = vld [vmem:[%s372 + $0xc0] sm:$0xf]
        %v480 = vld [vmem:[%s372 + $0xc4] sm:$0xf]
        %v481 = vld [vmem:[%s372 + $0xc8] sm:$0xf]
        %v482 = vld [vmem:[%s372 + $0xcc] sm:$0xf]
        %v483 = vld [vmem:[%s372 + $0xd0] sm:$0xf]
        %v484 = vld [vmem:[%s372 + $0xd4] sm:$0xf]
        %v485 = vld [vmem:[%s372 + $0xd8] sm:$0xf]
        %v486 = vld [vmem:[%s372 + $0xdc] sm:$0xf]
        %v487 = vld [vmem:[%s372 + $0xe0] sm:$0xf]
        %v488 = vld [vmem:[%s372 + $0xe4] sm:$0xf]
        %v489 = vld [vmem:[%s372 + $0xe8] sm:$0xf]
        %v490 = vld [vmem:[%s372 + $0xec] sm:$0xf]
        %v491 = vld [vmem:[%s372 + $0xf0] sm:$0xf]
        %v492 = vld [vmem:[%s372 + $0xf4] sm:$0xf]
        %v493 = vld [vmem:[%s372 + $0xf8] sm:$0xf]
        %v494 = vld [vmem:[%s372 + $0xfc] sm:$0xf]
        %v495 = vld [vmem:[#allocation11] sm:$0xf]
        %v496 = vld [vmem:[#allocation11 + $0x4] sm:$0xf]
        %v497 = vld [vmem:[#allocation11 + $0x8] sm:$0xf]
        %v498 = vld [vmem:[#allocation11 + $0xc] sm:$0xf]
        %v499 = vld [vmem:[#allocation11 + $0x10] sm:$0xf]
        %v500 = vld [vmem:[#allocation11 + $0x14] sm:$0xf]
        %v501 = vld [vmem:[#allocation11 + $0x18] sm:$0xf]
        %v502 = vld [vmem:[#allocation11 + $0x1c] sm:$0xf]
        %v503 = vld [vmem:[#allocation11 + $0x20] sm:$0xf]
        %v504 = vld [vmem:[#allocation11 + $0x24] sm:$0xf]
        %v505 = vld [vmem:[#allocation11 + $0x28] sm:$0xf]
        %v506 = vld [vmem:[#allocation11 + $0x2c] sm:$0xf]
        %v507 = vld [vmem:[#allocation11 + $0x30] sm:$0xf]
        %v508 = vld [vmem:[#allocation11 + $0x34] sm:$0xf]
        %v509 = vld [vmem:[#allocation11 + $0x38] sm:$0xf]
        %v510 = vld [vmem:[#allocation11 + $0x3c] sm:$0xf]
        %v511 = vld [vmem:[%s3] sm:$0x1]
        %v513 = vperm.slane %v511, 0
        %v579 = vunpack.c.l.b16 %v431
        %v580 = vunpack.c.l.b16 %v432
        %v581 = vunpack.c.l.b16 %v433
        %v582 = vunpack.c.l.b16 %v434
        %v583 = vunpack.c.l.b16 %v435
        %v584 = vunpack.c.l.b16 %v436
        %v585 = vunpack.c.l.b16 %v437
        %v586 = vunpack.c.l.b16 %v438
        %v587 = vunpack.c.l.b16 %v439
        %v588 = vunpack.c.l.b16 %v440
        %v589 = vunpack.c.l.b16 %v441
        %v590 = vunpack.c.l.b16 %v442
        %v591 = vunpack.c.l.b16 %v443
        %v592 = vunpack.c.l.b16 %v444
        %v593 = vunpack.c.l.b16 %v445
        %v594 = vunpack.c.l.b16 %v446
        %v595 = vunpack.c.l.b16 %v447
        %v596 = vunpack.c.l.b16 %v448
        %v597 = vunpack.c.l.b16 %v449
        %v598 = vunpack.c.l.b16 %v450
        %v599 = vunpack.c.l.b16 %v451
        %v600 = vunpack.c.l.b16 %v452
        %v601 = vunpack.c.l.b16 %v453
        %v602 = vunpack.c.l.b16 %v454
        %v603 = vunpack.c.l.b16 %v455
        %v604 = vunpack.c.l.b16 %v456
        %v605 = vunpack.c.l.b16 %v457
        %v606 = vunpack.c.l.b16 %v458
        %v607 = vunpack.c.l.b16 %v459
        %v608 = vunpack.c.l.b16 %v460
        %v609 = vunpack.c.l.b16 %v461
        %v610 = vunpack.c.l.b16 %v462
        %v611 = vunpack.c.l.b16 %v463
        %v612 = vunpack.c.l.b16 %v464
        %v613 = vunpack.c.l.b16 %v465
        %v614 = vunpack.c.l.b16 %v466
        %v615 = vunpack.c.l.b16 %v467
        %v616 = vunpack.c.l.b16 %v468
        %v617 = vunpack.c.l.b16 %v469
        %v618 = vunpack.c.l.b16 %v470
        %v619 = vunpack.c.l.b16 %v471
        %v620 = vunpack.c.l.b16 %v472
        %v621 = vunpack.c.l.b16 %v473
        %v622 = vunpack.c.l.b16 %v474
        %v623 = vunpack.c.l.b16 %v475
        %v624 = vunpack.c.l.b16 %v476
        %v625 = vunpack.c.l.b16 %v477
        %v626 = vunpack.c.l.b16 %v478
        %v627 = vunpack.c.l.b16 %v479
        %v628 = vunpack.c.l.b16 %v480
        %v629 = vunpack.c.l.b16 %v481
        %v630 = vunpack.c.l.b16 %v482
        %v631 = vunpack.c.l.b16 %v483
        %v632 = vunpack.c.l.b16 %v484
        %v633 = vunpack.c.l.b16 %v485
        %v634 = vunpack.c.l.b16 %v486
        %v635 = vunpack.c.l.b16 %v487
        %v636 = vunpack.c.l.b16 %v488
        %v637 = vunpack.c.l.b16 %v489
        %v638 = vunpack.c.l.b16 %v490
        %v639 = vunpack.c.l.b16 %v491
        %v640 = vunpack.c.l.b16 %v492
        %v641 = vunpack.c.l.b16 %v493
        %v642 = vunpack.c.l.b16 %v494
        %v643 = vpack.c.b16 %v580, %v579
        %v644 = vpack.c.b16 %v582, %v581
        %v645 = vpack.c.b16 %v584, %v583
        %v646 = vpack.c.b16 %v586, %v585
        %v647 = vpack.c.b16 %v588, %v587
        %v648 = vpack.c.b16 %v590, %v589
        %v649 = vpack.c.b16 %v592, %v591
        %v650 = vpack.c.b16 %v594, %v593
        %v651 = vpack.c.b16 %v596, %v595
        %v652 = vpack.c.b16 %v598, %v597
        %v653 = vpack.c.b16 %v600, %v599
        %v654 = vpack.c.b16 %v602, %v601
        %v655 = vpack.c.b16 %v604, %v603
        %v656 = vpack.c.b16 %v606, %v605
        %v657 = vpack.c.b16 %v608, %v607
        %v658 = vpack.c.b16 %v610, %v609
        %v659 = vpack.c.b16 %v612, %v611
        %v660 = vpack.c.b16 %v614, %v613
        %v661 = vpack.c.b16 %v616, %v615
        %v662 = vpack.c.b16 %v618, %v617
        %v663 = vpack.c.b16 %v620, %v619
        %v664 = vpack.c.b16 %v622, %v621
        %v665 = vpack.c.b16 %v624, %v623
        %v666 = vpack.c.b16 %v626, %v625
        %v667 = vpack.c.b16 %v628, %v627
        %v668 = vpack.c.b16 %v630, %v629
        %v669 = vpack.c.b16 %v632, %v631
        %v670 = vpack.c.b16 %v634, %v633
        %v671 = vpack.c.b16 %v636, %v635
        %v672 = vpack.c.b16 %v638, %v637
        %v673 = vpack.c.b16 %v640, %v639
        %v674 = vpack.c.b16 %v642, %v641
        %v723 = vunpack.c.l.b16 %v495
        %v724 = vunpack.c.l.b16 %v496
        %v725 = vunpack.c.l.b16 %v497
        %v726 = vunpack.c.l.b16 %v498
        %v727 = vunpack.c.l.b16 %v499
        %v728 = vunpack.c.l.b16 %v500
        %v729 = vunpack.c.l.b16 %v501
        %v730 = vunpack.c.l.b16 %v502
        %v731 = vunpack.c.l.b16 %v503
        %v732 = vunpack.c.l.b16 %v504
        %v733 = vunpack.c.l.b16 %v505
        %v734 = vunpack.c.l.b16 %v506
        %v735 = vunpack.c.l.b16 %v507
        %v736 = vunpack.c.l.b16 %v508
        %v737 = vunpack.c.l.b16 %v509
        %v738 = vunpack.c.l.b16 %v510
        %v739 = vpack.c.b16 %v724, %v723
        %v740 = vpack.c.b16 %v726, %v725
        %v741 = vpack.c.b16 %v728, %v727
        %v742 = vpack.c.b16 %v730, %v729
        %v743 = vpack.c.b16 %v732, %v731
        %v744 = vpack.c.b16 %v734, %v733
        %v745 = vpack.c.b16 %v736, %v735
        %v746 = vpack.c.b16 %v738, %v737
        %755 = vmatpush.bf16.msra.mxu0 %v746
        %756 = vmatpush.bf16.msra.mxu0 %v745
        %757 = vmatpush.bf16.msra.mxu0 %v744
        %758 = vmatpush.bf16.msra.mxu0 %v743
        %759 = vmatpush.bf16.msra.mxu0 %v742
        %760 = vmatpush.bf16.msra.mxu0 %v741
        %761 = vmatpush.bf16.msra.mxu0 %v740
        %762 = vmatpush.bf16.msra.mxu0 %v739
        %763 = vmatmul.bf16.gmra.mxu0 %v643
        %v764 = vpop.f32.mrf.mxu0
        %v765 = vadd.f32 %v513, %v764
        %v766 = vpop.f32.mrf.mxu0
        %v767 = vadd.f32 %v513, %v766
        %768 = vmatmul.bf16.gmra.mxu0 %v644
        %v769 = vpop.f32.mrf.mxu0
        %v770 = vadd.f32 %v513, %v769
        %v771 = vpop.f32.mrf.mxu0
        %v772 = vadd.f32 %v513, %v771
        %773 = vmatmul.bf16.gmra.mxu0 %v645
        %v774 = vpop.f32.mrf.mxu0
        %v775 = vadd.f32 %v513, %v774
        %v776 = vpop.f32.mrf.mxu0
        %v777 = vadd.f32 %v513, %v776
        %778 = vmatmul.bf16.gmra.mxu0 %v646
        %v779 = vpop.f32.mrf.mxu0
        %v780 = vadd.f32 %v513, %v779
        %v781 = vpop.f32.mrf.mxu0
        %v782 = vadd.f32 %v513, %v781
        %783 = vmatmul.bf16.gmra.mxu0 %v647
        %v784 = vpop.f32.mrf.mxu0
        %v785 = vadd.f32 %v513, %v784
        %v786 = vpop.f32.mrf.mxu0
        %v787 = vadd.f32 %v513, %v786
        %788 = vmatmul.bf16.gmra.mxu0 %v648
        %v789 = vpop.f32.mrf.mxu0
        %v790 = vadd.f32 %v513, %v789
        %v791 = vpop.f32.mrf.mxu0
        %v792 = vadd.f32 %v513, %v791
        %793 = vmatmul.bf16.gmra.mxu0 %v649
        %v794 = vpop.f32.mrf.mxu0
        %v795 = vadd.f32 %v513, %v794
        %v796 = vpop.f32.mrf.mxu0
        %v797 = vadd.f32 %v513, %v796
        %798 = vmatmul.bf16.gmra.mxu0 %v650
        %v799 = vpop.f32.mrf.mxu0
        %v800 = vadd.f32 %v513, %v799
        %v801 = vpop.f32.mrf.mxu0
        %v802 = vadd.f32 %v513, %v801
        %803 = vmatmul.bf16.gmra.mxu0 %v651
        %v804 = vpop.f32.mrf.mxu0
        %v805 = vadd.f32 %v513, %v804
        %v806 = vpop.f32.mrf.mxu0
        %v807 = vadd.f32 %v513, %v806
        %808 = vmatmul.bf16.gmra.mxu0 %v652
        %v809 = vpop.f32.mrf.mxu0
        %v810 = vadd.f32 %v513, %v809
        %v811 = vpop.f32.mrf.mxu0
        %v812 = vadd.f32 %v513, %v811
        %813 = vmatmul.bf16.gmra.mxu0 %v653
        %v814 = vpop.f32.mrf.mxu0
        %v815 = vadd.f32 %v513, %v814
        %v816 = vpop.f32.mrf.mxu0
        %v817 = vadd.f32 %v513, %v816
        %818 = vmatmul.bf16.gmra.mxu0 %v654
        %v819 = vpop.f32.mrf.mxu0
        %v820 = vadd.f32 %v513, %v819
        %v821 = vpop.f32.mrf.mxu0
        %v822 = vadd.f32 %v513, %v821
        %823 = vmatmul.bf16.gmra.mxu0 %v655
        %v824 = vpop.f32.mrf.mxu0
        %v825 = vadd.f32 %v513, %v824
        %v826 = vpop.f32.mrf.mxu0
        %v827 = vadd.f32 %v513, %v826
        %828 = vmatmul.bf16.gmra.mxu0 %v656
        %v829 = vpop.f32.mrf.mxu0
        %v830 = vadd.f32 %v513, %v829
        %v831 = vpop.f32.mrf.mxu0
        %v832 = vadd.f32 %v513, %v831
        %833 = vmatmul.bf16.gmra.mxu0 %v657
        %v834 = vpop.f32.mrf.mxu0
        %v835 = vadd.f32 %v513, %v834
        %v836 = vpop.f32.mrf.mxu0
        %v837 = vadd.f32 %v513, %v836
        %838 = vmatmul.bf16.gmra.mxu0 %v658
        %v839 = vpop.f32.mrf.mxu0
        %v840 = vadd.f32 %v513, %v839
        %v841 = vpop.f32.mrf.mxu0
        %v842 = vadd.f32 %v513, %v841
        %843 = vmatmul.bf16.gmra.mxu0 %v659
        %v844 = vpop.f32.mrf.mxu0
        %v845 = vadd.f32 %v513, %v844
        %v846 = vpop.f32.mrf.mxu0
        %v847 = vadd.f32 %v513, %v846
        %848 = vmatmul.bf16.gmra.mxu0 %v660
        %v849 = vpop.f32.mrf.mxu0
        %v850 = vadd.f32 %v513, %v849
        %v851 = vpop.f32.mrf.mxu0
        %v852 = vadd.f32 %v513, %v851
        %853 = vmatmul.bf16.gmra.mxu0 %v661
        %v854 = vpop.f32.mrf.mxu0
        %v855 = vadd.f32 %v513, %v854
        %v856 = vpop.f32.mrf.mxu0
        %v857 = vadd.f32 %v513, %v856
        %858 = vmatmul.bf16.gmra.mxu0 %v662
        %v859 = vpop.f32.mrf.mxu0
        %v860 = vadd.f32 %v513, %v859
        %v861 = vpop.f32.mrf.mxu0
        %v862 = vadd.f32 %v513, %v861
        %863 = vmatmul.bf16.gmra.mxu0 %v663
        %v864 = vpop.f32.mrf.mxu0
        %v865 = vadd.f32 %v513, %v864
        %v866 = vpop.f32.mrf.mxu0
        %v867 = vadd.f32 %v513, %v866
        %868 = vmatmul.bf16.gmra.mxu0 %v664
        %v869 = vpop.f32.mrf.mxu0
        %v870 = vadd.f32 %v513, %v869
        %v871 = vpop.f32.mrf.mxu0
        %v872 = vadd.f32 %v513, %v871
        %873 = vmatmul.bf16.gmra.mxu0 %v665
        %v874 = vpop.f32.mrf.mxu0
        %v875 = vadd.f32 %v513, %v874
        %v876 = vpop.f32.mrf.mxu0
        %v877 = vadd.f32 %v513, %v876
        %878 = vmatmul.bf16.gmra.mxu0 %v666
        %v879 = vpop.f32.mrf.mxu0
        %v880 = vadd.f32 %v513, %v879
        %v881 = vpop.f32.mrf.mxu0
        %v882 = vadd.f32 %v513, %v881
        %883 = vmatmul.bf16.gmra.mxu0 %v667
        %v884 = vpop.f32.mrf.mxu0
        %v885 = vadd.f32 %v513, %v884
        %v886 = vpop.f32.mrf.mxu0
        %v887 = vadd.f32 %v513, %v886
        %888 = vmatmul.bf16.gmra.mxu0 %v668
        %v889 = vpop.f32.mrf.mxu0
        %v890 = vadd.f32 %v513, %v889
        %v891 = vpop.f32.mrf.mxu0
        %v892 = vadd.f32 %v513, %v891
        %893 = vmatmul.bf16.gmra.mxu0 %v669
        %v894 = vpop.f32.mrf.mxu0
        %v895 = vadd.f32 %v513, %v894
        %v896 = vpop.f32.mrf.mxu0
        %v897 = vadd.f32 %v513, %v896
        %898 = vmatmul.bf16.gmra.mxu0 %v670
        %v899 = vpop.f32.mrf.mxu0
        %v900 = vadd.f32 %v513, %v899
        %v901 = vpop.f32.mrf.mxu0
        %v902 = vadd.f32 %v513, %v901
        %903 = vmatmul.bf16.gmra.mxu0 %v671
        %v904 = vpop.f32.mrf.mxu0
        %v905 = vadd.f32 %v513, %v904
        %v906 = vpop.f32.mrf.mxu0
        %v907 = vadd.f32 %v513, %v906
        %908 = vmatmul.bf16.gmra.mxu0 %v672
        %v909 = vpop.f32.mrf.mxu0
        %v910 = vadd.f32 %v513, %v909
        %v911 = vpop.f32.mrf.mxu0
        %v912 = vadd.f32 %v513, %v911
        %913 = vmatmul.bf16.gmra.mxu0 %v673
        %v914 = vpop.f32.mrf.mxu0
        %v915 = vadd.f32 %v513, %v914
        %v916 = vpop.f32.mrf.mxu0
        %v917 = vadd.f32 %v513, %v916
        %918 = vmatmul.bf16.gmra.mxu0 %v674
        %v919 = vpop.f32.mrf.mxu0
        %v920 = vadd.f32 %v513, %v919
        %v921 = vpop.f32.mrf.mxu0
        %v922 = vadd.f32 %v513, %v921
        %923 = vdwg.mxu0
        %924 = vadd.xlane.f32.xlu0 %v765
        %v925 = vpop.xlane.xlu0 %924
        %926 = vadd.xlane.f32.xlu0 %v767
        %v927 = vpop.xlane.xlu0 %926
        %928 = vadd.xlane.f32.xlu0 %v770
        %v929 = vpop.xlane.xlu0 %928
        %930 = vadd.xlane.f32.xlu0 %v772
        %v931 = vpop.xlane.xlu0 %930
        %932 = vadd.xlane.f32.xlu0 %v775
        %v933 = vpop.xlane.xlu0 %932
        %934 = vadd.xlane.f32.xlu0 %v777
        %v935 = vpop.xlane.xlu0 %934
        %936 = vadd.xlane.f32.xlu0 %v780
        %v937 = vpop.xlane.xlu0 %936
        %938 = vadd.xlane.f32.xlu0 %v782
        %v939 = vpop.xlane.xlu0 %938
        %940 = vadd.xlane.f32.xlu0 %v785
        %v941 = vpop.xlane.xlu0 %940
        %942 = vadd.xlane.f32.xlu0 %v787
        %v943 = vpop.xlane.xlu0 %942
        %944 = vadd.xlane.f32.xlu0 %v790
        %v945 = vpop.xlane.xlu0 %944
        %946 = vadd.xlane.f32.xlu0 %v792
        %v947 = vpop.xlane.xlu0 %946
        %948 = vadd.xlane.f32.xlu0 %v795
        %v949 = vpop.xlane.xlu0 %948
        %950 = vadd.xlane.f32.xlu0 %v797
        %v951 = vpop.xlane.xlu0 %950
        %952 = vadd.xlane.f32.xlu0 %v800
        %v953 = vpop.xlane.xlu0 %952
        %954 = vadd.xlane.f32.xlu0 %v802
        %v955 = vpop.xlane.xlu0 %954
        %956 = vadd.xlane.f32.xlu0 %v805
        %v957 = vpop.xlane.xlu0 %956
        %958 = vadd.xlane.f32.xlu0 %v807
        %v959 = vpop.xlane.xlu0 %958
        %960 = vadd.xlane.f32.xlu0 %v810
        %v961 = vpop.xlane.xlu0 %960
        %962 = vadd.xlane.f32.xlu0 %v812
        %v963 = vpop.xlane.xlu0 %962
        %964 = vadd.xlane.f32.xlu0 %v815
        %v965 = vpop.xlane.xlu0 %964
        %966 = vadd.xlane.f32.xlu0 %v817
        %v967 = vpop.xlane.xlu0 %966
        %968 = vadd.xlane.f32.xlu0 %v820
        %v969 = vpop.xlane.xlu0 %968
        %970 = vadd.xlane.f32.xlu0 %v822
        %v971 = vpop.xlane.xlu0 %970
        %972 = vadd.xlane.f32.xlu0 %v825
        %v973 = vpop.xlane.xlu0 %972
        %974 = vadd.xlane.f32.xlu0 %v827
        %v975 = vpop.xlane.xlu0 %974
        %976 = vadd.xlane.f32.xlu0 %v830
        %v977 = vpop.xlane.xlu0 %976
        %978 = vadd.xlane.f32.xlu0 %v832
        %v979 = vpop.xlane.xlu0 %978
        %980 = vadd.xlane.f32.xlu0 %v835
        %v981 = vpop.xlane.xlu0 %980
        %982 = vadd.xlane.f32.xlu0 %v837
        %v983 = vpop.xlane.xlu0 %982
        %984 = vadd.xlane.f32.xlu0 %v840
        %v985 = vpop.xlane.xlu0 %984
        %986 = vadd.xlane.f32.xlu0 %v842
        %v987 = vpop.xlane.xlu0 %986
        %988 = vadd.xlane.f32.xlu0 %v845
        %v989 = vpop.xlane.xlu0 %988
        %990 = vadd.xlane.f32.xlu0 %v847
        %v991 = vpop.xlane.xlu0 %990
        %992 = vadd.xlane.f32.xlu0 %v850
        %v993 = vpop.xlane.xlu0 %992
        %994 = vadd.xlane.f32.xlu0 %v852
        %v995 = vpop.xlane.xlu0 %994
        %996 = vadd.xlane.f32.xlu0 %v855
        %v997 = vpop.xlane.xlu0 %996
        %998 = vadd.xlane.f32.xlu0 %v857
        %v999 = vpop.xlane.xlu0 %998
        %1000 = vadd.xlane.f32.xlu0 %v860
        %v1001 = vpop.xlane.xlu0 %1000
        %1002 = vadd.xlane.f32.xlu0 %v862
        %v1003 = vpop.xlane.xlu0 %1002
        %1004 = vadd.xlane.f32.xlu0 %v865
        %v1005 = vpop.xlane.xlu0 %1004
        %1006 = vadd.xlane.f32.xlu0 %v867
        %v1007 = vpop.xlane.xlu0 %1006
        %1008 = vadd.xlane.f32.xlu0 %v870
        %v1009 = vpop.xlane.xlu0 %1008
        %1010 = vadd.xlane.f32.xlu0 %v872
        %v1011 = vpop.xlane.xlu0 %1010
        %1012 = vadd.xlane.f32.xlu0 %v875
        %v1013 = vpop.xlane.xlu0 %1012
        %1014 = vadd.xlane.f32.xlu0 %v877
        %v1015 = vpop.xlane.xlu0 %1014
        %1016 = vadd.xlane.f32.xlu0 %v880
        %v1017 = vpop.xlane.xlu0 %1016
        %1018 = vadd.xlane.f32.xlu0 %v882
        %v1019 = vpop.xlane.xlu0 %1018
        %1020 = vadd.xlane.f32.xlu0 %v885
        %v1021 = vpop.xlane.xlu0 %1020
        %1022 = vadd.xlane.f32.xlu0 %v887
        %v1023 = vpop.xlane.xlu0 %1022
        %1024 = vadd.xlane.f32.xlu0 %v890
        %v1025 = vpop.xlane.xlu0 %1024
        %1026 = vadd.xlane.f32.xlu0 %v892
        %v1027 = vpop.xlane.xlu0 %1026
        %1028 = vadd.xlane.f32.xlu0 %v895
        %v1029 = vpop.xlane.xlu0 %1028
        %1030 = vadd.xlane.f32.xlu0 %v897
        %v1031 = vpop.xlane.xlu0 %1030
        %1032 = vadd.xlane.f32.xlu0 %v900
        %v1033 = vpop.xlane.xlu0 %1032
        %1034 = vadd.xlane.f32.xlu0 %v902
        %v1035 = vpop.xlane.xlu0 %1034
        %1036 = vadd.xlane.f32.xlu0 %v905
        %v1037 = vpop.xlane.xlu0 %1036
        %1038 = vadd.xlane.f32.xlu0 %v907
        %v1039 = vpop.xlane.xlu0 %1038
        %1040 = vadd.xlane.f32.xlu0 %v910
        %v1041 = vpop.xlane.xlu0 %1040
        %1042 = vadd.xlane.f32.xlu0 %v912
        %v1043 = vpop.xlane.xlu0 %1042
        %1044 = vadd.xlane.f32.xlu0 %v915
        %v1045 = vpop.xlane.xlu0 %1044
        %1046 = vadd.xlane.f32.xlu0 %v917
        %v1047 = vpop.xlane.xlu0 %1046
        %1048 = vadd.xlane.f32.xlu0 %v920
        %v1049 = vpop.xlane.xlu0 %1048
        %1050 = vadd.xlane.f32.xlu0 %v922
        %v1051 = vpop.xlane.xlu0 %1050
        %v1052 = vrcp.pop 128.0
        %v1053 = vmul.f32 128.0, %v1052
        %v1054 = vsub.f32 1.0, %v1053
        %v1055 = vmul.f32 %v1052, %v1054
        %v1056 = vadd.f32 %v1052, %v1055
        %vm1057 = vweird.f32 %v1052
        %v1058 = vsel %vm1057, %v1052, %v1056
        %v1059 = vmul.f32 %v925, %v1058
        %v1060 = vmul.f32 %v927, %v1058
        %v1061 = vmul.f32 %v929, %v1058
        %v1062 = vmul.f32 %v931, %v1058
        %v1063 = vmul.f32 %v933, %v1058
        %v1064 = vmul.f32 %v935, %v1058
        %v1065 = vmul.f32 %v937, %v1058
        %v1066 = vmul.f32 %v939, %v1058
        %v1067 = vmul.f32 %v941, %v1058
        %v1068 = vmul.f32 %v943, %v1058
        %v1069 = vmul.f32 %v945, %v1058
        %v1070 = vmul.f32 %v947, %v1058
        %v1071 = vmul.f32 %v949, %v1058
        %v1072 = vmul.f32 %v951, %v1058
        %v1073 = vmul.f32 %v953, %v1058
        %v1074 = vmul.f32 %v955, %v1058
        %v1075 = vmul.f32 %v957, %v1058
        %v1076 = vmul.f32 %v959, %v1058
        %v1077 = vmul.f32 %v961, %v1058
        %v1078 = vmul.f32 %v963, %v1058
        %v1079 = vmul.f32 %v965, %v1058
        %v1080 = vmul.f32 %v967, %v1058
        %v1081 = vmul.f32 %v969, %v1058
        %v1082 = vmul.f32 %v971, %v1058
        %v1083 = vmul.f32 %v973, %v1058
        %v1084 = vmul.f32 %v975, %v1058
        %v1085 = vmul.f32 %v977, %v1058
        %v1086 = vmul.f32 %v979, %v1058
        %v1087 = vmul.f32 %v981, %v1058
        %v1088 = vmul.f32 %v983, %v1058
        %v1089 = vmul.f32 %v985, %v1058
        %v1090 = vmul.f32 %v987, %v1058
        %v1091 = vmul.f32 %v989, %v1058
        %v1092 = vmul.f32 %v991, %v1058
        %v1093 = vmul.f32 %v993, %v1058
        %v1094 = vmul.f32 %v995, %v1058
        %v1095 = vmul.f32 %v997, %v1058
        %v1096 = vmul.f32 %v999, %v1058
        %v1097 = vmul.f32 %v1001, %v1058
        %v1098 = vmul.f32 %v1003, %v1058
        %v1099 = vmul.f32 %v1005, %v1058
        %v1100 = vmul.f32 %v1007, %v1058
        %v1101 = vmul.f32 %v1009, %v1058
        %v1102 = vmul.f32 %v1011, %v1058
        %v1103 = vmul.f32 %v1013, %v1058
        %v1104 = vmul.f32 %v1015, %v1058
        %v1105 = vmul.f32 %v1017, %v1058
        %v1106 = vmul.f32 %v1019, %v1058
        %v1107 = vmul.f32 %v1021, %v1058
        %v1108 = vmul.f32 %v1023, %v1058
        %v1109 = vmul.f32 %v1025, %v1058
        %v1110 = vmul.f32 %v1027, %v1058
        %v1111 = vmul.f32 %v1029, %v1058
        %v1112 = vmul.f32 %v1031, %v1058
        %v1113 = vmul.f32 %v1033, %v1058
        %v1114 = vmul.f32 %v1035, %v1058
        %v1115 = vmul.f32 %v1037, %v1058
        %v1116 = vmul.f32 %v1039, %v1058
        %v1117 = vmul.f32 %v1041, %v1058
        %v1118 = vmul.f32 %v1043, %v1058
        %v1119 = vmul.f32 %v1045, %v1058
        %v1120 = vmul.f32 %v1047, %v1058
        %v1121 = vmul.f32 %v1049, %v1058
        %v1122 = vmul.f32 %v1051, %v1058
        %v1123 = vsub.f32 %v765, %v1059
        %v1124 = vsub.f32 %v767, %v1060
        %v1125 = vsub.f32 %v770, %v1061
        %v1126 = vsub.f32 %v772, %v1062
        %v1127 = vsub.f32 %v775, %v1063
        %v1128 = vsub.f32 %v777, %v1064
        %v1129 = vsub.f32 %v780, %v1065
        %v1130 = vsub.f32 %v782, %v1066
        %v1131 = vsub.f32 %v785, %v1067
        %v1132 = vsub.f32 %v787, %v1068
        %v1133 = vsub.f32 %v790, %v1069
        %v1134 = vsub.f32 %v792, %v1070
        %v1135 = vsub.f32 %v795, %v1071
        %v1136 = vsub.f32 %v797, %v1072
        %v1137 = vsub.f32 %v800, %v1073
        %v1138 = vsub.f32 %v802, %v1074
        %v1139 = vsub.f32 %v805, %v1075
        %v1140 = vsub.f32 %v807, %v1076
        %v1141 = vsub.f32 %v810, %v1077
        %v1142 = vsub.f32 %v812, %v1078
        %v1143 = vsub.f32 %v815, %v1079
        %v1144 = vsub.f32 %v817, %v1080
        %v1145 = vsub.f32 %v820, %v1081
        %v1146 = vsub.f32 %v822, %v1082
        %v1147 = vsub.f32 %v825, %v1083
        %v1148 = vsub.f32 %v827, %v1084
        %v1149 = vsub.f32 %v830, %v1085
        %v1150 = vsub.f32 %v832, %v1086
        %v1151 = vsub.f32 %v835, %v1087
        %v1152 = vsub.f32 %v837, %v1088
        %v1153 = vsub.f32 %v840, %v1089
        %v1154 = vsub.f32 %v842, %v1090
        %v1155 = vsub.f32 %v845, %v1091
        %v1156 = vsub.f32 %v847, %v1092
        %v1157 = vsub.f32 %v850, %v1093
        %v1158 = vsub.f32 %v852, %v1094
        %v1159 = vsub.f32 %v855, %v1095
        %v1160 = vsub.f32 %v857, %v1096
        %v1161 = vsub.f32 %v860, %v1097
        %v1162 = vsub.f32 %v862, %v1098
        %v1163 = vsub.f32 %v865, %v1099
        %v1164 = vsub.f32 %v867, %v1100
        %v1165 = vsub.f32 %v870, %v1101
        %v1166 = vsub.f32 %v872, %v1102
        %v1167 = vsub.f32 %v875, %v1103
        %v1168 = vsub.f32 %v877, %v1104
        %v1169 = vsub.f32 %v880, %v1105
        %v1170 = vsub.f32 %v882, %v1106
        %v1171 = vsub.f32 %v885, %v1107
        %v1172 = vsub.f32 %v887, %v1108
        %v1173 = vsub.f32 %v890, %v1109
        %v1174 = vsub.f32 %v892, %v1110
        %v1175 = vsub.f32 %v895, %v1111
        %v1176 = vsub.f32 %v897, %v1112
        %v1177 = vsub.f32 %v900, %v1113
        %v1178 = vsub.f32 %v902, %v1114
        %v1179 = vsub.f32 %v905, %v1115
        %v1180 = vsub.f32 %v907, %v1116
        %v1181 = vsub.f32 %v910, %v1117
        %v1182 = vsub.f32 %v912, %v1118
        %v1183 = vsub.f32 %v915, %v1119
        %v1184 = vsub.f32 %v917, %v1120
        %v1185 = vsub.f32 %v920, %v1121
        %v1186 = vsub.f32 %v922, %v1122
        %v1187 = vmul.f32 %v1123, %v1123
        %v1188 = vmul.f32 %v1124, %v1124
        %v1189 = vmul.f32 %v1125, %v1125
        %v1190 = vmul.f32 %v1126, %v1126
        %v1191 = vmul.f32 %v1127, %v1127
        %v1192 = vmul.f32 %v1128, %v1128
        %v1193 = vmul.f32 %v1129, %v1129
        %v1194 = vmul.f32 %v1130, %v1130
        %v1195 = vmul.f32 %v1131, %v1131
        %v1196 = vmul.f32 %v1132, %v1132
        %v1197 = vmul.f32 %v1133, %v1133
        %v1198 = vmul.f32 %v1134, %v1134
        %v1199 = vmul.f32 %v1135, %v1135
        %v1200 = vmul.f32 %v1136, %v1136
        %v1201 = vmul.f32 %v1137, %v1137
        %v1202 = vmul.f32 %v1138, %v1138
        %v1203 = vmul.f32 %v1139, %v1139
        %v1204 = vmul.f32 %v1140, %v1140
        %v1205 = vmul.f32 %v1141, %v1141
        %v1206 = vmul.f32 %v1142, %v1142
        %v1207 = vmul.f32 %v1143, %v1143
        %v1208 = vmul.f32 %v1144, %v1144
        %v1209 = vmul.f32 %v1145, %v1145
        %v1210 = vmul.f32 %v1146, %v1146
        %v1211 = vmul.f32 %v1147, %v1147
        %v1212 = vmul.f32 %v1148, %v1148
        %v1213 = vmul.f32 %v1149, %v1149
        %v1214 = vmul.f32 %v1150, %v1150
        %v1215 = vmul.f32 %v1151, %v1151
        %v1216 = vmul.f32 %v1152, %v1152
        %v1217 = vmul.f32 %v1153, %v1153
        %v1218 = vmul.f32 %v1154, %v1154
        %v1219 = vmul.f32 %v1155, %v1155
        %v1220 = vmul.f32 %v1156, %v1156
        %v1221 = vmul.f32 %v1157, %v1157
        %v1222 = vmul.f32 %v1158, %v1158
        %v1223 = vmul.f32 %v1159, %v1159
        %v1224 = vmul.f32 %v1160, %v1160
        %v1225 = vmul.f32 %v1161, %v1161
        %v1226 = vmul.f32 %v1162, %v1162
        %v1227 = vmul.f32 %v1163, %v1163
        %v1228 = vmul.f32 %v1164, %v1164
        %v1229 = vmul.f32 %v1165, %v1165
        %v1230 = vmul.f32 %v1166, %v1166
        %v1231 = vmul.f32 %v1167, %v1167
        %v1232 = vmul.f32 %v1168, %v1168
        %v1233 = vmul.f32 %v1169, %v1169
        %v1234 = vmul.f32 %v1170, %v1170
        %v1235 = vmul.f32 %v1171, %v1171
        %v1236 = vmul.f32 %v1172, %v1172
        %v1237 = vmul.f32 %v1173, %v1173
        %v1238 = vmul.f32 %v1174, %v1174
        %v1239 = vmul.f32 %v1175, %v1175
        %v1240 = vmul.f32 %v1176, %v1176
        %v1241 = vmul.f32 %v1177, %v1177
        %v1242 = vmul.f32 %v1178, %v1178
        %v1243 = vmul.f32 %v1179, %v1179
        %v1244 = vmul.f32 %v1180, %v1180
        %v1245 = vmul.f32 %v1181, %v1181
        %v1246 = vmul.f32 %v1182, %v1182
        %v1247 = vmul.f32 %v1183, %v1183
        %v1248 = vmul.f32 %v1184, %v1184
        %v1249 = vmul.f32 %v1185, %v1185
        %v1250 = vmul.f32 %v1186, %v1186
        %1251 = vadd.xlane.f32.xlu0 %v1187
        %v1252 = vpop.xlane.xlu0 %1251
        %1253 = vadd.xlane.f32.xlu0 %v1188
        %v1254 = vpop.xlane.xlu0 %1253
        %1255 = vadd.xlane.f32.xlu0 %v1189
        %v1256 = vpop.xlane.xlu0 %1255
        %1257 = vadd.xlane.f32.xlu0 %v1190
        %v1258 = vpop.xlane.xlu0 %1257
        %1259 = vadd.xlane.f32.xlu0 %v1191
        %v1260 = vpop.xlane.xlu0 %1259
        %1261 = vadd.xlane.f32.xlu0 %v1192
        %v1262 = vpop.xlane.xlu0 %1261
        %1263 = vadd.xlane.f32.xlu0 %v1193
        %v1264 = vpop.xlane.xlu0 %1263
        %1265 = vadd.xlane.f32.xlu0 %v1194
        %v1266 = vpop.xlane.xlu0 %1265
        %1267 = vadd.xlane.f32.xlu0 %v1195
        %v1268 = vpop.xlane.xlu0 %1267
        %1269 = vadd.xlane.f32.xlu0 %v1196
        %v1270 = vpop.xlane.xlu0 %1269
        %1271 = vadd.xlane.f32.xlu0 %v1197
        %v1272 = vpop.xlane.xlu0 %1271
        %1273 = vadd.xlane.f32.xlu0 %v1198
        %v1274 = vpop.xlane.xlu0 %1273
        %1275 = vadd.xlane.f32.xlu0 %v1199
        %v1276 = vpop.xlane.xlu0 %1275
        %1277 = vadd.xlane.f32.xlu0 %v1200
        %v1278 = vpop.xlane.xlu0 %1277
        %1279 = vadd.xlane.f32.xlu0 %v1201
        %v1280 = vpop.xlane.xlu0 %1279
        %1281 = vadd.xlane.f32.xlu0 %v1202
        %v1282 = vpop.xlane.xlu0 %1281
        %1283 = vadd.xlane.f32.xlu0 %v1203
        %v1284 = vpop.xlane.xlu0 %1283
        %1285 = vadd.xlane.f32.xlu0 %v1204
        %v1286 = vpop.xlane.xlu0 %1285
        %1287 = vadd.xlane.f32.xlu0 %v1205
        %v1288 = vpop.xlane.xlu0 %1287
        %1289 = vadd.xlane.f32.xlu0 %v1206
        %v1290 = vpop.xlane.xlu0 %1289
        %1291 = vadd.xlane.f32.xlu0 %v1207
        %v1292 = vpop.xlane.xlu0 %1291
        %1293 = vadd.xlane.f32.xlu0 %v1208
        %v1294 = vpop.xlane.xlu0 %1293
        %1295 = vadd.xlane.f32.xlu0 %v1209
        %v1296 = vpop.xlane.xlu0 %1295
        %1297 = vadd.xlane.f32.xlu0 %v1210
        %v1298 = vpop.xlane.xlu0 %1297
        %1299 = vadd.xlane.f32.xlu0 %v1211
        %v1300 = vpop.xlane.xlu0 %1299
        %1301 = vadd.xlane.f32.xlu0 %v1212
        %v1302 = vpop.xlane.xlu0 %1301
        %1303 = vadd.xlane.f32.xlu0 %v1213
        %v1304 = vpop.xlane.xlu0 %1303
        %1305 = vadd.xlane.f32.xlu0 %v1214
        %v1306 = vpop.xlane.xlu0 %1305
        %1307 = vadd.xlane.f32.xlu0 %v1215
        %v1308 = vpop.xlane.xlu0 %1307
        %1309 = vadd.xlane.f32.xlu0 %v1216
        %v1310 = vpop.xlane.xlu0 %1309
        %1311 = vadd.xlane.f32.xlu0 %v1217
        %v1312 = vpop.xlane.xlu0 %1311
        %1313 = vadd.xlane.f32.xlu0 %v1218
        %v1314 = vpop.xlane.xlu0 %1313
        %1315 = vadd.xlane.f32.xlu0 %v1219
        %v1316 = vpop.xlane.xlu0 %1315
        %1317 = vadd.xlane.f32.xlu0 %v1220
        %v1318 = vpop.xlane.xlu0 %1317
        %1319 = vadd.xlane.f32.xlu0 %v1221
        %v1320 = vpop.xlane.xlu0 %1319
        %1321 = vadd.xlane.f32.xlu0 %v1222
        %v1322 = vpop.xlane.xlu0 %1321
        %1323 = vadd.xlane.f32.xlu0 %v1223
        %v1324 = vpop.xlane.xlu0 %1323
        %1325 = vadd.xlane.f32.xlu0 %v1224
        %v1326 = vpop.xlane.xlu0 %1325
        %1327 = vadd.xlane.f32.xlu0 %v1225
        %v1328 = vpop.xlane.xlu0 %1327
        %1329 = vadd.xlane.f32.xlu0 %v1226
        %v1330 = vpop.xlane.xlu0 %1329
        %1331 = vadd.xlane.f32.xlu0 %v1227
        %v1332 = vpop.xlane.xlu0 %1331
        %1333 = vadd.xlane.f32.xlu0 %v1228
        %v1334 = vpop.xlane.xlu0 %1333
        %1335 = vadd.xlane.f32.xlu0 %v1229
        %v1336 = vpop.xlane.xlu0 %1335
        %1337 = vadd.xlane.f32.xlu0 %v1230
        %v1338 = vpop.xlane.xlu0 %1337
        %1339 = vadd.xlane.f32.xlu0 %v1231
        %v1340 = vpop.xlane.xlu0 %1339
        %1341 = vadd.xlane.f32.xlu0 %v1232
        %v1342 = vpop.xlane.xlu0 %1341
        %1343 = vadd.xlane.f32.xlu0 %v1233
        %v1344 = vpop.xlane.xlu0 %1343
        %1345 = vadd.xlane.f32.xlu0 %v1234
        %v1346 = vpop.xlane.xlu0 %1345
        %1347 = vadd.xlane.f32.xlu0 %v1235
        %v1348 = vpop.xlane.xlu0 %1347
        %1349 = vadd.xlane.f32.xlu0 %v1236
        %v1350 = vpop.xlane.xlu0 %1349
        %1351 = vadd.xlane.f32.xlu0 %v1237
        %v1352 = vpop.xlane.xlu0 %1351
        %1353 = vadd.xlane.f32.xlu0 %v1238
        %v1354 = vpop.xlane.xlu0 %1353
        %1355 = vadd.xlane.f32.xlu0 %v1239
        %v1356 = vpop.xlane.xlu0 %1355
        %1357 = vadd.xlane.f32.xlu0 %v1240
        %v1358 = vpop.xlane.xlu0 %1357
        %1359 = vadd.xlane.f32.xlu0 %v1241
        %v1360 = vpop.xlane.xlu0 %1359
        %1361 = vadd.xlane.f32.xlu0 %v1242
        %v1362 = vpop.xlane.xlu0 %1361
        %1363 = vadd.xlane.f32.xlu0 %v1243
        %v1364 = vpop.xlane.xlu0 %1363
        %1365 = vadd.xlane.f32.xlu0 %v1244
        %v1366 = vpop.xlane.xlu0 %1365
        %1367 = vadd.xlane.f32.xlu0 %v1245
        %v1368 = vpop.xlane.xlu0 %1367
        %1369 = vadd.xlane.f32.xlu0 %v1246
        %v1370 = vpop.xlane.xlu0 %1369
        %1371 = vadd.xlane.f32.xlu0 %v1247
        %v1372 = vpop.xlane.xlu0 %1371
        %1373 = vadd.xlane.f32.xlu0 %v1248
        %v1374 = vpop.xlane.xlu0 %1373
        %1375 = vadd.xlane.f32.xlu0 %v1249
        %v1376 = vpop.xlane.xlu0 %1375
        %1377 = vadd.xlane.f32.xlu0 %v1250
        %v1378 = vpop.xlane.xlu0 %1377
        %v1379 = vmul.f32 %v1252, %v1058
        %v1380 = vmul.f32 %v1254, %v1058
        %v1381 = vmul.f32 %v1256, %v1058
        %v1382 = vmul.f32 %v1258, %v1058
        %v1383 = vmul.f32 %v1260, %v1058
        %v1384 = vmul.f32 %v1262, %v1058
        %v1385 = vmul.f32 %v1264, %v1058
        %v1386 = vmul.f32 %v1266, %v1058
        %v1387 = vmul.f32 %v1268, %v1058
        %v1388 = vmul.f32 %v1270, %v1058
        %v1389 = vmul.f32 %v1272, %v1058
        %v1390 = vmul.f32 %v1274, %v1058
        %v1391 = vmul.f32 %v1276, %v1058
        %v1392 = vmul.f32 %v1278, %v1058
        %v1393 = vmul.f32 %v1280, %v1058
        %v1394 = vmul.f32 %v1282, %v1058
        %v1395 = vmul.f32 %v1284, %v1058
        %v1396 = vmul.f32 %v1286, %v1058
        %v1397 = vmul.f32 %v1288, %v1058
        %v1398 = vmul.f32 %v1290, %v1058
        %v1399 = vmul.f32 %v1292, %v1058
        %v1400 = vmul.f32 %v1294, %v1058
        %v1401 = vmul.f32 %v1296, %v1058
        %v1402 = vmul.f32 %v1298, %v1058
        %v1403 = vmul.f32 %v1300, %v1058
        %v1404 = vmul.f32 %v1302, %v1058
        %v1405 = vmul.f32 %v1304, %v1058
        %v1406 = vmul.f32 %v1306, %v1058
        %v1407 = vmul.f32 %v1308, %v1058
        %v1408 = vmul.f32 %v1310, %v1058
        %v1409 = vmul.f32 %v1312, %v1058
        %v1410 = vmul.f32 %v1314, %v1058
        %v1411 = vmul.f32 %v1316, %v1058
        %v1412 = vmul.f32 %v1318, %v1058
        %v1413 = vmul.f32 %v1320, %v1058
        %v1414 = vmul.f32 %v1322, %v1058
        %v1415 = vmul.f32 %v1324, %v1058
        %v1416 = vmul.f32 %v1326, %v1058
        %v1417 = vmul.f32 %v1328, %v1058
        %v1418 = vmul.f32 %v1330, %v1058
        %v1419 = vmul.f32 %v1332, %v1058
        %v1420 = vmul.f32 %v1334, %v1058
        %v1421 = vmul.f32 %v1336, %v1058
        %v1422 = vmul.f32 %v1338, %v1058
        %v1423 = vmul.f32 %v1340, %v1058
        %v1424 = vmul.f32 %v1342, %v1058
        %v1425 = vmul.f32 %v1344, %v1058
        %v1426 = vmul.f32 %v1346, %v1058
        %v1427 = vmul.f32 %v1348, %v1058
        %v1428 = vmul.f32 %v1350, %v1058
        %v1429 = vmul.f32 %v1352, %v1058
        %v1430 = vmul.f32 %v1354, %v1058
        %v1431 = vmul.f32 %v1356, %v1058
        %v1432 = vmul.f32 %v1358, %v1058
        %v1433 = vmul.f32 %v1360, %v1058
        %v1434 = vmul.f32 %v1362, %v1058
        %v1435 = vmul.f32 %v1364, %v1058
        %v1436 = vmul.f32 %v1366, %v1058
        %v1437 = vmul.f32 %v1368, %v1058
        %v1438 = vmul.f32 %v1370, %v1058
        %v1439 = vmul.f32 %v1372, %v1058
        %v1440 = vmul.f32 %v1374, %v1058
        %v1441 = vmul.f32 %v1376, %v1058
        %v1442 = vmul.f32 %v1378, %v1058
        %v1443 = vadd.f32 %v1379, 1e-05
        %v1444 = vadd.f32 %v1380, 1e-05
        %v1445 = vadd.f32 %v1381, 1e-05
        %v1446 = vadd.f32 %v1382, 1e-05
        %v1447 = vadd.f32 %v1383, 1e-05
        %v1448 = vadd.f32 %v1384, 1e-05
        %v1449 = vadd.f32 %v1385, 1e-05
        %v1450 = vadd.f32 %v1386, 1e-05
        %v1451 = vadd.f32 %v1387, 1e-05
        %v1452 = vadd.f32 %v1388, 1e-05
        %v1453 = vadd.f32 %v1389, 1e-05
        %v1454 = vadd.f32 %v1390, 1e-05
        %v1455 = vadd.f32 %v1391, 1e-05
        %v1456 = vadd.f32 %v1392, 1e-05
        %v1457 = vadd.f32 %v1393, 1e-05
        %v1458 = vadd.f32 %v1394, 1e-05
        %v1459 = vadd.f32 %v1395, 1e-05
        %v1460 = vadd.f32 %v1396, 1e-05
        %v1461 = vadd.f32 %v1397, 1e-05
        %v1462 = vadd.f32 %v1398, 1e-05
        %v1463 = vadd.f32 %v1399, 1e-05
        %v1464 = vadd.f32 %v1400, 1e-05
        %v1465 = vadd.f32 %v1401, 1e-05
        %v1466 = vadd.f32 %v1402, 1e-05
        %v1467 = vadd.f32 %v1403, 1e-05
        %v1468 = vadd.f32 %v1404, 1e-05
        %v1469 = vadd.f32 %v1405, 1e-05
        %v1470 = vadd.f32 %v1406, 1e-05
        %v1471 = vadd.f32 %v1407, 1e-05
        %v1472 = vadd.f32 %v1408, 1e-05
        %v1473 = vadd.f32 %v1409, 1e-05
        %v1474 = vadd.f32 %v1410, 1e-05
        %v1475 = vadd.f32 %v1411, 1e-05
        %v1476 = vadd.f32 %v1412, 1e-05
        %v1477 = vadd.f32 %v1413, 1e-05
        %v1478 = vadd.f32 %v1414, 1e-05
        %v1479 = vadd.f32 %v1415, 1e-05
        %v1480 = vadd.f32 %v1416, 1e-05
        %v1481 = vadd.f32 %v1417, 1e-05
        %v1482 = vadd.f32 %v1418, 1e-05
        %v1483 = vadd.f32 %v1419, 1e-05
        %v1484 = vadd.f32 %v1420, 1e-05
        %v1485 = vadd.f32 %v1421, 1e-05
        %v1486 = vadd.f32 %v1422, 1e-05
        %v1487 = vadd.f32 %v1423, 1e-05
        %v1488 = vadd.f32 %v1424, 1e-05
        %v1489 = vadd.f32 %v1425, 1e-05
        %v1490 = vadd.f32 %v1426, 1e-05
        %v1491 = vadd.f32 %v1427, 1e-05
        %v1492 = vadd.f32 %v1428, 1e-05
        %v1493 = vadd.f32 %v1429, 1e-05
        %v1494 = vadd.f32 %v1430, 1e-05
        %v1495 = vadd.f32 %v1431, 1e-05
        %v1496 = vadd.f32 %v1432, 1e-05
        %v1497 = vadd.f32 %v1433, 1e-05
        %v1498 = vadd.f32 %v1434, 1e-05
        %v1499 = vadd.f32 %v1435, 1e-05
        %v1500 = vadd.f32 %v1436, 1e-05
        %v1501 = vadd.f32 %v1437, 1e-05
        %v1502 = vadd.f32 %v1438, 1e-05
        %v1503 = vadd.f32 %v1439, 1e-05
        %v1504 = vadd.f32 %v1440, 1e-05
        %v1505 = vadd.f32 %v1441, 1e-05
        %v1506 = vadd.f32 %v1442, 1e-05
        %v1507 = vrsqrt.pop %v1443
        %v1508 = vmul.f32 %v1507, %v1443
        %v1509 = vmul.f32 %v1508, %v1507
        %v1510 = vmul.f32 0.5, %v1509
        %v1511 = vsub.f32 1.5, %v1510
        %v1512 = vmul.f32 %v1507, %v1511
        %vm1513 = vweird.f32 %v1443
        %vm1514 = vweird.f32 %v1507
        %vm1515 = vmor %vm1513, %vm1514
        %v1516 = vsel %vm1515, %v1507, %v1512
        %v1517 = vrsqrt.pop %v1444
        %v1518 = vmul.f32 %v1517, %v1444
        %v1519 = vmul.f32 %v1518, %v1517
        %v1520 = vmul.f32 0.5, %v1519
        %v1521 = vsub.f32 1.5, %v1520
        %v1522 = vmul.f32 %v1517, %v1521
        %vm1523 = vweird.f32 %v1444
        %vm1524 = vweird.f32 %v1517
        %vm1525 = vmor %vm1523, %vm1524
        %v1526 = vsel %vm1525, %v1517, %v1522
        %v1527 = vrsqrt.pop %v1445
        %v1528 = vmul.f32 %v1527, %v1445
        %v1529 = vmul.f32 %v1528, %v1527
        %v1530 = vmul.f32 0.5, %v1529
        %v1531 = vsub.f32 1.5, %v1530
        %v1532 = vmul.f32 %v1527, %v1531
        %vm1533 = vweird.f32 %v1445
        %vm1534 = vweird.f32 %v1527
        %vm1535 = vmor %vm1533, %vm1534
        %v1536 = vsel %vm1535, %v1527, %v1532
        %v1537 = vrsqrt.pop %v1446
        %v1538 = vmul.f32 %v1537, %v1446
        %v1539 = vmul.f32 %v1538, %v1537
        %v1540 = vmul.f32 0.5, %v1539
        %v1541 = vsub.f32 1.5, %v1540
        %v1542 = vmul.f32 %v1537, %v1541
        %vm1543 = vweird.f32 %v1446
        %vm1544 = vweird.f32 %v1537
        %vm1545 = vmor %vm1543, %vm1544
        %v1546 = vsel %vm1545, %v1537, %v1542
        %v1547 = vrsqrt.pop %v1447
        %v1548 = vmul.f32 %v1547, %v1447
        %v1549 = vmul.f32 %v1548, %v1547
        %v1550 = vmul.f32 0.5, %v1549
        %v1551 = vsub.f32 1.5, %v1550
        %v1552 = vmul.f32 %v1547, %v1551
        %vm1553 = vweird.f32 %v1447
        %vm1554 = vweird.f32 %v1547
        %vm1555 = vmor %vm1553, %vm1554
        %v1556 = vsel %vm1555, %v1547, %v1552
        %v1557 = vrsqrt.pop %v1448
        %v1558 = vmul.f32 %v1557, %v1448
        %v1559 = vmul.f32 %v1558, %v1557
        %v1560 = vmul.f32 0.5, %v1559
        %v1561 = vsub.f32 1.5, %v1560
        %v1562 = vmul.f32 %v1557, %v1561
        %vm1563 = vweird.f32 %v1448
        %vm1564 = vweird.f32 %v1557
        %vm1565 = vmor %vm1563, %vm1564
        %v1566 = vsel %vm1565, %v1557, %v1562
        %v1567 = vrsqrt.pop %v1449
        %v1568 = vmul.f32 %v1567, %v1449
        %v1569 = vmul.f32 %v1568, %v1567
        %v1570 = vmul.f32 0.5, %v1569
        %v1571 = vsub.f32 1.5, %v1570
        %v1572 = vmul.f32 %v1567, %v1571
        %vm1573 = vweird.f32 %v1449
        %vm1574 = vweird.f32 %v1567
        %vm1575 = vmor %vm1573, %vm1574
        %v1576 = vsel %vm1575, %v1567, %v1572
        %v1577 = vrsqrt.pop %v1450
        %v1578 = vmul.f32 %v1577, %v1450
        %v1579 = vmul.f32 %v1578, %v1577
        %v1580 = vmul.f32 0.5, %v1579
        %v1581 = vsub.f32 1.5, %v1580
        %v1582 = vmul.f32 %v1577, %v1581
        %vm1583 = vweird.f32 %v1450
        %vm1584 = vweird.f32 %v1577
        %vm1585 = vmor %vm1583, %vm1584
        %v1586 = vsel %vm1585, %v1577, %v1582
        %v1587 = vrsqrt.pop %v1451
        %v1588 = vmul.f32 %v1587, %v1451
        %v1589 = vmul.f32 %v1588, %v1587
        %v1590 = vmul.f32 0.5, %v1589
        %v1591 = vsub.f32 1.5, %v1590
        %v1592 = vmul.f32 %v1587, %v1591
        %vm1593 = vweird.f32 %v1451
        %vm1594 = vweird.f32 %v1587
        %vm1595 = vmor %vm1593, %vm1594
        %v1596 = vsel %vm1595, %v1587, %v1592
        %v1597 = vrsqrt.pop %v1452
        %v1598 = vmul.f32 %v1597, %v1452
        %v1599 = vmul.f32 %v1598, %v1597
        %v1600 = vmul.f32 0.5, %v1599
        %v1601 = vsub.f32 1.5, %v1600
        %v1602 = vmul.f32 %v1597, %v1601
        %vm1603 = vweird.f32 %v1452
        %vm1604 = vweird.f32 %v1597
        %vm1605 = vmor %vm1603, %vm1604
        %v1606 = vsel %vm1605, %v1597, %v1602
        %v1607 = vrsqrt.pop %v1453
        %v1608 = vmul.f32 %v1607, %v1453
        %v1609 = vmul.f32 %v1608, %v1607
        %v1610 = vmul.f32 0.5, %v1609
        %v1611 = vsub.f32 1.5, %v1610
        %v1612 = vmul.f32 %v1607, %v1611
        %vm1613 = vweird.f32 %v1453
        %vm1614 = vweird.f32 %v1607
        %vm1615 = vmor %vm1613, %vm1614
        %v1616 = vsel %vm1615, %v1607, %v1612
        %v1617 = vrsqrt.pop %v1454
        %v1618 = vmul.f32 %v1617, %v1454
        %v1619 = vmul.f32 %v1618, %v1617
        %v1620 = vmul.f32 0.5, %v1619
        %v1621 = vsub.f32 1.5, %v1620
        %v1622 = vmul.f32 %v1617, %v1621
        %vm1623 = vweird.f32 %v1454
        %vm1624 = vweird.f32 %v1617
        %vm1625 = vmor %vm1623, %vm1624
        %v1626 = vsel %vm1625, %v1617, %v1622
        %v1627 = vrsqrt.pop %v1455
        %v1628 = vmul.f32 %v1627, %v1455
        %v1629 = vmul.f32 %v1628, %v1627
        %v1630 = vmul.f32 0.5, %v1629
        %v1631 = vsub.f32 1.5, %v1630
        %v1632 = vmul.f32 %v1627, %v1631
        %vm1633 = vweird.f32 %v1455
        %vm1634 = vweird.f32 %v1627
        %vm1635 = vmor %vm1633, %vm1634
        %v1636 = vsel %vm1635, %v1627, %v1632
        %v1637 = vrsqrt.pop %v1456
        %v1638 = vmul.f32 %v1637, %v1456
        %v1639 = vmul.f32 %v1638, %v1637
        %v1640 = vmul.f32 0.5, %v1639
        %v1641 = vsub.f32 1.5, %v1640
        %v1642 = vmul.f32 %v1637, %v1641
        %vm1643 = vweird.f32 %v1456
        %vm1644 = vweird.f32 %v1637
        %vm1645 = vmor %vm1643, %vm1644
        %v1646 = vsel %vm1645, %v1637, %v1642
        %v1647 = vrsqrt.pop %v1457
        %v1648 = vmul.f32 %v1647, %v1457
        %v1649 = vmul.f32 %v1648, %v1647
        %v1650 = vmul.f32 0.5, %v1649
        %v1651 = vsub.f32 1.5, %v1650
        %v1652 = vmul.f32 %v1647, %v1651
        %vm1653 = vweird.f32 %v1457
        %vm1654 = vweird.f32 %v1647
        %vm1655 = vmor %vm1653, %vm1654
        %v1656 = vsel %vm1655, %v1647, %v1652
        %v1657 = vrsqrt.pop %v1458
        %v1658 = vmul.f32 %v1657, %v1458
        %v1659 = vmul.f32 %v1658, %v1657
        %v1660 = vmul.f32 0.5, %v1659
        %v1661 = vsub.f32 1.5, %v1660
        %v1662 = vmul.f32 %v1657, %v1661
        %vm1663 = vweird.f32 %v1458
        %vm1664 = vweird.f32 %v1657
        %vm1665 = vmor %vm1663, %vm1664
        %v1666 = vsel %vm1665, %v1657, %v1662
        %v1667 = vrsqrt.pop %v1459
        %v1668 = vmul.f32 %v1667, %v1459
        %v1669 = vmul.f32 %v1668, %v1667
        %v1670 = vmul.f32 0.5, %v1669
        %v1671 = vsub.f32 1.5, %v1670
        %v1672 = vmul.f32 %v1667, %v1671
        %vm1673 = vweird.f32 %v1459
        %vm1674 = vweird.f32 %v1667
        %vm1675 = vmor %vm1673, %vm1674
        %v1676 = vsel %vm1675, %v1667, %v1672
        %v1677 = vrsqrt.pop %v1460
        %v1678 = vmul.f32 %v1677, %v1460
        %v1679 = vmul.f32 %v1678, %v1677
        %v1680 = vmul.f32 0.5, %v1679
        %v1681 = vsub.f32 1.5, %v1680
        %v1682 = vmul.f32 %v1677, %v1681
        %vm1683 = vweird.f32 %v1460
        %vm1684 = vweird.f32 %v1677
        %vm1685 = vmor %vm1683, %vm1684
        %v1686 = vsel %vm1685, %v1677, %v1682
        %v1687 = vrsqrt.pop %v1461
        %v1688 = vmul.f32 %v1687, %v1461
        %v1689 = vmul.f32 %v1688, %v1687
        %v1690 = vmul.f32 0.5, %v1689
        %v1691 = vsub.f32 1.5, %v1690
        %v1692 = vmul.f32 %v1687, %v1691
        %vm1693 = vweird.f32 %v1461
        %vm1694 = vweird.f32 %v1687
        %vm1695 = vmor %vm1693, %vm1694
        %v1696 = vsel %vm1695, %v1687, %v1692
        %v1697 = vrsqrt.pop %v1462
        %v1698 = vmul.f32 %v1697, %v1462
        %v1699 = vmul.f32 %v1698, %v1697
        %v1700 = vmul.f32 0.5, %v1699
        %v1701 = vsub.f32 1.5, %v1700
        %v1702 = vmul.f32 %v1697, %v1701
        %vm1703 = vweird.f32 %v1462
        %vm1704 = vweird.f32 %v1697
        %vm1705 = vmor %vm1703, %vm1704
        %v1706 = vsel %vm1705, %v1697, %v1702
        %v1707 = vrsqrt.pop %v1463
        %v1708 = vmul.f32 %v1707, %v1463
        %v1709 = vmul.f32 %v1708, %v1707
        %v1710 = vmul.f32 0.5, %v1709
        %v1711 = vsub.f32 1.5, %v1710
        %v1712 = vmul.f32 %v1707, %v1711
        %vm1713 = vweird.f32 %v1463
        %vm1714 = vweird.f32 %v1707
        %vm1715 = vmor %vm1713, %vm1714
        %v1716 = vsel %vm1715, %v1707, %v1712
        %v1717 = vrsqrt.pop %v1464
        %v1718 = vmul.f32 %v1717, %v1464
        %v1719 = vmul.f32 %v1718, %v1717
        %v1720 = vmul.f32 0.5, %v1719
        %v1721 = vsub.f32 1.5, %v1720
        %v1722 = vmul.f32 %v1717, %v1721
        %vm1723 = vweird.f32 %v1464
        %vm1724 = vweird.f32 %v1717
        %vm1725 = vmor %vm1723, %vm1724
        %v1726 = vsel %vm1725, %v1717, %v1722
        %v1727 = vrsqrt.pop %v1465
        %v1728 = vmul.f32 %v1727, %v1465
        %v1729 = vmul.f32 %v1728, %v1727
        %v1730 = vmul.f32 0.5, %v1729
        %v1731 = vsub.f32 1.5, %v1730
        %v1732 = vmul.f32 %v1727, %v1731
        %vm1733 = vweird.f32 %v1465
        %vm1734 = vweird.f32 %v1727
        %vm1735 = vmor %vm1733, %vm1734
        %v1736 = vsel %vm1735, %v1727, %v1732
        %v1737 = vrsqrt.pop %v1466
        %v1738 = vmul.f32 %v1737, %v1466
        %v1739 = vmul.f32 %v1738, %v1737
        %v1740 = vmul.f32 0.5, %v1739
        %v1741 = vsub.f32 1.5, %v1740
        %v1742 = vmul.f32 %v1737, %v1741
        %vm1743 = vweird.f32 %v1466
        %vm1744 = vweird.f32 %v1737
        %vm1745 = vmor %vm1743, %vm1744
        %v1746 = vsel %vm1745, %v1737, %v1742
        %v1747 = vrsqrt.pop %v1467
        %v1748 = vmul.f32 %v1747, %v1467
        %v1749 = vmul.f32 %v1748, %v1747
        %v1750 = vmul.f32 0.5, %v1749
        %v1751 = vsub.f32 1.5, %v1750
        %v1752 = vmul.f32 %v1747, %v1751
        %vm1753 = vweird.f32 %v1467
        %vm1754 = vweird.f32 %v1747
        %vm1755 = vmor %vm1753, %vm1754
        %v1756 = vsel %vm1755, %v1747, %v1752
        %v1757 = vrsqrt.pop %v1468
        %v1758 = vmul.f32 %v1757, %v1468
        %v1759 = vmul.f32 %v1758, %v1757
        %v1760 = vmul.f32 0.5, %v1759
        %v1761 = vsub.f32 1.5, %v1760
        %v1762 = vmul.f32 %v1757, %v1761
        %vm1763 = vweird.f32 %v1468
        %vm1764 = vweird.f32 %v1757
        %vm1765 = vmor %vm1763, %vm1764
        %v1766 = vsel %vm1765, %v1757, %v1762
        %v1767 = vrsqrt.pop %v1469
        %v1768 = vmul.f32 %v1767, %v1469
        %v1769 = vmul.f32 %v1768, %v1767
        %v1770 = vmul.f32 0.5, %v1769
        %v1771 = vsub.f32 1.5, %v1770
        %v1772 = vmul.f32 %v1767, %v1771
        %vm1773 = vweird.f32 %v1469
        %vm1774 = vweird.f32 %v1767
        %vm1775 = vmor %vm1773, %vm1774
        %v1776 = vsel %vm1775, %v1767, %v1772
        %v1777 = vrsqrt.pop %v1470
        %v1778 = vmul.f32 %v1777, %v1470
        %v1779 = vmul.f32 %v1778, %v1777
        %v1780 = vmul.f32 0.5, %v1779
        %v1781 = vsub.f32 1.5, %v1780
        %v1782 = vmul.f32 %v1777, %v1781
        %vm1783 = vweird.f32 %v1470
        %vm1784 = vweird.f32 %v1777
        %vm1785 = vmor %vm1783, %vm1784
        %v1786 = vsel %vm1785, %v1777, %v1782
        %v1787 = vrsqrt.pop %v1471
        %v1788 = vmul.f32 %v1787, %v1471
        %v1789 = vmul.f32 %v1788, %v1787
        %v1790 = vmul.f32 0.5, %v1789
        %v1791 = vsub.f32 1.5, %v1790
        %v1792 = vmul.f32 %v1787, %v1791
        %vm1793 = vweird.f32 %v1471
        %vm1794 = vweird.f32 %v1787
        %vm1795 = vmor %vm1793, %vm1794
        %v1796 = vsel %vm1795, %v1787, %v1792
        %v1797 = vrsqrt.pop %v1472
        %v1798 = vmul.f32 %v1797, %v1472
        %v1799 = vmul.f32 %v1798, %v1797
        %v1800 = vmul.f32 0.5, %v1799
        %v1801 = vsub.f32 1.5, %v1800
        %v1802 = vmul.f32 %v1797, %v1801
        %vm1803 = vweird.f32 %v1472
        %vm1804 = vweird.f32 %v1797
        %vm1805 = vmor %vm1803, %vm1804
        %v1806 = vsel %vm1805, %v1797, %v1802
        %v1807 = vrsqrt.pop %v1473
        %v1808 = vmul.f32 %v1807, %v1473
        %v1809 = vmul.f32 %v1808, %v1807
        %v1810 = vmul.f32 0.5, %v1809
        %v1811 = vsub.f32 1.5, %v1810
        %v1812 = vmul.f32 %v1807, %v1811
        %vm1813 = vweird.f32 %v1473
        %vm1814 = vweird.f32 %v1807
        %vm1815 = vmor %vm1813, %vm1814
        %v1816 = vsel %vm1815, %v1807, %v1812
        %v1817 = vrsqrt.pop %v1474
        %v1818 = vmul.f32 %v1817, %v1474
        %v1819 = vmul.f32 %v1818, %v1817
        %v1820 = vmul.f32 0.5, %v1819
        %v1821 = vsub.f32 1.5, %v1820
        %v1822 = vmul.f32 %v1817, %v1821
        %vm1823 = vweird.f32 %v1474
        %vm1824 = vweird.f32 %v1817
        %vm1825 = vmor %vm1823, %vm1824
        %v1826 = vsel %vm1825, %v1817, %v1822
        %v1827 = vrsqrt.pop %v1475
        %v1828 = vmul.f32 %v1827, %v1475
        %v1829 = vmul.f32 %v1828, %v1827
        %v1830 = vmul.f32 0.5, %v1829
        %v1831 = vsub.f32 1.5, %v1830
        %v1832 = vmul.f32 %v1827, %v1831
        %vm1833 = vweird.f32 %v1475
        %vm1834 = vweird.f32 %v1827
        %vm1835 = vmor %vm1833, %vm1834
        %v1836 = vsel %vm1835, %v1827, %v1832
        %v1837 = vrsqrt.pop %v1476
        %v1838 = vmul.f32 %v1837, %v1476
        %v1839 = vmul.f32 %v1838, %v1837
        %v1840 = vmul.f32 0.5, %v1839
        %v1841 = vsub.f32 1.5, %v1840
        %v1842 = vmul.f32 %v1837, %v1841
        %vm1843 = vweird.f32 %v1476
        %vm1844 = vweird.f32 %v1837
        %vm1845 = vmor %vm1843, %vm1844
        %v1846 = vsel %vm1845, %v1837, %v1842
        %v1847 = vrsqrt.pop %v1477
        %v1848 = vmul.f32 %v1847, %v1477
        %v1849 = vmul.f32 %v1848, %v1847
        %v1850 = vmul.f32 0.5, %v1849
        %v1851 = vsub.f32 1.5, %v1850
        %v1852 = vmul.f32 %v1847, %v1851
        %vm1853 = vweird.f32 %v1477
        %vm1854 = vweird.f32 %v1847
        %vm1855 = vmor %vm1853, %vm1854
        %v1856 = vsel %vm1855, %v1847, %v1852
        %v1857 = vrsqrt.pop %v1478
        %v1858 = vmul.f32 %v1857, %v1478
        %v1859 = vmul.f32 %v1858, %v1857
        %v1860 = vmul.f32 0.5, %v1859
        %v1861 = vsub.f32 1.5, %v1860
        %v1862 = vmul.f32 %v1857, %v1861
        %vm1863 = vweird.f32 %v1478
        %vm1864 = vweird.f32 %v1857
        %vm1865 = vmor %vm1863, %vm1864
        %v1866 = vsel %vm1865, %v1857, %v1862
        %v1867 = vrsqrt.pop %v1479
        %v1868 = vmul.f32 %v1867, %v1479
        %v1869 = vmul.f32 %v1868, %v1867
        %v1870 = vmul.f32 0.5, %v1869
        %v1871 = vsub.f32 1.5, %v1870
        %v1872 = vmul.f32 %v1867, %v1871
        %vm1873 = vweird.f32 %v1479
        %vm1874 = vweird.f32 %v1867
        %vm1875 = vmor %vm1873, %vm1874
        %v1876 = vsel %vm1875, %v1867, %v1872
        %v1877 = vrsqrt.pop %v1480
        %v1878 = vmul.f32 %v1877, %v1480
        %v1879 = vmul.f32 %v1878, %v1877
        %v1880 = vmul.f32 0.5, %v1879
        %v1881 = vsub.f32 1.5, %v1880
        %v1882 = vmul.f32 %v1877, %v1881
        %vm1883 = vweird.f32 %v1480
        %vm1884 = vweird.f32 %v1877
        %vm1885 = vmor %vm1883, %vm1884
        %v1886 = vsel %vm1885, %v1877, %v1882
        %v1887 = vrsqrt.pop %v1481
        %v1888 = vmul.f32 %v1887, %v1481
        %v1889 = vmul.f32 %v1888, %v1887
        %v1890 = vmul.f32 0.5, %v1889
        %v1891 = vsub.f32 1.5, %v1890
        %v1892 = vmul.f32 %v1887, %v1891
        %vm1893 = vweird.f32 %v1481
        %vm1894 = vweird.f32 %v1887
        %vm1895 = vmor %vm1893, %vm1894
        %v1896 = vsel %vm1895, %v1887, %v1892
        %v1897 = vrsqrt.pop %v1482
        %v1898 = vmul.f32 %v1897, %v1482
        %v1899 = vmul.f32 %v1898, %v1897
        %v1900 = vmul.f32 0.5, %v1899
        %v1901 = vsub.f32 1.5, %v1900
        %v1902 = vmul.f32 %v1897, %v1901
        %vm1903 = vweird.f32 %v1482
        %vm1904 = vweird.f32 %v1897
        %vm1905 = vmor %vm1903, %vm1904
        %v1906 = vsel %vm1905, %v1897, %v1902
        %v1907 = vrsqrt.pop %v1483
        %v1908 = vmul.f32 %v1907, %v1483
        %v1909 = vmul.f32 %v1908, %v1907
        %v1910 = vmul.f32 0.5, %v1909
        %v1911 = vsub.f32 1.5, %v1910
        %v1912 = vmul.f32 %v1907, %v1911
        %vm1913 = vweird.f32 %v1483
        %vm1914 = vweird.f32 %v1907
        %vm1915 = vmor %vm1913, %vm1914
        %v1916 = vsel %vm1915, %v1907, %v1912
        %v1917 = vrsqrt.pop %v1484
        %v1918 = vmul.f32 %v1917, %v1484
        %v1919 = vmul.f32 %v1918, %v1917
        %v1920 = vmul.f32 0.5, %v1919
        %v1921 = vsub.f32 1.5, %v1920
        %v1922 = vmul.f32 %v1917, %v1921
        %vm1923 = vweird.f32 %v1484
        %vm1924 = vweird.f32 %v1917
        %vm1925 = vmor %vm1923, %vm1924
        %v1926 = vsel %vm1925, %v1917, %v1922
        %v1927 = vrsqrt.pop %v1485
        %v1928 = vmul.f32 %v1927, %v1485
        %v1929 = vmul.f32 %v1928, %v1927
        %v1930 = vmul.f32 0.5, %v1929
        %v1931 = vsub.f32 1.5, %v1930
        %v1932 = vmul.f32 %v1927, %v1931
        %vm1933 = vweird.f32 %v1485
        %vm1934 = vweird.f32 %v1927
        %vm1935 = vmor %vm1933, %vm1934
        %v1936 = vsel %vm1935, %v1927, %v1932
        %v1937 = vrsqrt.pop %v1486
        %v1938 = vmul.f32 %v1937, %v1486
        %v1939 = vmul.f32 %v1938, %v1937
        %v1940 = vmul.f32 0.5, %v1939
        %v1941 = vsub.f32 1.5, %v1940
        %v1942 = vmul.f32 %v1937, %v1941
        %vm1943 = vweird.f32 %v1486
        %vm1944 = vweird.f32 %v1937
        %vm1945 = vmor %vm1943, %vm1944
        %v1946 = vsel %vm1945, %v1937, %v1942
        %v1947 = vrsqrt.pop %v1487
        %v1948 = vmul.f32 %v1947, %v1487
        %v1949 = vmul.f32 %v1948, %v1947
        %v1950 = vmul.f32 0.5, %v1949
        %v1951 = vsub.f32 1.5, %v1950
        %v1952 = vmul.f32 %v1947, %v1951
        %vm1953 = vweird.f32 %v1487
        %vm1954 = vweird.f32 %v1947
        %vm1955 = vmor %vm1953, %vm1954
        %v1956 = vsel %vm1955, %v1947, %v1952
        %v1957 = vrsqrt.pop %v1488
        %v1958 = vmul.f32 %v1957, %v1488
        %v1959 = vmul.f32 %v1958, %v1957
        %v1960 = vmul.f32 0.5, %v1959
        %v1961 = vsub.f32 1.5, %v1960
        %v1962 = vmul.f32 %v1957, %v1961
        %vm1963 = vweird.f32 %v1488
        %vm1964 = vweird.f32 %v1957
        %vm1965 = vmor %vm1963, %vm1964
        %v1966 = vsel %vm1965, %v1957, %v1962
        %v1967 = vrsqrt.pop %v1489
        %v1968 = vmul.f32 %v1967, %v1489
        %v1969 = vmul.f32 %v1968, %v1967
        %v1970 = vmul.f32 0.5, %v1969
        %v1971 = vsub.f32 1.5, %v1970
        %v1972 = vmul.f32 %v1967, %v1971
        %vm1973 = vweird.f32 %v1489
        %vm1974 = vweird.f32 %v1967
        %vm1975 = vmor %vm1973, %vm1974
        %v1976 = vsel %vm1975, %v1967, %v1972
        %v1977 = vrsqrt.pop %v1490
        %v1978 = vmul.f32 %v1977, %v1490
        %v1979 = vmul.f32 %v1978, %v1977
        %v1980 = vmul.f32 0.5, %v1979
        %v1981 = vsub.f32 1.5, %v1980
        %v1982 = vmul.f32 %v1977, %v1981
        %vm1983 = vweird.f32 %v1490
        %vm1984 = vweird.f32 %v1977
        %vm1985 = vmor %vm1983, %vm1984
        %v1986 = vsel %vm1985, %v1977, %v1982
        %v1987 = vrsqrt.pop %v1491
        %v1988 = vmul.f32 %v1987, %v1491
        %v1989 = vmul.f32 %v1988, %v1987
        %v1990 = vmul.f32 0.5, %v1989
        %v1991 = vsub.f32 1.5, %v1990
        %v1992 = vmul.f32 %v1987, %v1991
        %vm1993 = vweird.f32 %v1491
        %vm1994 = vweird.f32 %v1987
        %vm1995 = vmor %vm1993, %vm1994
        %v1996 = vsel %vm1995, %v1987, %v1992
        %v1997 = vrsqrt.pop %v1492
        %v1998 = vmul.f32 %v1997, %v1492
        %v1999 = vmul.f32 %v1998, %v1997
        %v2000 = vmul.f32 0.5, %v1999
        %v2001 = vsub.f32 1.5, %v2000
        %v2002 = vmul.f32 %v1997, %v2001
        %vm2003 = vweird.f32 %v1492
        %vm2004 = vweird.f32 %v1997
        %vm2005 = vmor %vm2003, %vm2004
        %v2006 = vsel %vm2005, %v1997, %v2002
        %v2007 = vrsqrt.pop %v1493
        %v2008 = vmul.f32 %v2007, %v1493
        %v2009 = vmul.f32 %v2008, %v2007
        %v2010 = vmul.f32 0.5, %v2009
        %v2011 = vsub.f32 1.5, %v2010
        %v2012 = vmul.f32 %v2007, %v2011
        %vm2013 = vweird.f32 %v1493
        %vm2014 = vweird.f32 %v2007
        %vm2015 = vmor %vm2013, %vm2014
        %v2016 = vsel %vm2015, %v2007, %v2012
        %v2017 = vrsqrt.pop %v1494
        %v2018 = vmul.f32 %v2017, %v1494
        %v2019 = vmul.f32 %v2018, %v2017
        %v2020 = vmul.f32 0.5, %v2019
        %v2021 = vsub.f32 1.5, %v2020
        %v2022 = vmul.f32 %v2017, %v2021
        %vm2023 = vweird.f32 %v1494
        %vm2024 = vweird.f32 %v2017
        %vm2025 = vmor %vm2023, %vm2024
        %v2026 = vsel %vm2025, %v2017, %v2022
        %v2027 = vrsqrt.pop %v1495
        %v2028 = vmul.f32 %v2027, %v1495
        %v2029 = vmul.f32 %v2028, %v2027
        %v2030 = vmul.f32 0.5, %v2029
        %v2031 = vsub.f32 1.5, %v2030
        %v2032 = vmul.f32 %v2027, %v2031
        %vm2033 = vweird.f32 %v1495
        %vm2034 = vweird.f32 %v2027
        %vm2035 = vmor %vm2033, %vm2034
        %v2036 = vsel %vm2035, %v2027, %v2032
        %v2037 = vrsqrt.pop %v1496
        %v2038 = vmul.f32 %v2037, %v1496
        %v2039 = vmul.f32 %v2038, %v2037
        %v2040 = vmul.f32 0.5, %v2039
        %v2041 = vsub.f32 1.5, %v2040
        %v2042 = vmul.f32 %v2037, %v2041
        %vm2043 = vweird.f32 %v1496
        %vm2044 = vweird.f32 %v2037
        %vm2045 = vmor %vm2043, %vm2044
        %v2046 = vsel %vm2045, %v2037, %v2042
        %v2047 = vrsqrt.pop %v1497
        %v2048 = vmul.f32 %v2047, %v1497
        %v2049 = vmul.f32 %v2048, %v2047
        %v2050 = vmul.f32 0.5, %v2049
        %v2051 = vsub.f32 1.5, %v2050
        %v2052 = vmul.f32 %v2047, %v2051
        %vm2053 = vweird.f32 %v1497
        %vm2054 = vweird.f32 %v2047
        %vm2055 = vmor %vm2053, %vm2054
        %v2056 = vsel %vm2055, %v2047, %v2052
        %v2057 = vrsqrt.pop %v1498
        %v2058 = vmul.f32 %v2057, %v1498
        %v2059 = vmul.f32 %v2058, %v2057
        %v2060 = vmul.f32 0.5, %v2059
        %v2061 = vsub.f32 1.5, %v2060
        %v2062 = vmul.f32 %v2057, %v2061
        %vm2063 = vweird.f32 %v1498
        %vm2064 = vweird.f32 %v2057
        %vm2065 = vmor %vm2063, %vm2064
        %v2066 = vsel %vm2065, %v2057, %v2062
        %v2067 = vrsqrt.pop %v1499
        %v2068 = vmul.f32 %v2067, %v1499
        %v2069 = vmul.f32 %v2068, %v2067
        %v2070 = vmul.f32 0.5, %v2069
        %v2071 = vsub.f32 1.5, %v2070
        %v2072 = vmul.f32 %v2067, %v2071
        %vm2073 = vweird.f32 %v1499
        %vm2074 = vweird.f32 %v2067
        %vm2075 = vmor %vm2073, %vm2074
        %v2076 = vsel %vm2075, %v2067, %v2072
        %v2077 = vrsqrt.pop %v1500
        %v2078 = vmul.f32 %v2077, %v1500
        %v2079 = vmul.f32 %v2078, %v2077
        %v2080 = vmul.f32 0.5, %v2079
        %v2081 = vsub.f32 1.5, %v2080
        %v2082 = vmul.f32 %v2077, %v2081
        %vm2083 = vweird.f32 %v1500
        %vm2084 = vweird.f32 %v2077
        %vm2085 = vmor %vm2083, %vm2084
        %v2086 = vsel %vm2085, %v2077, %v2082
        %v2087 = vrsqrt.pop %v1501
        %v2088 = vmul.f32 %v2087, %v1501
        %v2089 = vmul.f32 %v2088, %v2087
        %v2090 = vmul.f32 0.5, %v2089
        %v2091 = vsub.f32 1.5, %v2090
        %v2092 = vmul.f32 %v2087, %v2091
        %vm2093 = vweird.f32 %v1501
        %vm2094 = vweird.f32 %v2087
        %vm2095 = vmor %vm2093, %vm2094
        %v2096 = vsel %vm2095, %v2087, %v2092
        %v2097 = vrsqrt.pop %v1502
        %v2098 = vmul.f32 %v2097, %v1502
        %v2099 = vmul.f32 %v2098, %v2097
        %v2100 = vmul.f32 0.5, %v2099
        %v2101 = vsub.f32 1.5, %v2100
        %v2102 = vmul.f32 %v2097, %v2101
        %vm2103 = vweird.f32 %v1502
        %vm2104 = vweird.f32 %v2097
        %vm2105 = vmor %vm2103, %vm2104
        %v2106 = vsel %vm2105, %v2097, %v2102
        %v2107 = vrsqrt.pop %v1503
        %v2108 = vmul.f32 %v2107, %v1503
        %v2109 = vmul.f32 %v2108, %v2107
        %v2110 = vmul.f32 0.5, %v2109
        %v2111 = vsub.f32 1.5, %v2110
        %v2112 = vmul.f32 %v2107, %v2111
        %vm2113 = vweird.f32 %v1503
        %vm2114 = vweird.f32 %v2107
        %vm2115 = vmor %vm2113, %vm2114
        %v2116 = vsel %vm2115, %v2107, %v2112
        %v2117 = vrsqrt.pop %v1504
        %v2118 = vmul.f32 %v2117, %v1504
        %v2119 = vmul.f32 %v2118, %v2117
        %v2120 = vmul.f32 0.5, %v2119
        %v2121 = vsub.f32 1.5, %v2120
        %v2122 = vmul.f32 %v2117, %v2121
        %vm2123 = vweird.f32 %v1504
        %vm2124 = vweird.f32 %v2117
        %vm2125 = vmor %vm2123, %vm2124
        %v2126 = vsel %vm2125, %v2117, %v2122
        %v2127 = vrsqrt.pop %v1505
        %v2128 = vmul.f32 %v2127, %v1505
        %v2129 = vmul.f32 %v2128, %v2127
        %v2130 = vmul.f32 0.5, %v2129
        %v2131 = vsub.f32 1.5, %v2130
        %v2132 = vmul.f32 %v2127, %v2131
        %vm2133 = vweird.f32 %v1505
        %vm2134 = vweird.f32 %v2127
        %vm2135 = vmor %vm2133, %vm2134
        %v2136 = vsel %vm2135, %v2127, %v2132
        %v2137 = vrsqrt.pop %v1506
        %v2138 = vmul.f32 %v2137, %v1506
        %v2139 = vmul.f32 %v2138, %v2137
        %v2140 = vmul.f32 0.5, %v2139
        %v2141 = vsub.f32 1.5, %v2140
        %v2142 = vmul.f32 %v2137, %v2141
        %vm2143 = vweird.f32 %v1506
        %vm2144 = vweird.f32 %v2137
        %vm2145 = vmor %vm2143, %vm2144
        %v2146 = vsel %vm2145, %v2137, %v2142
        %v2147 = vmul.f32 %v1123, %v1516
        %v2148 = vmul.f32 %v1124, %v1526
        %v2149 = vmul.f32 %v1125, %v1536
        %v2150 = vmul.f32 %v1126, %v1546
        %v2151 = vmul.f32 %v1127, %v1556
        %v2152 = vmul.f32 %v1128, %v1566
        %v2153 = vmul.f32 %v1129, %v1576
        %v2154 = vmul.f32 %v1130, %v1586
        %v2155 = vmul.f32 %v1131, %v1596
        %v2156 = vmul.f32 %v1132, %v1606
        %v2157 = vmul.f32 %v1133, %v1616
        %v2158 = vmul.f32 %v1134, %v1626
        %v2159 = vmul.f32 %v1135, %v1636
        %v2160 = vmul.f32 %v1136, %v1646
        %v2161 = vmul.f32 %v1137, %v1656
        %v2162 = vmul.f32 %v1138, %v1666
        %v2163 = vmul.f32 %v1139, %v1676
        %v2164 = vmul.f32 %v1140, %v1686
        %v2165 = vmul.f32 %v1141, %v1696
        %v2166 = vmul.f32 %v1142, %v1706
        %v2167 = vmul.f32 %v1143, %v1716
        %v2168 = vmul.f32 %v1144, %v1726
        %v2169 = vmul.f32 %v1145, %v1736
        %v2170 = vmul.f32 %v1146, %v1746
        %v2171 = vmul.f32 %v1147, %v1756
        %v2172 = vmul.f32 %v1148, %v1766
        %v2173 = vmul.f32 %v1149, %v1776
        %v2174 = vmul.f32 %v1150, %v1786
        %v2175 = vmul.f32 %v1151, %v1796
        %v2176 = vmul.f32 %v1152, %v1806
        %v2177 = vmul.f32 %v1153, %v1816
        %v2178 = vmul.f32 %v1154, %v1826
        %v2179 = vmul.f32 %v1155, %v1836
        %v2180 = vmul.f32 %v1156, %v1846
        %v2181 = vmul.f32 %v1157, %v1856
        %v2182 = vmul.f32 %v1158, %v1866
        %v2183 = vmul.f32 %v1159, %v1876
        %v2184 = vmul.f32 %v1160, %v1886
        %v2185 = vmul.f32 %v1161, %v1896
        %v2186 = vmul.f32 %v1162, %v1906
        %v2187 = vmul.f32 %v1163, %v1916
        %v2188 = vmul.f32 %v1164, %v1926
        %v2189 = vmul.f32 %v1165, %v1936
        %v2190 = vmul.f32 %v1166, %v1946
        %v2191 = vmul.f32 %v1167, %v1956
        %v2192 = vmul.f32 %v1168, %v1966
        %v2193 = vmul.f32 %v1169, %v1976
        %v2194 = vmul.f32 %v1170, %v1986
        %v2195 = vmul.f32 %v1171, %v1996
        %v2196 = vmul.f32 %v1172, %v2006
        %v2197 = vmul.f32 %v1173, %v2016
        %v2198 = vmul.f32 %v1174, %v2026
        %v2199 = vmul.f32 %v1175, %v2036
        %v2200 = vmul.f32 %v1176, %v2046
        %v2201 = vmul.f32 %v1177, %v2056
        %v2202 = vmul.f32 %v1178, %v2066
        %v2203 = vmul.f32 %v1179, %v2076
        %v2204 = vmul.f32 %v1180, %v2086
        %v2205 = vmul.f32 %v1181, %v2096
        %v2206 = vmul.f32 %v1182, %v2106
        %v2207 = vmul.f32 %v1183, %v2116
        %v2208 = vmul.f32 %v1184, %v2126
        %v2209 = vmul.f32 %v1185, %v2136
        %v2210 = vmul.f32 %v1186, %v2146
        %v2211 = vld [vmem:[%s4] sm:$0x1]
        %v2213 = vperm.slane %v2211, 0
        %v2215 = vmul.f32 %v2147, %v2213
        %v2216 = vmul.f32 %v2148, %v2213
        %v2217 = vmul.f32 %v2149, %v2213
        %v2218 = vmul.f32 %v2150, %v2213
        %v2219 = vmul.f32 %v2151, %v2213
        %v2220 = vmul.f32 %v2152, %v2213
        %v2221 = vmul.f32 %v2153, %v2213
        %v2222 = vmul.f32 %v2154, %v2213
        %v2223 = vmul.f32 %v2155, %v2213
        %v2224 = vmul.f32 %v2156, %v2213
        %v2225 = vmul.f32 %v2157, %v2213
        %v2226 = vmul.f32 %v2158, %v2213
        %v2227 = vmul.f32 %v2159, %v2213
        %v2228 = vmul.f32 %v2160, %v2213
        %v2229 = vmul.f32 %v2161, %v2213
        %v2230 = vmul.f32 %v2162, %v2213
        %v2231 = vmul.f32 %v2163, %v2213
        %v2232 = vmul.f32 %v2164, %v2213
        %v2233 = vmul.f32 %v2165, %v2213
        %v2234 = vmul.f32 %v2166, %v2213
        %v2235 = vmul.f32 %v2167, %v2213
        %v2236 = vmul.f32 %v2168, %v2213
        %v2237 = vmul.f32 %v2169, %v2213
        %v2238 = vmul.f32 %v2170, %v2213
        %v2239 = vmul.f32 %v2171, %v2213
        %v2240 = vmul.f32 %v2172, %v2213
        %v2241 = vmul.f32 %v2173, %v2213
        %v2242 = vmul.f32 %v2174, %v2213
        %v2243 = vmul.f32 %v2175, %v2213
        %v2244 = vmul.f32 %v2176, %v2213
        %v2245 = vmul.f32 %v2177, %v2213
        %v2246 = vmul.f32 %v2178, %v2213
        %v2247 = vmul.f32 %v2179, %v2213
        %v2248 = vmul.f32 %v2180, %v2213
        %v2249 = vmul.f32 %v2181, %v2213
        %v2250 = vmul.f32 %v2182, %v2213
        %v2251 = vmul.f32 %v2183, %v2213
        %v2252 = vmul.f32 %v2184, %v2213
        %v2253 = vmul.f32 %v2185, %v2213
        %v2254 = vmul.f32 %v2186, %v2213
        %v2255 = vmul.f32 %v2187, %v2213
        %v2256 = vmul.f32 %v2188, %v2213
        %v2257 = vmul.f32 %v2189, %v2213
        %v2258 = vmul.f32 %v2190, %v2213
        %v2259 = vmul.f32 %v2191, %v2213
        %v2260 = vmul.f32 %v2192, %v2213
        %v2261 = vmul.f32 %v2193, %v2213
        %v2262 = vmul.f32 %v2194, %v2213
        %v2263 = vmul.f32 %v2195, %v2213
        %v2264 = vmul.f32 %v2196, %v2213
        %v2265 = vmul.f32 %v2197, %v2213
        %v2266 = vmul.f32 %v2198, %v2213
        %v2267 = vmul.f32 %v2199, %v2213
        %v2268 = vmul.f32 %v2200, %v2213
        %v2269 = vmul.f32 %v2201, %v2213
        %v2270 = vmul.f32 %v2202, %v2213
        %v2271 = vmul.f32 %v2203, %v2213
        %v2272 = vmul.f32 %v2204, %v2213
        %v2273 = vmul.f32 %v2205, %v2213
        %v2274 = vmul.f32 %v2206, %v2213
        %v2275 = vmul.f32 %v2207, %v2213
        %v2276 = vmul.f32 %v2208, %v2213
        %v2277 = vmul.f32 %v2209, %v2213
        %v2278 = vmul.f32 %v2210, %v2213
        %v2279 = vld [vmem:[%s5] sm:$0x1]
        %v2281 = vperm.slane %v2279, 0
        %v2283 = vadd.f32 %v2215, %v2281
        %v2284 = vadd.f32 %v2216, %v2281
        %v2285 = vadd.f32 %v2217, %v2281
        %v2286 = vadd.f32 %v2218, %v2281
        %v2287 = vadd.f32 %v2219, %v2281
        %v2288 = vadd.f32 %v2220, %v2281
        %v2289 = vadd.f32 %v2221, %v2281
        %v2290 = vadd.f32 %v2222, %v2281
        %v2291 = vadd.f32 %v2223, %v2281
        %v2292 = vadd.f32 %v2224, %v2281
        %v2293 = vadd.f32 %v2225, %v2281
        %v2294 = vadd.f32 %v2226, %v2281
        %v2295 = vadd.f32 %v2227, %v2281
        %v2296 = vadd.f32 %v2228, %v2281
        %v2297 = vadd.f32 %v2229, %v2281
        %v2298 = vadd.f32 %v2230, %v2281
        %v2299 = vadd.f32 %v2231, %v2281
        %v2300 = vadd.f32 %v2232, %v2281
        %v2301 = vadd.f32 %v2233, %v2281
        %v2302 = vadd.f32 %v2234, %v2281
        %v2303 = vadd.f32 %v2235, %v2281
        %v2304 = vadd.f32 %v2236, %v2281
        %v2305 = vadd.f32 %v2237, %v2281
        %v2306 = vadd.f32 %v2238, %v2281
        %v2307 = vadd.f32 %v2239, %v2281
        %v2308 = vadd.f32 %v2240, %v2281
        %v2309 = vadd.f32 %v2241, %v2281
        %v2310 = vadd.f32 %v2242, %v2281
        %v2311 = vadd.f32 %v2243, %v2281
        %v2312 = vadd.f32 %v2244, %v2281
        %v2313 = vadd.f32 %v2245, %v2281
        %v2314 = vadd.f32 %v2246, %v2281
        %v2315 = vadd.f32 %v2247, %v2281
        %v2316 = vadd.f32 %v2248, %v2281
        %v2317 = vadd.f32 %v2249, %v2281
        %v2318 = vadd.f32 %v2250, %v2281
        %v2319 = vadd.f32 %v2251, %v2281
        %v2320 = vadd.f32 %v2252, %v2281
        %v2321 = vadd.f32 %v2253, %v2281
        %v2322 = vadd.f32 %v2254, %v2281
        %v2323 = vadd.f32 %v2255, %v2281
        %v2324 = vadd.f32 %v2256, %v2281
        %v2325 = vadd.f32 %v2257, %v2281
        %v2326 = vadd.f32 %v2258, %v2281
        %v2327 = vadd.f32 %v2259, %v2281
        %v2328 = vadd.f32 %v2260, %v2281
        %v2329 = vadd.f32 %v2261, %v2281
        %v2330 = vadd.f32 %v2262, %v2281
        %v2331 = vadd.f32 %v2263, %v2281
        %v2332 = vadd.f32 %v2264, %v2281
        %v2333 = vadd.f32 %v2265, %v2281
        %v2334 = vadd.f32 %v2266, %v2281
        %v2335 = vadd.f32 %v2267, %v2281
        %v2336 = vadd.f32 %v2268, %v2281
        %v2337 = vadd.f32 %v2269, %v2281
        %v2338 = vadd.f32 %v2270, %v2281
        %v2339 = vadd.f32 %v2271, %v2281
        %v2340 = vadd.f32 %v2272, %v2281
        %v2341 = vadd.f32 %v2273, %v2281
        %v2342 = vadd.f32 %v2274, %v2281
        %v2343 = vadd.f32 %v2275, %v2281
        %v2344 = vadd.f32 %v2276, %v2281
        %v2345 = vadd.f32 %v2277, %v2281
        %v2346 = vadd.f32 %v2278, %v2281
        %v2347 = vmul.f32 %v2283, 0.5
        %v2348 = vmul.f32 %v2284, 0.5
        %v2349 = vmul.f32 %v2285, 0.5
        %v2350 = vmul.f32 %v2286, 0.5
        %v2351 = vmul.f32 %v2287, 0.5
        %v2352 = vmul.f32 %v2288, 0.5
        %v2353 = vmul.f32 %v2289, 0.5
        %v2354 = vmul.f32 %v2290, 0.5
        %v2355 = vmul.f32 %v2291, 0.5
        %v2356 = vmul.f32 %v2292, 0.5
        %v2357 = vmul.f32 %v2293, 0.5
        %v2358 = vmul.f32 %v2294, 0.5
        %v2359 = vmul.f32 %v2295, 0.5
        %v2360 = vmul.f32 %v2296, 0.5
        %v2361 = vmul.f32 %v2297, 0.5
        %v2362 = vmul.f32 %v2298, 0.5
        %v2363 = vmul.f32 %v2299, 0.5
        %v2364 = vmul.f32 %v2300, 0.5
        %v2365 = vmul.f32 %v2301, 0.5
        %v2366 = vmul.f32 %v2302, 0.5
        %v2367 = vmul.f32 %v2303, 0.5
        %v2368 = vmul.f32 %v2304, 0.5
        %v2369 = vmul.f32 %v2305, 0.5
        %v2370 = vmul.f32 %v2306, 0.5
        %v2371 = vmul.f32 %v2307, 0.5
        %v2372 = vmul.f32 %v2308, 0.5
        %v2373 = vmul.f32 %v2309, 0.5
        %v2374 = vmul.f32 %v2310, 0.5
        %v2375 = vmul.f32 %v2311, 0.5
        %v2376 = vmul.f32 %v2312, 0.5
        %v2377 = vmul.f32 %v2313, 0.5
        %v2378 = vmul.f32 %v2314, 0.5
        %v2379 = vmul.f32 %v2315, 0.5
        %v2380 = vmul.f32 %v2316, 0.5
        %v2381 = vmul.f32 %v2317, 0.5
        %v2382 = vmul.f32 %v2318, 0.5
        %v2383 = vmul.f32 %v2319, 0.5
        %v2384 = vmul.f32 %v2320, 0.5
        %v2385 = vmul.f32 %v2321, 0.5
        %v2386 = vmul.f32 %v2322, 0.5
        %v2387 = vmul.f32 %v2323, 0.5
        %v2388 = vmul.f32 %v2324, 0.5
        %v2389 = vmul.f32 %v2325, 0.5
        %v2390 = vmul.f32 %v2326, 0.5
        %v2391 = vmul.f32 %v2327, 0.5
        %v2392 = vmul.f32 %v2328, 0.5
        %v2393 = vmul.f32 %v2329, 0.5
        %v2394 = vmul.f32 %v2330, 0.5
        %v2395 = vmul.f32 %v2331, 0.5
        %v2396 = vmul.f32 %v2332, 0.5
        %v2397 = vmul.f32 %v2333, 0.5
        %v2398 = vmul.f32 %v2334, 0.5
        %v2399 = vmul.f32 %v2335, 0.5
        %v2400 = vmul.f32 %v2336, 0.5
        %v2401 = vmul.f32 %v2337, 0.5
        %v2402 = vmul.f32 %v2338, 0.5
        %v2403 = vmul.f32 %v2339, 0.5
        %v2404 = vmul.f32 %v2340, 0.5
        %v2405 = vmul.f32 %v2341, 0.5
        %v2406 = vmul.f32 %v2342, 0.5
        %v2407 = vmul.f32 %v2343, 0.5
        %v2408 = vmul.f32 %v2344, 0.5
        %v2409 = vmul.f32 %v2345, 0.5
        %v2410 = vmul.f32 %v2346, 0.5
        %v2411 = vmul.f32 %v2283, 0.70710677
        %v2412 = vmul.f32 %v2284, 0.70710677
        %v2413 = vmul.f32 %v2285, 0.70710677
        %v2414 = vmul.f32 %v2286, 0.70710677
        %v2415 = vmul.f32 %v2287, 0.70710677
        %v2416 = vmul.f32 %v2288, 0.70710677
        %v2417 = vmul.f32 %v2289, 0.70710677
        %v2418 = vmul.f32 %v2290, 0.70710677
        %v2419 = vmul.f32 %v2291, 0.70710677
        %v2420 = vmul.f32 %v2292, 0.70710677
        %v2421 = vmul.f32 %v2293, 0.70710677
        %v2422 = vmul.f32 %v2294, 0.70710677
        %v2423 = vmul.f32 %v2295, 0.70710677
        %v2424 = vmul.f32 %v2296, 0.70710677
        %v2425 = vmul.f32 %v2297, 0.70710677
        %v2426 = vmul.f32 %v2298, 0.70710677
        %v2427 = vmul.f32 %v2299, 0.70710677
        %v2428 = vmul.f32 %v2300, 0.70710677
        %v2429 = vmul.f32 %v2301, 0.70710677
        %v2430 = vmul.f32 %v2302, 0.70710677
        %v2431 = vmul.f32 %v2303, 0.70710677
        %v2432 = vmul.f32 %v2304, 0.70710677
        %v2433 = vmul.f32 %v2305, 0.70710677
        %v2434 = vmul.f32 %v2306, 0.70710677
        %v2435 = vmul.f32 %v2307, 0.70710677
        %v2436 = vmul.f32 %v2308, 0.70710677
        %v2437 = vmul.f32 %v2309, 0.70710677
        %v2438 = vmul.f32 %v2310, 0.70710677
        %v2439 = vmul.f32 %v2311, 0.70710677
        %v2440 = vmul.f32 %v2312, 0.70710677
        %v2441 = vmul.f32 %v2313, 0.70710677
        %v2442 = vmul.f32 %v2314, 0.70710677
        %v2443 = vmul.f32 %v2315, 0.70710677
        %v2444 = vmul.f32 %v2316, 0.70710677
        %v2445 = vmul.f32 %v2317, 0.70710677
        %v2446 = vmul.f32 %v2318, 0.70710677
        %v2447 = vmul.f32 %v2319, 0.70710677
        %v2448 = vmul.f32 %v2320, 0.70710677
        %v2449 = vmul.f32 %v2321, 0.70710677
        %v2450 = vmul.f32 %v2322, 0.70710677
        %v2451 = vmul.f32 %v2323, 0.70710677
        %v2452 = vmul.f32 %v2324, 0.70710677
        %v2453 = vmul.f32 %v2325, 0.70710677
        %v2454 = vmul.f32 %v2326, 0.70710677
        %v2455 = vmul.f32 %v2327, 0.70710677
        %v2456 = vmul.f32 %v2328, 0.70710677
        %v2457 = vmul.f32 %v2329, 0.70710677
        %v2458 = vmul.f32 %v2330, 0.70710677
        %v2459 = vmul.f32 %v2331, 0.70710677
        %v2460 = vmul.f32 %v2332, 0.70710677
        %v2461 = vmul.f32 %v2333, 0.70710677
        %v2462 = vmul.f32 %v2334, 0.70710677
        %v2463 = vmul.f32 %v2335, 0.70710677
        %v2464 = vmul.f32 %v2336, 0.70710677
        %v2465 = vmul.f32 %v2337, 0.70710677
        %v2466 = vmul.f32 %v2338, 0.70710677
        %v2467 = vmul.f32 %v2339, 0.70710677
        %v2468 = vmul.f32 %v2340, 0.70710677
        %v2469 = vmul.f32 %v2341, 0.70710677
        %v2470 = vmul.f32 %v2342, 0.70710677
        %v2471 = vmul.f32 %v2343, 0.70710677
        %v2472 = vmul.f32 %v2344, 0.70710677
        %v2473 = vmul.f32 %v2345, 0.70710677
        %v2474 = vmul.f32 %v2346, 0.70710677
        %v2475 = vmul.f32 %v2411, %v2411
        %v2476 = vmin.f32 16.0, %v2475
        %v2477 = vmul.f32 %v2476, 2.1237322e-06
        %v2478 = vadd.f32 %v2477, 0.00028619796
        %v2479 = vmul.f32 %v2476, %v2478
        %v2480 = vadd.f32 %v2479, 0.0036580483
        %v2481 = vmul.f32 %v2476, %v2480
        %v2482 = vadd.f32 %v2481, 0.05243302
        %v2483 = vmul.f32 %v2476, %v2482
        %v2484 = vadd.f32 %v2483, 0.18741608
        %v2485 = vmul.f32 %v2476, %v2484
        %v2486 = vadd.f32 %v2485, 1.1283791
        %v2487 = vmul.f32 %v2411, %v2486
        %v2488 = vmul.f32 %v2476, 3.8918573e-05
        %v2489 = vadd.f32 %v2488, 0.001143296
        %v2490 = vmul.f32 %v2476, %v2489
        %v2491 = vadd.f32 %v2490, 0.014752088
        %v2492 = vmul.f32 %v2476, %v2491
        %v2493 = vadd.f32 %v2492, 0.112945676
        %v2494 = vmul.f32 %v2476, %v2493
        %v2495 = vadd.f32 %v2494, 0.4994258
        %v2496 = vmul.f32 %v2476, %v2495
        %v2497 = vadd.f32 %v2496, 1.0
        %v2498 = vrcp.pop %v2497
        %v2499 = vmul.f32 %v2497, %v2498
        %v2500 = vsub.f32 1.0, %v2499
        %v2501 = vmul.f32 %v2498, %v2500
        %v2502 = vadd.f32 %v2498, %v2501
        %vm2503 = vweird.f32 %v2497
        %vm2504 = vweird.f32 %v2498
        %vm2505 = vmor %vm2503, %vm2504
        %v2506 = vsel %vm2505, %v2498, %v2502
        %v2507 = vand.u32 2147483647, %v2497
        %vm2508 = vcmp.eq.f32.partialorder %v2507, 8.507059e+37
        %v2509 = vand.u32 %v2497, 2147483648
        %v2510 = vor.u32 1.1754944e-38, %v2509
        %v2511 = vsel %vm2508, %v2510, %v2506
        %v2512 = vmul.f32 %v2487, %v2511
        %v2513 = vmin.f32 %v2512, 1.0
        %v2514 = vmax.f32 %v2513, -1.0
        %v2515 = vmul.f32 %v2412, %v2412
        %v2516 = vmin.f32 16.0, %v2515
        %v2517 = vmul.f32 %v2516, 2.1237322e-06
        %v2518 = vadd.f32 %v2517, 0.00028619796
        %v2519 = vmul.f32 %v2516, %v2518
        %v2520 = vadd.f32 %v2519, 0.0036580483
        %v2521 = vmul.f32 %v2516, %v2520
        %v2522 = vadd.f32 %v2521, 0.05243302
        %v2523 = vmul.f32 %v2516, %v2522
        %v2524 = vadd.f32 %v2523, 0.18741608
        %v2525 = vmul.f32 %v2516, %v2524
        %v2526 = vadd.f32 %v2525, 1.1283791
        %v2527 = vmul.f32 %v2412, %v2526
        %v2528 = vmul.f32 %v2516, 3.8918573e-05
        %v2529 = vadd.f32 %v2528, 0.001143296
        %v2530 = vmul.f32 %v2516, %v2529
        %v2531 = vadd.f32 %v2530, 0.014752088
        %v2532 = vmul.f32 %v2516, %v2531
        %v2533 = vadd.f32 %v2532, 0.112945676
        %v2534 = vmul.f32 %v2516, %v2533
        %v2535 = vadd.f32 %v2534, 0.4994258
        %v2536 = vmul.f32 %v2516, %v2535
        %v2537 = vadd.f32 %v2536, 1.0
        %v2538 = vrcp.pop %v2537
        %v2539 = vmul.f32 %v2537, %v2538
        %v2540 = vsub.f32 1.0, %v2539
        %v2541 = vmul.f32 %v2538, %v2540
        %v2542 = vadd.f32 %v2538, %v2541
        %vm2543 = vweird.f32 %v2537
        %vm2544 = vweird.f32 %v2538
        %vm2545 = vmor %vm2543, %vm2544
        %v2546 = vsel %vm2545, %v2538, %v2542
        %v2547 = vand.u32 2147483647, %v2537
        %vm2548 = vcmp.eq.f32.partialorder %v2547, 8.507059e+37
        %v2549 = vand.u32 %v2537, 2147483648
        %v2550 = vor.u32 1.1754944e-38, %v2549
        %v2551 = vsel %vm2548, %v2550, %v2546
        %v2552 = vmul.f32 %v2527, %v2551
        %v2553 = vmin.f32 %v2552, 1.0
        %v2554 = vmax.f32 %v2553, -1.0
        %v2555 = vmul.f32 %v2413, %v2413
        %v2556 = vmin.f32 16.0, %v2555
        %v2557 = vmul.f32 %v2556, 2.1237322e-06
        %v2558 = vadd.f32 %v2557, 0.00028619796
        %v2559 = vmul.f32 %v2556, %v2558
        %v2560 = vadd.f32 %v2559, 0.0036580483
        %v2561 = vmul.f32 %v2556, %v2560
        %v2562 = vadd.f32 %v2561, 0.05243302
        %v2563 = vmul.f32 %v2556, %v2562
        %v2564 = vadd.f32 %v2563, 0.18741608
        %v2565 = vmul.f32 %v2556, %v2564
        %v2566 = vadd.f32 %v2565, 1.1283791
        %v2567 = vmul.f32 %v2413, %v2566
        %v2568 = vmul.f32 %v2556, 3.8918573e-05
        %v2569 = vadd.f32 %v2568, 0.001143296
        %v2570 = vmul.f32 %v2556, %v2569
        %v2571 = vadd.f32 %v2570, 0.014752088
        %v2572 = vmul.f32 %v2556, %v2571
        %v2573 = vadd.f32 %v2572, 0.112945676
        %v2574 = vmul.f32 %v2556, %v2573
        %v2575 = vadd.f32 %v2574, 0.4994258
        %v2576 = vmul.f32 %v2556, %v2575
        %v2577 = vadd.f32 %v2576, 1.0
        %v2578 = vrcp.pop %v2577
        %v2579 = vmul.f32 %v2577, %v2578
        %v2580 = vsub.f32 1.0, %v2579
        %v2581 = vmul.f32 %v2578, %v2580
        %v2582 = vadd.f32 %v2578, %v2581
        %vm2583 = vweird.f32 %v2577
        %vm2584 = vweird.f32 %v2578
        %vm2585 = vmor %vm2583, %vm2584
        %v2586 = vsel %vm2585, %v2578, %v2582
        %v2587 = vand.u32 2147483647, %v2577
        %vm2588 = vcmp.eq.f32.partialorder %v2587, 8.507059e+37
        %v2589 = vand.u32 %v2577, 2147483648
        %v2590 = vor.u32 1.1754944e-38, %v2589
        %v2591 = vsel %vm2588, %v2590, %v2586
        %v2592 = vmul.f32 %v2567, %v2591
        %v2593 = vmin.f32 %v2592, 1.0
        %v2594 = vmax.f32 %v2593, -1.0
        %v2595 = vmul.f32 %v2414, %v2414
        %v2596 = vmin.f32 16.0, %v2595
        %v2597 = vmul.f32 %v2596, 2.1237322e-06
        %v2598 = vadd.f32 %v2597, 0.00028619796
        %v2599 = vmul.f32 %v2596, %v2598
        %v2600 = vadd.f32 %v2599, 0.0036580483
        %v2601 = vmul.f32 %v2596, %v2600
        %v2602 = vadd.f32 %v2601, 0.05243302
        %v2603 = vmul.f32 %v2596, %v2602
        %v2604 = vadd.f32 %v2603, 0.18741608
        %v2605 = vmul.f32 %v2596, %v2604
        %v2606 = vadd.f32 %v2605, 1.1283791
        %v2607 = vmul.f32 %v2414, %v2606
        %v2608 = vmul.f32 %v2596, 3.8918573e-05
        %v2609 = vadd.f32 %v2608, 0.001143296
        %v2610 = vmul.f32 %v2596, %v2609
        %v2611 = vadd.f32 %v2610, 0.014752088
        %v2612 = vmul.f32 %v2596, %v2611
        %v2613 = vadd.f32 %v2612, 0.112945676
        %v2614 = vmul.f32 %v2596, %v2613
        %v2615 = vadd.f32 %v2614, 0.4994258
        %v2616 = vmul.f32 %v2596, %v2615
        %v2617 = vadd.f32 %v2616, 1.0
        %v2618 = vrcp.pop %v2617
        %v2619 = vmul.f32 %v2617, %v2618
        %v2620 = vsub.f32 1.0, %v2619
        %v2621 = vmul.f32 %v2618, %v2620
        %v2622 = vadd.f32 %v2618, %v2621
        %vm2623 = vweird.f32 %v2617
        %vm2624 = vweird.f32 %v2618
        %vm2625 = vmor %vm2623, %vm2624
        %v2626 = vsel %vm2625, %v2618, %v2622
        %v2627 = vand.u32 2147483647, %v2617
        %vm2628 = vcmp.eq.f32.partialorder %v2627, 8.507059e+37
        %v2629 = vand.u32 %v2617, 2147483648
        %v2630 = vor.u32 1.1754944e-38, %v2629
        %v2631 = vsel %vm2628, %v2630, %v2626
        %v2632 = vmul.f32 %v2607, %v2631
        %v2633 = vmin.f32 %v2632, 1.0
        %v2634 = vmax.f32 %v2633, -1.0
        %v2635 = vmul.f32 %v2415, %v2415
        %v2636 = vmin.f32 16.0, %v2635
        %v2637 = vmul.f32 %v2636, 2.1237322e-06
        %v2638 = vadd.f32 %v2637, 0.00028619796
        %v2639 = vmul.f32 %v2636, %v2638
        %v2640 = vadd.f32 %v2639, 0.0036580483
        %v2641 = vmul.f32 %v2636, %v2640
        %v2642 = vadd.f32 %v2641, 0.05243302
        %v2643 = vmul.f32 %v2636, %v2642
        %v2644 = vadd.f32 %v2643, 0.18741608
        %v2645 = vmul.f32 %v2636, %v2644
        %v2646 = vadd.f32 %v2645, 1.1283791
        %v2647 = vmul.f32 %v2415, %v2646
        %v2648 = vmul.f32 %v2636, 3.8918573e-05
        %v2649 = vadd.f32 %v2648, 0.001143296
        %v2650 = vmul.f32 %v2636, %v2649
        %v2651 = vadd.f32 %v2650, 0.014752088
        %v2652 = vmul.f32 %v2636, %v2651
        %v2653 = vadd.f32 %v2652, 0.112945676
        %v2654 = vmul.f32 %v2636, %v2653
        %v2655 = vadd.f32 %v2654, 0.4994258
        %v2656 = vmul.f32 %v2636, %v2655
        %v2657 = vadd.f32 %v2656, 1.0
        %v2658 = vrcp.pop %v2657
        %v2659 = vmul.f32 %v2657, %v2658
        %v2660 = vsub.f32 1.0, %v2659
        %v2661 = vmul.f32 %v2658, %v2660
        %v2662 = vadd.f32 %v2658, %v2661
        %vm2663 = vweird.f32 %v2657
        %vm2664 = vweird.f32 %v2658
        %vm2665 = vmor %vm2663, %vm2664
        %v2666 = vsel %vm2665, %v2658, %v2662
        %v2667 = vand.u32 2147483647, %v2657
        %vm2668 = vcmp.eq.f32.partialorder %v2667, 8.507059e+37
        %v2669 = vand.u32 %v2657, 2147483648
        %v2670 = vor.u32 1.1754944e-38, %v2669
        %v2671 = vsel %vm2668, %v2670, %v2666
        %v2672 = vmul.f32 %v2647, %v2671
        %v2673 = vmin.f32 %v2672, 1.0
        %v2674 = vmax.f32 %v2673, -1.0
        %v2675 = vmul.f32 %v2416, %v2416
        %v2676 = vmin.f32 16.0, %v2675
        %v2677 = vmul.f32 %v2676, 2.1237322e-06
        %v2678 = vadd.f32 %v2677, 0.00028619796
        %v2679 = vmul.f32 %v2676, %v2678
        %v2680 = vadd.f32 %v2679, 0.0036580483
        %v2681 = vmul.f32 %v2676, %v2680
        %v2682 = vadd.f32 %v2681, 0.05243302
        %v2683 = vmul.f32 %v2676, %v2682
        %v2684 = vadd.f32 %v2683, 0.18741608
        %v2685 = vmul.f32 %v2676, %v2684
        %v2686 = vadd.f32 %v2685, 1.1283791
        %v2687 = vmul.f32 %v2416, %v2686
        %v2688 = vmul.f32 %v2676, 3.8918573e-05
        %v2689 = vadd.f32 %v2688, 0.001143296
        %v2690 = vmul.f32 %v2676, %v2689
        %v2691 = vadd.f32 %v2690, 0.014752088
        %v2692 = vmul.f32 %v2676, %v2691
        %v2693 = vadd.f32 %v2692, 0.112945676
        %v2694 = vmul.f32 %v2676, %v2693
        %v2695 = vadd.f32 %v2694, 0.4994258
        %v2696 = vmul.f32 %v2676, %v2695
        %v2697 = vadd.f32 %v2696, 1.0
        %v2698 = vrcp.pop %v2697
        %v2699 = vmul.f32 %v2697, %v2698
        %v2700 = vsub.f32 1.0, %v2699
        %v2701 = vmul.f32 %v2698, %v2700
        %v2702 = vadd.f32 %v2698, %v2701
        %vm2703 = vweird.f32 %v2697
        %vm2704 = vweird.f32 %v2698
        %vm2705 = vmor %vm2703, %vm2704
        %v2706 = vsel %vm2705, %v2698, %v2702
        %v2707 = vand.u32 2147483647, %v2697
        %vm2708 = vcmp.eq.f32.partialorder %v2707, 8.507059e+37
        %v2709 = vand.u32 %v2697, 2147483648
        %v2710 = vor.u32 1.1754944e-38, %v2709
        %v2711 = vsel %vm2708, %v2710, %v2706
        %v2712 = vmul.f32 %v2687, %v2711
        %v2713 = vmin.f32 %v2712, 1.0
        %v2714 = vmax.f32 %v2713, -1.0
        %v2715 = vmul.f32 %v2417, %v2417
        %v2716 = vmin.f32 16.0, %v2715
        %v2717 = vmul.f32 %v2716, 2.1237322e-06
        %v2718 = vadd.f32 %v2717, 0.00028619796
        %v2719 = vmul.f32 %v2716, %v2718
        %v2720 = vadd.f32 %v2719, 0.0036580483
        %v2721 = vmul.f32 %v2716, %v2720
        %v2722 = vadd.f32 %v2721, 0.05243302
        %v2723 = vmul.f32 %v2716, %v2722
        %v2724 = vadd.f32 %v2723, 0.18741608
        %v2725 = vmul.f32 %v2716, %v2724
        %v2726 = vadd.f32 %v2725, 1.1283791
        %v2727 = vmul.f32 %v2417, %v2726
        %v2728 = vmul.f32 %v2716, 3.8918573e-05
        %v2729 = vadd.f32 %v2728, 0.001143296
        %v2730 = vmul.f32 %v2716, %v2729
        %v2731 = vadd.f32 %v2730, 0.014752088
        %v2732 = vmul.f32 %v2716, %v2731
        %v2733 = vadd.f32 %v2732, 0.112945676
        %v2734 = vmul.f32 %v2716, %v2733
        %v2735 = vadd.f32 %v2734, 0.4994258
        %v2736 = vmul.f32 %v2716, %v2735
        %v2737 = vadd.f32 %v2736, 1.0
        %v2738 = vrcp.pop %v2737
        %v2739 = vmul.f32 %v2737, %v2738
        %v2740 = vsub.f32 1.0, %v2739
        %v2741 = vmul.f32 %v2738, %v2740
        %v2742 = vadd.f32 %v2738, %v2741
        %vm2743 = vweird.f32 %v2737
        %vm2744 = vweird.f32 %v2738
        %vm2745 = vmor %vm2743, %vm2744
        %v2746 = vsel %vm2745, %v2738, %v2742
        %v2747 = vand.u32 2147483647, %v2737
        %vm2748 = vcmp.eq.f32.partialorder %v2747, 8.507059e+37
        %v2749 = vand.u32 %v2737, 2147483648
        %v2750 = vor.u32 1.1754944e-38, %v2749
        %v2751 = vsel %vm2748, %v2750, %v2746
        %v2752 = vmul.f32 %v2727, %v2751
        %v2753 = vmin.f32 %v2752, 1.0
        %v2754 = vmax.f32 %v2753, -1.0
        %v2755 = vmul.f32 %v2418, %v2418
        %v2756 = vmin.f32 16.0, %v2755
        %v2757 = vmul.f32 %v2756, 2.1237322e-06
        %v2758 = vadd.f32 %v2757, 0.00028619796
        %v2759 = vmul.f32 %v2756, %v2758
        %v2760 = vadd.f32 %v2759, 0.0036580483
        %v2761 = vmul.f32 %v2756, %v2760
        %v2762 = vadd.f32 %v2761, 0.05243302
        %v2763 = vmul.f32 %v2756, %v2762
        %v2764 = vadd.f32 %v2763, 0.18741608
        %v2765 = vmul.f32 %v2756, %v2764
        %v2766 = vadd.f32 %v2765, 1.1283791
        %v2767 = vmul.f32 %v2418, %v2766
        %v2768 = vmul.f32 %v2756, 3.8918573e-05
        %v2769 = vadd.f32 %v2768, 0.001143296
        %v2770 = vmul.f32 %v2756, %v2769
        %v2771 = vadd.f32 %v2770, 0.014752088
        %v2772 = vmul.f32 %v2756, %v2771
        %v2773 = vadd.f32 %v2772, 0.112945676
        %v2774 = vmul.f32 %v2756, %v2773
        %v2775 = vadd.f32 %v2774, 0.4994258
        %v2776 = vmul.f32 %v2756, %v2775
        %v2777 = vadd.f32 %v2776, 1.0
        %v2778 = vrcp.pop %v2777
        %v2779 = vmul.f32 %v2777, %v2778
        %v2780 = vsub.f32 1.0, %v2779
        %v2781 = vmul.f32 %v2778, %v2780
        %v2782 = vadd.f32 %v2778, %v2781
        %vm2783 = vweird.f32 %v2777
        %vm2784 = vweird.f32 %v2778
        %vm2785 = vmor %vm2783, %vm2784
        %v2786 = vsel %vm2785, %v2778, %v2782
        %v2787 = vand.u32 2147483647, %v2777
        %vm2788 = vcmp.eq.f32.partialorder %v2787, 8.507059e+37
        %v2789 = vand.u32 %v2777, 2147483648
        %v2790 = vor.u32 1.1754944e-38, %v2789
        %v2791 = vsel %vm2788, %v2790, %v2786
        %v2792 = vmul.f32 %v2767, %v2791
        %v2793 = vmin.f32 %v2792, 1.0
        %v2794 = vmax.f32 %v2793, -1.0
        %v2795 = vmul.f32 %v2419, %v2419
        %v2796 = vmin.f32 16.0, %v2795
        %v2797 = vmul.f32 %v2796, 2.1237322e-06
        %v2798 = vadd.f32 %v2797, 0.00028619796
        %v2799 = vmul.f32 %v2796, %v2798
        %v2800 = vadd.f32 %v2799, 0.0036580483
        %v2801 = vmul.f32 %v2796, %v2800
        %v2802 = vadd.f32 %v2801, 0.05243302
        %v2803 = vmul.f32 %v2796, %v2802
        %v2804 = vadd.f32 %v2803, 0.18741608
        %v2805 = vmul.f32 %v2796, %v2804
        %v2806 = vadd.f32 %v2805, 1.1283791
        %v2807 = vmul.f32 %v2419, %v2806
        %v2808 = vmul.f32 %v2796, 3.8918573e-05
        %v2809 = vadd.f32 %v2808, 0.001143296
        %v2810 = vmul.f32 %v2796, %v2809
        %v2811 = vadd.f32 %v2810, 0.014752088
        %v2812 = vmul.f32 %v2796, %v2811
        %v2813 = vadd.f32 %v2812, 0.112945676
        %v2814 = vmul.f32 %v2796, %v2813
        %v2815 = vadd.f32 %v2814, 0.4994258
        %v2816 = vmul.f32 %v2796, %v2815
        %v2817 = vadd.f32 %v2816, 1.0
        %v2818 = vrcp.pop %v2817
        %v2819 = vmul.f32 %v2817, %v2818
        %v2820 = vsub.f32 1.0, %v2819
        %v2821 = vmul.f32 %v2818, %v2820
        %v2822 = vadd.f32 %v2818, %v2821
        %vm2823 = vweird.f32 %v2817
        %vm2824 = vweird.f32 %v2818
        %vm2825 = vmor %vm2823, %vm2824
        %v2826 = vsel %vm2825, %v2818, %v2822
        %v2827 = vand.u32 2147483647, %v2817
        %vm2828 = vcmp.eq.f32.partialorder %v2827, 8.507059e+37
        %v2829 = vand.u32 %v2817, 2147483648
        %v2830 = vor.u32 1.1754944e-38, %v2829
        %v2831 = vsel %vm2828, %v2830, %v2826
        %v2832 = vmul.f32 %v2807, %v2831
        %v2833 = vmin.f32 %v2832, 1.0
        %v2834 = vmax.f32 %v2833, -1.0
        %v2835 = vmul.f32 %v2420, %v2420
        %v2836 = vmin.f32 16.0, %v2835
        %v2837 = vmul.f32 %v2836, 2.1237322e-06
        %v2838 = vadd.f32 %v2837, 0.00028619796
        %v2839 = vmul.f32 %v2836, %v2838
        %v2840 = vadd.f32 %v2839, 0.0036580483
        %v2841 = vmul.f32 %v2836, %v2840
        %v2842 = vadd.f32 %v2841, 0.05243302
        %v2843 = vmul.f32 %v2836, %v2842
        %v2844 = vadd.f32 %v2843, 0.18741608
        %v2845 = vmul.f32 %v2836, %v2844
        %v2846 = vadd.f32 %v2845, 1.1283791
        %v2847 = vmul.f32 %v2420, %v2846
        %v2848 = vmul.f32 %v2836, 3.8918573e-05
        %v2849 = vadd.f32 %v2848, 0.001143296
        %v2850 = vmul.f32 %v2836, %v2849
        %v2851 = vadd.f32 %v2850, 0.014752088
        %v2852 = vmul.f32 %v2836, %v2851
        %v2853 = vadd.f32 %v2852, 0.112945676
        %v2854 = vmul.f32 %v2836, %v2853
        %v2855 = vadd.f32 %v2854, 0.4994258
        %v2856 = vmul.f32 %v2836, %v2855
        %v2857 = vadd.f32 %v2856, 1.0
        %v2858 = vrcp.pop %v2857
        %v2859 = vmul.f32 %v2857, %v2858
        %v2860 = vsub.f32 1.0, %v2859
        %v2861 = vmul.f32 %v2858, %v2860
        %v2862 = vadd.f32 %v2858, %v2861
        %vm2863 = vweird.f32 %v2857
        %vm2864 = vweird.f32 %v2858
        %vm2865 = vmor %vm2863, %vm2864
        %v2866 = vsel %vm2865, %v2858, %v2862
        %v2867 = vand.u32 2147483647, %v2857
        %vm2868 = vcmp.eq.f32.partialorder %v2867, 8.507059e+37
        %v2869 = vand.u32 %v2857, 2147483648
        %v2870 = vor.u32 1.1754944e-38, %v2869
        %v2871 = vsel %vm2868, %v2870, %v2866
        %v2872 = vmul.f32 %v2847, %v2871
        %v2873 = vmin.f32 %v2872, 1.0
        %v2874 = vmax.f32 %v2873, -1.0
        %v2875 = vmul.f32 %v2421, %v2421
        %v2876 = vmin.f32 16.0, %v2875
        %v2877 = vmul.f32 %v2876, 2.1237322e-06
        %v2878 = vadd.f32 %v2877, 0.00028619796
        %v2879 = vmul.f32 %v2876, %v2878
        %v2880 = vadd.f32 %v2879, 0.0036580483
        %v2881 = vmul.f32 %v2876, %v2880
        %v2882 = vadd.f32 %v2881, 0.05243302
        %v2883 = vmul.f32 %v2876, %v2882
        %v2884 = vadd.f32 %v2883, 0.18741608
        %v2885 = vmul.f32 %v2876, %v2884
        %v2886 = vadd.f32 %v2885, 1.1283791
        %v2887 = vmul.f32 %v2421, %v2886
        %v2888 = vmul.f32 %v2876, 3.8918573e-05
        %v2889 = vadd.f32 %v2888, 0.001143296
        %v2890 = vmul.f32 %v2876, %v2889
        %v2891 = vadd.f32 %v2890, 0.014752088
        %v2892 = vmul.f32 %v2876, %v2891
        %v2893 = vadd.f32 %v2892, 0.112945676
        %v2894 = vmul.f32 %v2876, %v2893
        %v2895 = vadd.f32 %v2894, 0.4994258
        %v2896 = vmul.f32 %v2876, %v2895
        %v2897 = vadd.f32 %v2896, 1.0
        %v2898 = vrcp.pop %v2897
        %v2899 = vmul.f32 %v2897, %v2898
        %v2900 = vsub.f32 1.0, %v2899
        %v2901 = vmul.f32 %v2898, %v2900
        %v2902 = vadd.f32 %v2898, %v2901
        %vm2903 = vweird.f32 %v2897
        %vm2904 = vweird.f32 %v2898
        %vm2905 = vmor %vm2903, %vm2904
        %v2906 = vsel %vm2905, %v2898, %v2902
        %v2907 = vand.u32 2147483647, %v2897
        %vm2908 = vcmp.eq.f32.partialorder %v2907, 8.507059e+37
        %v2909 = vand.u32 %v2897, 2147483648
        %v2910 = vor.u32 1.1754944e-38, %v2909
        %v2911 = vsel %vm2908, %v2910, %v2906
        %v2912 = vmul.f32 %v2887, %v2911
        %v2913 = vmin.f32 %v2912, 1.0
        %v2914 = vmax.f32 %v2913, -1.0
        %v2915 = vmul.f32 %v2422, %v2422
        %v2916 = vmin.f32 16.0, %v2915
        %v2917 = vmul.f32 %v2916, 2.1237322e-06
        %v2918 = vadd.f32 %v2917, 0.00028619796
        %v2919 = vmul.f32 %v2916, %v2918
        %v2920 = vadd.f32 %v2919, 0.0036580483
        %v2921 = vmul.f32 %v2916, %v2920
        %v2922 = vadd.f32 %v2921, 0.05243302
        %v2923 = vmul.f32 %v2916, %v2922
        %v2924 = vadd.f32 %v2923, 0.18741608
        %v2925 = vmul.f32 %v2916, %v2924
        %v2926 = vadd.f32 %v2925, 1.1283791
        %v2927 = vmul.f32 %v2422, %v2926
        %v2928 = vmul.f32 %v2916, 3.8918573e-05
        %v2929 = vadd.f32 %v2928, 0.001143296
        %v2930 = vmul.f32 %v2916, %v2929
        %v2931 = vadd.f32 %v2930, 0.014752088
        %v2932 = vmul.f32 %v2916, %v2931
        %v2933 = vadd.f32 %v2932, 0.112945676
        %v2934 = vmul.f32 %v2916, %v2933
        %v2935 = vadd.f32 %v2934, 0.4994258
        %v2936 = vmul.f32 %v2916, %v2935
        %v2937 = vadd.f32 %v2936, 1.0
        %v2938 = vrcp.pop %v2937
        %v2939 = vmul.f32 %v2937, %v2938
        %v2940 = vsub.f32 1.0, %v2939
        %v2941 = vmul.f32 %v2938, %v2940
        %v2942 = vadd.f32 %v2938, %v2941
        %vm2943 = vweird.f32 %v2937
        %vm2944 = vweird.f32 %v2938
        %vm2945 = vmor %vm2943, %vm2944
        %v2946 = vsel %vm2945, %v2938, %v2942
        %v2947 = vand.u32 2147483647, %v2937
        %vm2948 = vcmp.eq.f32.partialorder %v2947, 8.507059e+37
        %v2949 = vand.u32 %v2937, 2147483648
        %v2950 = vor.u32 1.1754944e-38, %v2949
        %v2951 = vsel %vm2948, %v2950, %v2946
        %v2952 = vmul.f32 %v2927, %v2951
        %v2953 = vmin.f32 %v2952, 1.0
        %v2954 = vmax.f32 %v2953, -1.0
        %v2955 = vmul.f32 %v2423, %v2423
        %v2956 = vmin.f32 16.0, %v2955
        %v2957 = vmul.f32 %v2956, 2.1237322e-06
        %v2958 = vadd.f32 %v2957, 0.00028619796
        %v2959 = vmul.f32 %v2956, %v2958
        %v2960 = vadd.f32 %v2959, 0.0036580483
        %v2961 = vmul.f32 %v2956, %v2960
        %v2962 = vadd.f32 %v2961, 0.05243302
        %v2963 = vmul.f32 %v2956, %v2962
        %v2964 = vadd.f32 %v2963, 0.18741608
        %v2965 = vmul.f32 %v2956, %v2964
        %v2966 = vadd.f32 %v2965, 1.1283791
        %v2967 = vmul.f32 %v2423, %v2966
        %v2968 = vmul.f32 %v2956, 3.8918573e-05
        %v2969 = vadd.f32 %v2968, 0.001143296
        %v2970 = vmul.f32 %v2956, %v2969
        %v2971 = vadd.f32 %v2970, 0.014752088
        %v2972 = vmul.f32 %v2956, %v2971
        %v2973 = vadd.f32 %v2972, 0.112945676
        %v2974 = vmul.f32 %v2956, %v2973
        %v2975 = vadd.f32 %v2974, 0.4994258
        %v2976 = vmul.f32 %v2956, %v2975
        %v2977 = vadd.f32 %v2976, 1.0
        %v2978 = vrcp.pop %v2977
        %v2979 = vmul.f32 %v2977, %v2978
        %v2980 = vsub.f32 1.0, %v2979
        %v2981 = vmul.f32 %v2978, %v2980
        %v2982 = vadd.f32 %v2978, %v2981
        %vm2983 = vweird.f32 %v2977
        %vm2984 = vweird.f32 %v2978
        %vm2985 = vmor %vm2983, %vm2984
        %v2986 = vsel %vm2985, %v2978, %v2982
        %v2987 = vand.u32 2147483647, %v2977
        %vm2988 = vcmp.eq.f32.partialorder %v2987, 8.507059e+37
        %v2989 = vand.u32 %v2977, 2147483648
        %v2990 = vor.u32 1.1754944e-38, %v2989
        %v2991 = vsel %vm2988, %v2990, %v2986
        %v2992 = vmul.f32 %v2967, %v2991
        %v2993 = vmin.f32 %v2992, 1.0
        %v2994 = vmax.f32 %v2993, -1.0
        %v2995 = vmul.f32 %v2424, %v2424
        %v2996 = vmin.f32 16.0, %v2995
        %v2997 = vmul.f32 %v2996, 2.1237322e-06
        %v2998 = vadd.f32 %v2997, 0.00028619796
        %v2999 = vmul.f32 %v2996, %v2998
        %v3000 = vadd.f32 %v2999, 0.0036580483
        %v3001 = vmul.f32 %v2996, %v3000
        %v3002 = vadd.f32 %v3001, 0.05243302
        %v3003 = vmul.f32 %v2996, %v3002
        %v3004 = vadd.f32 %v3003, 0.18741608
        %v3005 = vmul.f32 %v2996, %v3004
        %v3006 = vadd.f32 %v3005, 1.1283791
        %v3007 = vmul.f32 %v2424, %v3006
        %v3008 = vmul.f32 %v2996, 3.8918573e-05
        %v3009 = vadd.f32 %v3008, 0.001143296
        %v3010 = vmul.f32 %v2996, %v3009
        %v3011 = vadd.f32 %v3010, 0.014752088
        %v3012 = vmul.f32 %v2996, %v3011
        %v3013 = vadd.f32 %v3012, 0.112945676
        %v3014 = vmul.f32 %v2996, %v3013
        %v3015 = vadd.f32 %v3014, 0.4994258
        %v3016 = vmul.f32 %v2996, %v3015
        %v3017 = vadd.f32 %v3016, 1.0
        %v3018 = vrcp.pop %v3017
        %v3019 = vmul.f32 %v3017, %v3018
        %v3020 = vsub.f32 1.0, %v3019
        %v3021 = vmul.f32 %v3018, %v3020
        %v3022 = vadd.f32 %v3018, %v3021
        %vm3023 = vweird.f32 %v3017
        %vm3024 = vweird.f32 %v3018
        %vm3025 = vmor %vm3023, %vm3024
        %v3026 = vsel %vm3025, %v3018, %v3022
        %v3027 = vand.u32 2147483647, %v3017
        %vm3028 = vcmp.eq.f32.partialorder %v3027, 8.507059e+37
        %v3029 = vand.u32 %v3017, 2147483648
        %v3030 = vor.u32 1.1754944e-38, %v3029
        %v3031 = vsel %vm3028, %v3030, %v3026
        %v3032 = vmul.f32 %v3007, %v3031
        %v3033 = vmin.f32 %v3032, 1.0
        %v3034 = vmax.f32 %v3033, -1.0
        %v3035 = vmul.f32 %v2425, %v2425
        %v3036 = vmin.f32 16.0, %v3035
        %v3037 = vmul.f32 %v3036, 2.1237322e-06
        %v3038 = vadd.f32 %v3037, 0.00028619796
        %v3039 = vmul.f32 %v3036, %v3038
        %v3040 = vadd.f32 %v3039, 0.0036580483
        %v3041 = vmul.f32 %v3036, %v3040
        %v3042 = vadd.f32 %v3041, 0.05243302
        %v3043 = vmul.f32 %v3036, %v3042
        %v3044 = vadd.f32 %v3043, 0.18741608
        %v3045 = vmul.f32 %v3036, %v3044
        %v3046 = vadd.f32 %v3045, 1.1283791
        %v3047 = vmul.f32 %v2425, %v3046
        %v3048 = vmul.f32 %v3036, 3.8918573e-05
        %v3049 = vadd.f32 %v3048, 0.001143296
        %v3050 = vmul.f32 %v3036, %v3049
        %v3051 = vadd.f32 %v3050, 0.014752088
        %v3052 = vmul.f32 %v3036, %v3051
        %v3053 = vadd.f32 %v3052, 0.112945676
        %v3054 = vmul.f32 %v3036, %v3053
        %v3055 = vadd.f32 %v3054, 0.4994258
        %v3056 = vmul.f32 %v3036, %v3055
        %v3057 = vadd.f32 %v3056, 1.0
        %v3058 = vrcp.pop %v3057
        %v3059 = vmul.f32 %v3057, %v3058
        %v3060 = vsub.f32 1.0, %v3059
        %v3061 = vmul.f32 %v3058, %v3060
        %v3062 = vadd.f32 %v3058, %v3061
        %vm3063 = vweird.f32 %v3057
        %vm3064 = vweird.f32 %v3058
        %vm3065 = vmor %vm3063, %vm3064
        %v3066 = vsel %vm3065, %v3058, %v3062
        %v3067 = vand.u32 2147483647, %v3057
        %vm3068 = vcmp.eq.f32.partialorder %v3067, 8.507059e+37
        %v3069 = vand.u32 %v3057, 2147483648
        %v3070 = vor.u32 1.1754944e-38, %v3069
        %v3071 = vsel %vm3068, %v3070, %v3066
        %v3072 = vmul.f32 %v3047, %v3071
        %v3073 = vmin.f32 %v3072, 1.0
        %v3074 = vmax.f32 %v3073, -1.0
        %v3075 = vmul.f32 %v2426, %v2426
        %v3076 = vmin.f32 16.0, %v3075
        %v3077 = vmul.f32 %v3076, 2.1237322e-06
        %v3078 = vadd.f32 %v3077, 0.00028619796
        %v3079 = vmul.f32 %v3076, %v3078
        %v3080 = vadd.f32 %v3079, 0.0036580483
        %v3081 = vmul.f32 %v3076, %v3080
        %v3082 = vadd.f32 %v3081, 0.05243302
        %v3083 = vmul.f32 %v3076, %v3082
        %v3084 = vadd.f32 %v3083, 0.18741608
        %v3085 = vmul.f32 %v3076, %v3084
        %v3086 = vadd.f32 %v3085, 1.1283791
        %v3087 = vmul.f32 %v2426, %v3086
        %v3088 = vmul.f32 %v3076, 3.8918573e-05
        %v3089 = vadd.f32 %v3088, 0.001143296
        %v3090 = vmul.f32 %v3076, %v3089
        %v3091 = vadd.f32 %v3090, 0.014752088
        %v3092 = vmul.f32 %v3076, %v3091
        %v3093 = vadd.f32 %v3092, 0.112945676
        %v3094 = vmul.f32 %v3076, %v3093
        %v3095 = vadd.f32 %v3094, 0.4994258
        %v3096 = vmul.f32 %v3076, %v3095
        %v3097 = vadd.f32 %v3096, 1.0
        %v3098 = vrcp.pop %v3097
        %v3099 = vmul.f32 %v3097, %v3098
        %v3100 = vsub.f32 1.0, %v3099
        %v3101 = vmul.f32 %v3098, %v3100
        %v3102 = vadd.f32 %v3098, %v3101
        %vm3103 = vweird.f32 %v3097
        %vm3104 = vweird.f32 %v3098
        %vm3105 = vmor %vm3103, %vm3104
        %v3106 = vsel %vm3105, %v3098, %v3102
        %v3107 = vand.u32 2147483647, %v3097
        %vm3108 = vcmp.eq.f32.partialorder %v3107, 8.507059e+37
        %v3109 = vand.u32 %v3097, 2147483648
        %v3110 = vor.u32 1.1754944e-38, %v3109
        %v3111 = vsel %vm3108, %v3110, %v3106
        %v3112 = vmul.f32 %v3087, %v3111
        %v3113 = vmin.f32 %v3112, 1.0
        %v3114 = vmax.f32 %v3113, -1.0
        %v3115 = vmul.f32 %v2427, %v2427
        %v3116 = vmin.f32 16.0, %v3115
        %v3117 = vmul.f32 %v3116, 2.1237322e-06
        %v3118 = vadd.f32 %v3117, 0.00028619796
        %v3119 = vmul.f32 %v3116, %v3118
        %v3120 = vadd.f32 %v3119, 0.0036580483
        %v3121 = vmul.f32 %v3116, %v3120
        %v3122 = vadd.f32 %v3121, 0.05243302
        %v3123 = vmul.f32 %v3116, %v3122
        %v3124 = vadd.f32 %v3123, 0.18741608
        %v3125 = vmul.f32 %v3116, %v3124
        %v3126 = vadd.f32 %v3125, 1.1283791
        %v3127 = vmul.f32 %v2427, %v3126
        %v3128 = vmul.f32 %v3116, 3.8918573e-05
        %v3129 = vadd.f32 %v3128, 0.001143296
        %v3130 = vmul.f32 %v3116, %v3129
        %v3131 = vadd.f32 %v3130, 0.014752088
        %v3132 = vmul.f32 %v3116, %v3131
        %v3133 = vadd.f32 %v3132, 0.112945676
        %v3134 = vmul.f32 %v3116, %v3133
        %v3135 = vadd.f32 %v3134, 0.4994258
        %v3136 = vmul.f32 %v3116, %v3135
        %v3137 = vadd.f32 %v3136, 1.0
        %v3138 = vrcp.pop %v3137
        %v3139 = vmul.f32 %v3137, %v3138
        %v3140 = vsub.f32 1.0, %v3139
        %v3141 = vmul.f32 %v3138, %v3140
        %v3142 = vadd.f32 %v3138, %v3141
        %vm3143 = vweird.f32 %v3137
        %vm3144 = vweird.f32 %v3138
        %vm3145 = vmor %vm3143, %vm3144
        %v3146 = vsel %vm3145, %v3138, %v3142
        %v3147 = vand.u32 2147483647, %v3137
        %vm3148 = vcmp.eq.f32.partialorder %v3147, 8.507059e+37
        %v3149 = vand.u32 %v3137, 2147483648
        %v3150 = vor.u32 1.1754944e-38, %v3149
        %v3151 = vsel %vm3148, %v3150, %v3146
        %v3152 = vmul.f32 %v3127, %v3151
        %v3153 = vmin.f32 %v3152, 1.0
        %v3154 = vmax.f32 %v3153, -1.0
        %v3155 = vmul.f32 %v2428, %v2428
        %v3156 = vmin.f32 16.0, %v3155
        %v3157 = vmul.f32 %v3156, 2.1237322e-06
        %v3158 = vadd.f32 %v3157, 0.00028619796
        %v3159 = vmul.f32 %v3156, %v3158
        %v3160 = vadd.f32 %v3159, 0.0036580483
        %v3161 = vmul.f32 %v3156, %v3160
        %v3162 = vadd.f32 %v3161, 0.05243302
        %v3163 = vmul.f32 %v3156, %v3162
        %v3164 = vadd.f32 %v3163, 0.18741608
        %v3165 = vmul.f32 %v3156, %v3164
        %v3166 = vadd.f32 %v3165, 1.1283791
        %v3167 = vmul.f32 %v2428, %v3166
        %v3168 = vmul.f32 %v3156, 3.8918573e-05
        %v3169 = vadd.f32 %v3168, 0.001143296
        %v3170 = vmul.f32 %v3156, %v3169
        %v3171 = vadd.f32 %v3170, 0.014752088
        %v3172 = vmul.f32 %v3156, %v3171
        %v3173 = vadd.f32 %v3172, 0.112945676
        %v3174 = vmul.f32 %v3156, %v3173
        %v3175 = vadd.f32 %v3174, 0.4994258
        %v3176 = vmul.f32 %v3156, %v3175
        %v3177 = vadd.f32 %v3176, 1.0
        %v3178 = vrcp.pop %v3177
        %v3179 = vmul.f32 %v3177, %v3178
        %v3180 = vsub.f32 1.0, %v3179
        %v3181 = vmul.f32 %v3178, %v3180
        %v3182 = vadd.f32 %v3178, %v3181
        %vm3183 = vweird.f32 %v3177
        %vm3184 = vweird.f32 %v3178
        %vm3185 = vmor %vm3183, %vm3184
        %v3186 = vsel %vm3185, %v3178, %v3182
        %v3187 = vand.u32 2147483647, %v3177
        %vm3188 = vcmp.eq.f32.partialorder %v3187, 8.507059e+37
        %v3189 = vand.u32 %v3177, 2147483648
        %v3190 = vor.u32 1.1754944e-38, %v3189
        %v3191 = vsel %vm3188, %v3190, %v3186
        %v3192 = vmul.f32 %v3167, %v3191
        %v3193 = vmin.f32 %v3192, 1.0
        %v3194 = vmax.f32 %v3193, -1.0
        %v3195 = vmul.f32 %v2429, %v2429
        %v3196 = vmin.f32 16.0, %v3195
        %v3197 = vmul.f32 %v3196, 2.1237322e-06
        %v3198 = vadd.f32 %v3197, 0.00028619796
        %v3199 = vmul.f32 %v3196, %v3198
        %v3200 = vadd.f32 %v3199, 0.0036580483
        %v3201 = vmul.f32 %v3196, %v3200
        %v3202 = vadd.f32 %v3201, 0.05243302
        %v3203 = vmul.f32 %v3196, %v3202
        %v3204 = vadd.f32 %v3203, 0.18741608
        %v3205 = vmul.f32 %v3196, %v3204
        %v3206 = vadd.f32 %v3205, 1.1283791
        %v3207 = vmul.f32 %v2429, %v3206
        %v3208 = vmul.f32 %v3196, 3.8918573e-05
        %v3209 = vadd.f32 %v3208, 0.001143296
        %v3210 = vmul.f32 %v3196, %v3209
        %v3211 = vadd.f32 %v3210, 0.014752088
        %v3212 = vmul.f32 %v3196, %v3211
        %v3213 = vadd.f32 %v3212, 0.112945676
        %v3214 = vmul.f32 %v3196, %v3213
        %v3215 = vadd.f32 %v3214, 0.4994258
        %v3216 = vmul.f32 %v3196, %v3215
        %v3217 = vadd.f32 %v3216, 1.0
        %v3218 = vrcp.pop %v3217
        %v3219 = vmul.f32 %v3217, %v3218
        %v3220 = vsub.f32 1.0, %v3219
        %v3221 = vmul.f32 %v3218, %v3220
        %v3222 = vadd.f32 %v3218, %v3221
        %vm3223 = vweird.f32 %v3217
        %vm3224 = vweird.f32 %v3218
        %vm3225 = vmor %vm3223, %vm3224
        %v3226 = vsel %vm3225, %v3218, %v3222
        %v3227 = vand.u32 2147483647, %v3217
        %vm3228 = vcmp.eq.f32.partialorder %v3227, 8.507059e+37
        %v3229 = vand.u32 %v3217, 2147483648
        %v3230 = vor.u32 1.1754944e-38, %v3229
        %v3231 = vsel %vm3228, %v3230, %v3226
        %v3232 = vmul.f32 %v3207, %v3231
        %v3233 = vmin.f32 %v3232, 1.0
        %v3234 = vmax.f32 %v3233, -1.0
        %v3235 = vmul.f32 %v2430, %v2430
        %v3236 = vmin.f32 16.0, %v3235
        %v3237 = vmul.f32 %v3236, 2.1237322e-06
        %v3238 = vadd.f32 %v3237, 0.00028619796
        %v3239 = vmul.f32 %v3236, %v3238
        %v3240 = vadd.f32 %v3239, 0.0036580483
        %v3241 = vmul.f32 %v3236, %v3240
        %v3242 = vadd.f32 %v3241, 0.05243302
        %v3243 = vmul.f32 %v3236, %v3242
        %v3244 = vadd.f32 %v3243, 0.18741608
        %v3245 = vmul.f32 %v3236, %v3244
        %v3246 = vadd.f32 %v3245, 1.1283791
        %v3247 = vmul.f32 %v2430, %v3246
        %v3248 = vmul.f32 %v3236, 3.8918573e-05
        %v3249 = vadd.f32 %v3248, 0.001143296
        %v3250 = vmul.f32 %v3236, %v3249
        %v3251 = vadd.f32 %v3250, 0.014752088
        %v3252 = vmul.f32 %v3236, %v3251
        %v3253 = vadd.f32 %v3252, 0.112945676
        %v3254 = vmul.f32 %v3236, %v3253
        %v3255 = vadd.f32 %v3254, 0.4994258
        %v3256 = vmul.f32 %v3236, %v3255
        %v3257 = vadd.f32 %v3256, 1.0
        %v3258 = vrcp.pop %v3257
        %v3259 = vmul.f32 %v3257, %v3258
        %v3260 = vsub.f32 1.0, %v3259
        %v3261 = vmul.f32 %v3258, %v3260
        %v3262 = vadd.f32 %v3258, %v3261
        %vm3263 = vweird.f32 %v3257
        %vm3264 = vweird.f32 %v3258
        %vm3265 = vmor %vm3263, %vm3264
        %v3266 = vsel %vm3265, %v3258, %v3262
        %v3267 = vand.u32 2147483647, %v3257
        %vm3268 = vcmp.eq.f32.partialorder %v3267, 8.507059e+37
        %v3269 = vand.u32 %v3257, 2147483648
        %v3270 = vor.u32 1.1754944e-38, %v3269
        %v3271 = vsel %vm3268, %v3270, %v3266
        %v3272 = vmul.f32 %v3247, %v3271
        %v3273 = vmin.f32 %v3272, 1.0
        %v3274 = vmax.f32 %v3273, -1.0
        %v3275 = vmul.f32 %v2431, %v2431
        %v3276 = vmin.f32 16.0, %v3275
        %v3277 = vmul.f32 %v3276, 2.1237322e-06
        %v3278 = vadd.f32 %v3277, 0.00028619796
        %v3279 = vmul.f32 %v3276, %v3278
        %v3280 = vadd.f32 %v3279, 0.0036580483
        %v3281 = vmul.f32 %v3276, %v3280
        %v3282 = vadd.f32 %v3281, 0.05243302
        %v3283 = vmul.f32 %v3276, %v3282
        %v3284 = vadd.f32 %v3283, 0.18741608
        %v3285 = vmul.f32 %v3276, %v3284
        %v3286 = vadd.f32 %v3285, 1.1283791
        %v3287 = vmul.f32 %v2431, %v3286
        %v3288 = vmul.f32 %v3276, 3.8918573e-05
        %v3289 = vadd.f32 %v3288, 0.001143296
        %v3290 = vmul.f32 %v3276, %v3289
        %v3291 = vadd.f32 %v3290, 0.014752088
        %v3292 = vmul.f32 %v3276, %v3291
        %v3293 = vadd.f32 %v3292, 0.112945676
        %v3294 = vmul.f32 %v3276, %v3293
        %v3295 = vadd.f32 %v3294, 0.4994258
        %v3296 = vmul.f32 %v3276, %v3295
        %v3297 = vadd.f32 %v3296, 1.0
        %v3298 = vrcp.pop %v3297
        %v3299 = vmul.f32 %v3297, %v3298
        %v3300 = vsub.f32 1.0, %v3299
        %v3301 = vmul.f32 %v3298, %v3300
        %v3302 = vadd.f32 %v3298, %v3301
        %vm3303 = vweird.f32 %v3297
        %vm3304 = vweird.f32 %v3298
        %vm3305 = vmor %vm3303, %vm3304
        %v3306 = vsel %vm3305, %v3298, %v3302
        %v3307 = vand.u32 2147483647, %v3297
        %vm3308 = vcmp.eq.f32.partialorder %v3307, 8.507059e+37
        %v3309 = vand.u32 %v3297, 2147483648
        %v3310 = vor.u32 1.1754944e-38, %v3309
        %v3311 = vsel %vm3308, %v3310, %v3306
        %v3312 = vmul.f32 %v3287, %v3311
        %v3313 = vmin.f32 %v3312, 1.0
        %v3314 = vmax.f32 %v3313, -1.0
        %v3315 = vmul.f32 %v2432, %v2432
        %v3316 = vmin.f32 16.0, %v3315
        %v3317 = vmul.f32 %v3316, 2.1237322e-06
        %v3318 = vadd.f32 %v3317, 0.00028619796
        %v3319 = vmul.f32 %v3316, %v3318
        %v3320 = vadd.f32 %v3319, 0.0036580483
        %v3321 = vmul.f32 %v3316, %v3320
        %v3322 = vadd.f32 %v3321, 0.05243302
        %v3323 = vmul.f32 %v3316, %v3322
        %v3324 = vadd.f32 %v3323, 0.18741608
        %v3325 = vmul.f32 %v3316, %v3324
        %v3326 = vadd.f32 %v3325, 1.1283791
        %v3327 = vmul.f32 %v2432, %v3326
        %v3328 = vmul.f32 %v3316, 3.8918573e-05
        %v3329 = vadd.f32 %v3328, 0.001143296
        %v3330 = vmul.f32 %v3316, %v3329
        %v3331 = vadd.f32 %v3330, 0.014752088
        %v3332 = vmul.f32 %v3316, %v3331
        %v3333 = vadd.f32 %v3332, 0.112945676
        %v3334 = vmul.f32 %v3316, %v3333
        %v3335 = vadd.f32 %v3334, 0.4994258
        %v3336 = vmul.f32 %v3316, %v3335
        %v3337 = vadd.f32 %v3336, 1.0
        %v3338 = vrcp.pop %v3337
        %v3339 = vmul.f32 %v3337, %v3338
        %v3340 = vsub.f32 1.0, %v3339
        %v3341 = vmul.f32 %v3338, %v3340
        %v3342 = vadd.f32 %v3338, %v3341
        %vm3343 = vweird.f32 %v3337
        %vm3344 = vweird.f32 %v3338
        %vm3345 = vmor %vm3343, %vm3344
        %v3346 = vsel %vm3345, %v3338, %v3342
        %v3347 = vand.u32 2147483647, %v3337
        %vm3348 = vcmp.eq.f32.partialorder %v3347, 8.507059e+37
        %v3349 = vand.u32 %v3337, 2147483648
        %v3350 = vor.u32 1.1754944e-38, %v3349
        %v3351 = vsel %vm3348, %v3350, %v3346
        %v3352 = vmul.f32 %v3327, %v3351
        %v3353 = vmin.f32 %v3352, 1.0
        %v3354 = vmax.f32 %v3353, -1.0
        %v3355 = vmul.f32 %v2433, %v2433
        %v3356 = vmin.f32 16.0, %v3355
        %v3357 = vmul.f32 %v3356, 2.1237322e-06
        %v3358 = vadd.f32 %v3357, 0.00028619796
        %v3359 = vmul.f32 %v3356, %v3358
        %v3360 = vadd.f32 %v3359, 0.0036580483
        %v3361 = vmul.f32 %v3356, %v3360
        %v3362 = vadd.f32 %v3361, 0.05243302
        %v3363 = vmul.f32 %v3356, %v3362
        %v3364 = vadd.f32 %v3363, 0.18741608
        %v3365 = vmul.f32 %v3356, %v3364
        %v3366 = vadd.f32 %v3365, 1.1283791
        %v3367 = vmul.f32 %v2433, %v3366
        %v3368 = vmul.f32 %v3356, 3.8918573e-05
        %v3369 = vadd.f32 %v3368, 0.001143296
        %v3370 = vmul.f32 %v3356, %v3369
        %v3371 = vadd.f32 %v3370, 0.014752088
        %v3372 = vmul.f32 %v3356, %v3371
        %v3373 = vadd.f32 %v3372, 0.112945676
        %v3374 = vmul.f32 %v3356, %v3373
        %v3375 = vadd.f32 %v3374, 0.4994258
        %v3376 = vmul.f32 %v3356, %v3375
        %v3377 = vadd.f32 %v3376, 1.0
        %v3378 = vrcp.pop %v3377
        %v3379 = vmul.f32 %v3377, %v3378
        %v3380 = vsub.f32 1.0, %v3379
        %v3381 = vmul.f32 %v3378, %v3380
        %v3382 = vadd.f32 %v3378, %v3381
        %vm3383 = vweird.f32 %v3377
        %vm3384 = vweird.f32 %v3378
        %vm3385 = vmor %vm3383, %vm3384
        %v3386 = vsel %vm3385, %v3378, %v3382
        %v3387 = vand.u32 2147483647, %v3377
        %vm3388 = vcmp.eq.f32.partialorder %v3387, 8.507059e+37
        %v3389 = vand.u32 %v3377, 2147483648
        %v3390 = vor.u32 1.1754944e-38, %v3389
        %v3391 = vsel %vm3388, %v3390, %v3386
        %v3392 = vmul.f32 %v3367, %v3391
        %v3393 = vmin.f32 %v3392, 1.0
        %v3394 = vmax.f32 %v3393, -1.0
        %v3395 = vmul.f32 %v2434, %v2434
        %v3396 = vmin.f32 16.0, %v3395
        %v3397 = vmul.f32 %v3396, 2.1237322e-06
        %v3398 = vadd.f32 %v3397, 0.00028619796
        %v3399 = vmul.f32 %v3396, %v3398
        %v3400 = vadd.f32 %v3399, 0.0036580483
        %v3401 = vmul.f32 %v3396, %v3400
        %v3402 = vadd.f32 %v3401, 0.05243302
        %v3403 = vmul.f32 %v3396, %v3402
        %v3404 = vadd.f32 %v3403, 0.18741608
        %v3405 = vmul.f32 %v3396, %v3404
        %v3406 = vadd.f32 %v3405, 1.1283791
        %v3407 = vmul.f32 %v2434, %v3406
        %v3408 = vmul.f32 %v3396, 3.8918573e-05
        %v3409 = vadd.f32 %v3408, 0.001143296
        %v3410 = vmul.f32 %v3396, %v3409
        %v3411 = vadd.f32 %v3410, 0.014752088
        %v3412 = vmul.f32 %v3396, %v3411
        %v3413 = vadd.f32 %v3412, 0.112945676
        %v3414 = vmul.f32 %v3396, %v3413
        %v3415 = vadd.f32 %v3414, 0.4994258
        %v3416 = vmul.f32 %v3396, %v3415
        %v3417 = vadd.f32 %v3416, 1.0
        %v3418 = vrcp.pop %v3417
        %v3419 = vmul.f32 %v3417, %v3418
        %v3420 = vsub.f32 1.0, %v3419
        %v3421 = vmul.f32 %v3418, %v3420
        %v3422 = vadd.f32 %v3418, %v3421
        %vm3423 = vweird.f32 %v3417
        %vm3424 = vweird.f32 %v3418
        %vm3425 = vmor %vm3423, %vm3424
        %v3426 = vsel %vm3425, %v3418, %v3422
        %v3427 = vand.u32 2147483647, %v3417
        %vm3428 = vcmp.eq.f32.partialorder %v3427, 8.507059e+37
        %v3429 = vand.u32 %v3417, 2147483648
        %v3430 = vor.u32 1.1754944e-38, %v3429
        %v3431 = vsel %vm3428, %v3430, %v3426
        %v3432 = vmul.f32 %v3407, %v3431
        %v3433 = vmin.f32 %v3432, 1.0
        %v3434 = vmax.f32 %v3433, -1.0
        %v3435 = vmul.f32 %v2435, %v2435
        %v3436 = vmin.f32 16.0, %v3435
        %v3437 = vmul.f32 %v3436, 2.1237322e-06
        %v3438 = vadd.f32 %v3437, 0.00028619796
        %v3439 = vmul.f32 %v3436, %v3438
        %v3440 = vadd.f32 %v3439, 0.0036580483
        %v3441 = vmul.f32 %v3436, %v3440
        %v3442 = vadd.f32 %v3441, 0.05243302
        %v3443 = vmul.f32 %v3436, %v3442
        %v3444 = vadd.f32 %v3443, 0.18741608
        %v3445 = vmul.f32 %v3436, %v3444
        %v3446 = vadd.f32 %v3445, 1.1283791
        %v3447 = vmul.f32 %v2435, %v3446
        %v3448 = vmul.f32 %v3436, 3.8918573e-05
        %v3449 = vadd.f32 %v3448, 0.001143296
        %v3450 = vmul.f32 %v3436, %v3449
        %v3451 = vadd.f32 %v3450, 0.014752088
        %v3452 = vmul.f32 %v3436, %v3451
        %v3453 = vadd.f32 %v3452, 0.112945676
        %v3454 = vmul.f32 %v3436, %v3453
        %v3455 = vadd.f32 %v3454, 0.4994258
        %v3456 = vmul.f32 %v3436, %v3455
        %v3457 = vadd.f32 %v3456, 1.0
        %v3458 = vrcp.pop %v3457
        %v3459 = vmul.f32 %v3457, %v3458
        %v3460 = vsub.f32 1.0, %v3459
        %v3461 = vmul.f32 %v3458, %v3460
        %v3462 = vadd.f32 %v3458, %v3461
        %vm3463 = vweird.f32 %v3457
        %vm3464 = vweird.f32 %v3458
        %vm3465 = vmor %vm3463, %vm3464
        %v3466 = vsel %vm3465, %v3458, %v3462
        %v3467 = vand.u32 2147483647, %v3457
        %vm3468 = vcmp.eq.f32.partialorder %v3467, 8.507059e+37
        %v3469 = vand.u32 %v3457, 2147483648
        %v3470 = vor.u32 1.1754944e-38, %v3469
        %v3471 = vsel %vm3468, %v3470, %v3466
        %v3472 = vmul.f32 %v3447, %v3471
        %v3473 = vmin.f32 %v3472, 1.0
        %v3474 = vmax.f32 %v3473, -1.0
        %v3475 = vmul.f32 %v2436, %v2436
        %v3476 = vmin.f32 16.0, %v3475
        %v3477 = vmul.f32 %v3476, 2.1237322e-06
        %v3478 = vadd.f32 %v3477, 0.00028619796
        %v3479 = vmul.f32 %v3476, %v3478
        %v3480 = vadd.f32 %v3479, 0.0036580483
        %v3481 = vmul.f32 %v3476, %v3480
        %v3482 = vadd.f32 %v3481, 0.05243302
        %v3483 = vmul.f32 %v3476, %v3482
        %v3484 = vadd.f32 %v3483, 0.18741608
        %v3485 = vmul.f32 %v3476, %v3484
        %v3486 = vadd.f32 %v3485, 1.1283791
        %v3487 = vmul.f32 %v2436, %v3486
        %v3488 = vmul.f32 %v3476, 3.8918573e-05
        %v3489 = vadd.f32 %v3488, 0.001143296
        %v3490 = vmul.f32 %v3476, %v3489
        %v3491 = vadd.f32 %v3490, 0.014752088
        %v3492 = vmul.f32 %v3476, %v3491
        %v3493 = vadd.f32 %v3492, 0.112945676
        %v3494 = vmul.f32 %v3476, %v3493
        %v3495 = vadd.f32 %v3494, 0.4994258
        %v3496 = vmul.f32 %v3476, %v3495
        %v3497 = vadd.f32 %v3496, 1.0
        %v3498 = vrcp.pop %v3497
        %v3499 = vmul.f32 %v3497, %v3498
        %v3500 = vsub.f32 1.0, %v3499
        %v3501 = vmul.f32 %v3498, %v3500
        %v3502 = vadd.f32 %v3498, %v3501
        %vm3503 = vweird.f32 %v3497
        %vm3504 = vweird.f32 %v3498
        %vm3505 = vmor %vm3503, %vm3504
        %v3506 = vsel %vm3505, %v3498, %v3502
        %v3507 = vand.u32 2147483647, %v3497
        %vm3508 = vcmp.eq.f32.partialorder %v3507, 8.507059e+37
        %v3509 = vand.u32 %v3497, 2147483648
        %v3510 = vor.u32 1.1754944e-38, %v3509
        %v3511 = vsel %vm3508, %v3510, %v3506
        %v3512 = vmul.f32 %v3487, %v3511
        %v3513 = vmin.f32 %v3512, 1.0
        %v3514 = vmax.f32 %v3513, -1.0
        %v3515 = vmul.f32 %v2437, %v2437
        %v3516 = vmin.f32 16.0, %v3515
        %v3517 = vmul.f32 %v3516, 2.1237322e-06
        %v3518 = vadd.f32 %v3517, 0.00028619796
        %v3519 = vmul.f32 %v3516, %v3518
        %v3520 = vadd.f32 %v3519, 0.0036580483
        %v3521 = vmul.f32 %v3516, %v3520
        %v3522 = vadd.f32 %v3521, 0.05243302
        %v3523 = vmul.f32 %v3516, %v3522
        %v3524 = vadd.f32 %v3523, 0.18741608
        %v3525 = vmul.f32 %v3516, %v3524
        %v3526 = vadd.f32 %v3525, 1.1283791
        %v3527 = vmul.f32 %v2437, %v3526
        %v3528 = vmul.f32 %v3516, 3.8918573e-05
        %v3529 = vadd.f32 %v3528, 0.001143296
        %v3530 = vmul.f32 %v3516, %v3529
        %v3531 = vadd.f32 %v3530, 0.014752088
        %v3532 = vmul.f32 %v3516, %v3531
        %v3533 = vadd.f32 %v3532, 0.112945676
        %v3534 = vmul.f32 %v3516, %v3533
        %v3535 = vadd.f32 %v3534, 0.4994258
        %v3536 = vmul.f32 %v3516, %v3535
        %v3537 = vadd.f32 %v3536, 1.0
        %v3538 = vrcp.pop %v3537
        %v3539 = vmul.f32 %v3537, %v3538
        %v3540 = vsub.f32 1.0, %v3539
        %v3541 = vmul.f32 %v3538, %v3540
        %v3542 = vadd.f32 %v3538, %v3541
        %vm3543 = vweird.f32 %v3537
        %vm3544 = vweird.f32 %v3538
        %vm3545 = vmor %vm3543, %vm3544
        %v3546 = vsel %vm3545, %v3538, %v3542
        %v3547 = vand.u32 2147483647, %v3537
        %vm3548 = vcmp.eq.f32.partialorder %v3547, 8.507059e+37
        %v3549 = vand.u32 %v3537, 2147483648
        %v3550 = vor.u32 1.1754944e-38, %v3549
        %v3551 = vsel %vm3548, %v3550, %v3546
        %v3552 = vmul.f32 %v3527, %v3551
        %v3553 = vmin.f32 %v3552, 1.0
        %v3554 = vmax.f32 %v3553, -1.0
        %v3555 = vmul.f32 %v2438, %v2438
        %v3556 = vmin.f32 16.0, %v3555
        %v3557 = vmul.f32 %v3556, 2.1237322e-06
        %v3558 = vadd.f32 %v3557, 0.00028619796
        %v3559 = vmul.f32 %v3556, %v3558
        %v3560 = vadd.f32 %v3559, 0.0036580483
        %v3561 = vmul.f32 %v3556, %v3560
        %v3562 = vadd.f32 %v3561, 0.05243302
        %v3563 = vmul.f32 %v3556, %v3562
        %v3564 = vadd.f32 %v3563, 0.18741608
        %v3565 = vmul.f32 %v3556, %v3564
        %v3566 = vadd.f32 %v3565, 1.1283791
        %v3567 = vmul.f32 %v2438, %v3566
        %v3568 = vmul.f32 %v3556, 3.8918573e-05
        %v3569 = vadd.f32 %v3568, 0.001143296
        %v3570 = vmul.f32 %v3556, %v3569
        %v3571 = vadd.f32 %v3570, 0.014752088
        %v3572 = vmul.f32 %v3556, %v3571
        %v3573 = vadd.f32 %v3572, 0.112945676
        %v3574 = vmul.f32 %v3556, %v3573
        %v3575 = vadd.f32 %v3574, 0.4994258
        %v3576 = vmul.f32 %v3556, %v3575
        %v3577 = vadd.f32 %v3576, 1.0
        %v3578 = vrcp.pop %v3577
        %v3579 = vmul.f32 %v3577, %v3578
        %v3580 = vsub.f32 1.0, %v3579
        %v3581 = vmul.f32 %v3578, %v3580
        %v3582 = vadd.f32 %v3578, %v3581
        %vm3583 = vweird.f32 %v3577
        %vm3584 = vweird.f32 %v3578
        %vm3585 = vmor %vm3583, %vm3584
        %v3586 = vsel %vm3585, %v3578, %v3582
        %v3587 = vand.u32 2147483647, %v3577
        %vm3588 = vcmp.eq.f32.partialorder %v3587, 8.507059e+37
        %v3589 = vand.u32 %v3577, 2147483648
        %v3590 = vor.u32 1.1754944e-38, %v3589
        %v3591 = vsel %vm3588, %v3590, %v3586
        %v3592 = vmul.f32 %v3567, %v3591
        %v3593 = vmin.f32 %v3592, 1.0
        %v3594 = vmax.f32 %v3593, -1.0
        %v3595 = vmul.f32 %v2439, %v2439
        %v3596 = vmin.f32 16.0, %v3595
        %v3597 = vmul.f32 %v3596, 2.1237322e-06
        %v3598 = vadd.f32 %v3597, 0.00028619796
        %v3599 = vmul.f32 %v3596, %v3598
        %v3600 = vadd.f32 %v3599, 0.0036580483
        %v3601 = vmul.f32 %v3596, %v3600
        %v3602 = vadd.f32 %v3601, 0.05243302
        %v3603 = vmul.f32 %v3596, %v3602
        %v3604 = vadd.f32 %v3603, 0.18741608
        %v3605 = vmul.f32 %v3596, %v3604
        %v3606 = vadd.f32 %v3605, 1.1283791
        %v3607 = vmul.f32 %v2439, %v3606
        %v3608 = vmul.f32 %v3596, 3.8918573e-05
        %v3609 = vadd.f32 %v3608, 0.001143296
        %v3610 = vmul.f32 %v3596, %v3609
        %v3611 = vadd.f32 %v3610, 0.014752088
        %v3612 = vmul.f32 %v3596, %v3611
        %v3613 = vadd.f32 %v3612, 0.112945676
        %v3614 = vmul.f32 %v3596, %v3613
        %v3615 = vadd.f32 %v3614, 0.4994258
        %v3616 = vmul.f32 %v3596, %v3615
        %v3617 = vadd.f32 %v3616, 1.0
        %v3618 = vrcp.pop %v3617
        %v3619 = vmul.f32 %v3617, %v3618
        %v3620 = vsub.f32 1.0, %v3619
        %v3621 = vmul.f32 %v3618, %v3620
        %v3622 = vadd.f32 %v3618, %v3621
        %vm3623 = vweird.f32 %v3617
        %vm3624 = vweird.f32 %v3618
        %vm3625 = vmor %vm3623, %vm3624
        %v3626 = vsel %vm3625, %v3618, %v3622
        %v3627 = vand.u32 2147483647, %v3617
        %vm3628 = vcmp.eq.f32.partialorder %v3627, 8.507059e+37
        %v3629 = vand.u32 %v3617, 2147483648
        %v3630 = vor.u32 1.1754944e-38, %v3629
        %v3631 = vsel %vm3628, %v3630, %v3626
        %v3632 = vmul.f32 %v3607, %v3631
        %v3633 = vmin.f32 %v3632, 1.0
        %v3634 = vmax.f32 %v3633, -1.0
        %v3635 = vmul.f32 %v2440, %v2440
        %v3636 = vmin.f32 16.0, %v3635
        %v3637 = vmul.f32 %v3636, 2.1237322e-06
        %v3638 = vadd.f32 %v3637, 0.00028619796
        %v3639 = vmul.f32 %v3636, %v3638
        %v3640 = vadd.f32 %v3639, 0.0036580483
        %v3641 = vmul.f32 %v3636, %v3640
        %v3642 = vadd.f32 %v3641, 0.05243302
        %v3643 = vmul.f32 %v3636, %v3642
        %v3644 = vadd.f32 %v3643, 0.18741608
        %v3645 = vmul.f32 %v3636, %v3644
        %v3646 = vadd.f32 %v3645, 1.1283791
        %v3647 = vmul.f32 %v2440, %v3646
        %v3648 = vmul.f32 %v3636, 3.8918573e-05
        %v3649 = vadd.f32 %v3648, 0.001143296
        %v3650 = vmul.f32 %v3636, %v3649
        %v3651 = vadd.f32 %v3650, 0.014752088
        %v3652 = vmul.f32 %v3636, %v3651
        %v3653 = vadd.f32 %v3652, 0.112945676
        %v3654 = vmul.f32 %v3636, %v3653
        %v3655 = vadd.f32 %v3654, 0.4994258
        %v3656 = vmul.f32 %v3636, %v3655
        %v3657 = vadd.f32 %v3656, 1.0
        %v3658 = vrcp.pop %v3657
        %v3659 = vmul.f32 %v3657, %v3658
        %v3660 = vsub.f32 1.0, %v3659
        %v3661 = vmul.f32 %v3658, %v3660
        %v3662 = vadd.f32 %v3658, %v3661
        %vm3663 = vweird.f32 %v3657
        %vm3664 = vweird.f32 %v3658
        %vm3665 = vmor %vm3663, %vm3664
        %v3666 = vsel %vm3665, %v3658, %v3662
        %v3667 = vand.u32 2147483647, %v3657
        %vm3668 = vcmp.eq.f32.partialorder %v3667, 8.507059e+37
        %v3669 = vand.u32 %v3657, 2147483648
        %v3670 = vor.u32 1.1754944e-38, %v3669
        %v3671 = vsel %vm3668, %v3670, %v3666
        %v3672 = vmul.f32 %v3647, %v3671
        %v3673 = vmin.f32 %v3672, 1.0
        %v3674 = vmax.f32 %v3673, -1.0
        %v3675 = vmul.f32 %v2441, %v2441
        %v3676 = vmin.f32 16.0, %v3675
        %v3677 = vmul.f32 %v3676, 2.1237322e-06
        %v3678 = vadd.f32 %v3677, 0.00028619796
        %v3679 = vmul.f32 %v3676, %v3678
        %v3680 = vadd.f32 %v3679, 0.0036580483
        %v3681 = vmul.f32 %v3676, %v3680
        %v3682 = vadd.f32 %v3681, 0.05243302
        %v3683 = vmul.f32 %v3676, %v3682
        %v3684 = vadd.f32 %v3683, 0.18741608
        %v3685 = vmul.f32 %v3676, %v3684
        %v3686 = vadd.f32 %v3685, 1.1283791
        %v3687 = vmul.f32 %v2441, %v3686
        %v3688 = vmul.f32 %v3676, 3.8918573e-05
        %v3689 = vadd.f32 %v3688, 0.001143296
        %v3690 = vmul.f32 %v3676, %v3689
        %v3691 = vadd.f32 %v3690, 0.014752088
        %v3692 = vmul.f32 %v3676, %v3691
        %v3693 = vadd.f32 %v3692, 0.112945676
        %v3694 = vmul.f32 %v3676, %v3693
        %v3695 = vadd.f32 %v3694, 0.4994258
        %v3696 = vmul.f32 %v3676, %v3695
        %v3697 = vadd.f32 %v3696, 1.0
        %v3698 = vrcp.pop %v3697
        %v3699 = vmul.f32 %v3697, %v3698
        %v3700 = vsub.f32 1.0, %v3699
        %v3701 = vmul.f32 %v3698, %v3700
        %v3702 = vadd.f32 %v3698, %v3701
        %vm3703 = vweird.f32 %v3697
        %vm3704 = vweird.f32 %v3698
        %vm3705 = vmor %vm3703, %vm3704
        %v3706 = vsel %vm3705, %v3698, %v3702
        %v3707 = vand.u32 2147483647, %v3697
        %vm3708 = vcmp.eq.f32.partialorder %v3707, 8.507059e+37
        %v3709 = vand.u32 %v3697, 2147483648
        %v3710 = vor.u32 1.1754944e-38, %v3709
        %v3711 = vsel %vm3708, %v3710, %v3706
        %v3712 = vmul.f32 %v3687, %v3711
        %v3713 = vmin.f32 %v3712, 1.0
        %v3714 = vmax.f32 %v3713, -1.0
        %v3715 = vmul.f32 %v2442, %v2442
        %v3716 = vmin.f32 16.0, %v3715
        %v3717 = vmul.f32 %v3716, 2.1237322e-06
        %v3718 = vadd.f32 %v3717, 0.00028619796
        %v3719 = vmul.f32 %v3716, %v3718
        %v3720 = vadd.f32 %v3719, 0.0036580483
        %v3721 = vmul.f32 %v3716, %v3720
        %v3722 = vadd.f32 %v3721, 0.05243302
        %v3723 = vmul.f32 %v3716, %v3722
        %v3724 = vadd.f32 %v3723, 0.18741608
        %v3725 = vmul.f32 %v3716, %v3724
        %v3726 = vadd.f32 %v3725, 1.1283791
        %v3727 = vmul.f32 %v2442, %v3726
        %v3728 = vmul.f32 %v3716, 3.8918573e-05
        %v3729 = vadd.f32 %v3728, 0.001143296
        %v3730 = vmul.f32 %v3716, %v3729
        %v3731 = vadd.f32 %v3730, 0.014752088
        %v3732 = vmul.f32 %v3716, %v3731
        %v3733 = vadd.f32 %v3732, 0.112945676
        %v3734 = vmul.f32 %v3716, %v3733
        %v3735 = vadd.f32 %v3734, 0.4994258
        %v3736 = vmul.f32 %v3716, %v3735
        %v3737 = vadd.f32 %v3736, 1.0
        %v3738 = vrcp.pop %v3737
        %v3739 = vmul.f32 %v3737, %v3738
        %v3740 = vsub.f32 1.0, %v3739
        %v3741 = vmul.f32 %v3738, %v3740
        %v3742 = vadd.f32 %v3738, %v3741
        %vm3743 = vweird.f32 %v3737
        %vm3744 = vweird.f32 %v3738
        %vm3745 = vmor %vm3743, %vm3744
        %v3746 = vsel %vm3745, %v3738, %v3742
        %v3747 = vand.u32 2147483647, %v3737
        %vm3748 = vcmp.eq.f32.partialorder %v3747, 8.507059e+37
        %v3749 = vand.u32 %v3737, 2147483648
        %v3750 = vor.u32 1.1754944e-38, %v3749
        %v3751 = vsel %vm3748, %v3750, %v3746
        %v3752 = vmul.f32 %v3727, %v3751
        %v3753 = vmin.f32 %v3752, 1.0
        %v3754 = vmax.f32 %v3753, -1.0
        %v3755 = vmul.f32 %v2443, %v2443
        %v3756 = vmin.f32 16.0, %v3755
        %v3757 = vmul.f32 %v3756, 2.1237322e-06
        %v3758 = vadd.f32 %v3757, 0.00028619796
        %v3759 = vmul.f32 %v3756, %v3758
        %v3760 = vadd.f32 %v3759, 0.0036580483
        %v3761 = vmul.f32 %v3756, %v3760
        %v3762 = vadd.f32 %v3761, 0.05243302
        %v3763 = vmul.f32 %v3756, %v3762
        %v3764 = vadd.f32 %v3763, 0.18741608
        %v3765 = vmul.f32 %v3756, %v3764
        %v3766 = vadd.f32 %v3765, 1.1283791
        %v3767 = vmul.f32 %v2443, %v3766
        %v3768 = vmul.f32 %v3756, 3.8918573e-05
        %v3769 = vadd.f32 %v3768, 0.001143296
        %v3770 = vmul.f32 %v3756, %v3769
        %v3771 = vadd.f32 %v3770, 0.014752088
        %v3772 = vmul.f32 %v3756, %v3771
        %v3773 = vadd.f32 %v3772, 0.112945676
        %v3774 = vmul.f32 %v3756, %v3773
        %v3775 = vadd.f32 %v3774, 0.4994258
        %v3776 = vmul.f32 %v3756, %v3775
        %v3777 = vadd.f32 %v3776, 1.0
        %v3778 = vrcp.pop %v3777
        %v3779 = vmul.f32 %v3777, %v3778
        %v3780 = vsub.f32 1.0, %v3779
        %v3781 = vmul.f32 %v3778, %v3780
        %v3782 = vadd.f32 %v3778, %v3781
        %vm3783 = vweird.f32 %v3777
        %vm3784 = vweird.f32 %v3778
        %vm3785 = vmor %vm3783, %vm3784
        %v3786 = vsel %vm3785, %v3778, %v3782
        %v3787 = vand.u32 2147483647, %v3777
        %vm3788 = vcmp.eq.f32.partialorder %v3787, 8.507059e+37
        %v3789 = vand.u32 %v3777, 2147483648
        %v3790 = vor.u32 1.1754944e-38, %v3789
        %v3791 = vsel %vm3788, %v3790, %v3786
        %v3792 = vmul.f32 %v3767, %v3791
        %v3793 = vmin.f32 %v3792, 1.0
        %v3794 = vmax.f32 %v3793, -1.0
        %v3795 = vmul.f32 %v2444, %v2444
        %v3796 = vmin.f32 16.0, %v3795
        %v3797 = vmul.f32 %v3796, 2.1237322e-06
        %v3798 = vadd.f32 %v3797, 0.00028619796
        %v3799 = vmul.f32 %v3796, %v3798
        %v3800 = vadd.f32 %v3799, 0.0036580483
        %v3801 = vmul.f32 %v3796, %v3800
        %v3802 = vadd.f32 %v3801, 0.05243302
        %v3803 = vmul.f32 %v3796, %v3802
        %v3804 = vadd.f32 %v3803, 0.18741608
        %v3805 = vmul.f32 %v3796, %v3804
        %v3806 = vadd.f32 %v3805, 1.1283791
        %v3807 = vmul.f32 %v2444, %v3806
        %v3808 = vmul.f32 %v3796, 3.8918573e-05
        %v3809 = vadd.f32 %v3808, 0.001143296
        %v3810 = vmul.f32 %v3796, %v3809
        %v3811 = vadd.f32 %v3810, 0.014752088
        %v3812 = vmul.f32 %v3796, %v3811
        %v3813 = vadd.f32 %v3812, 0.112945676
        %v3814 = vmul.f32 %v3796, %v3813
        %v3815 = vadd.f32 %v3814, 0.4994258
        %v3816 = vmul.f32 %v3796, %v3815
        %v3817 = vadd.f32 %v3816, 1.0
        %v3818 = vrcp.pop %v3817
        %v3819 = vmul.f32 %v3817, %v3818
        %v3820 = vsub.f32 1.0, %v3819
        %v3821 = vmul.f32 %v3818, %v3820
        %v3822 = vadd.f32 %v3818, %v3821
        %vm3823 = vweird.f32 %v3817
        %vm3824 = vweird.f32 %v3818
        %vm3825 = vmor %vm3823, %vm3824
        %v3826 = vsel %vm3825, %v3818, %v3822
        %v3827 = vand.u32 2147483647, %v3817
        %vm3828 = vcmp.eq.f32.partialorder %v3827, 8.507059e+37
        %v3829 = vand.u32 %v3817, 2147483648
        %v3830 = vor.u32 1.1754944e-38, %v3829
        %v3831 = vsel %vm3828, %v3830, %v3826
        %v3832 = vmul.f32 %v3807, %v3831
        %v3833 = vmin.f32 %v3832, 1.0
        %v3834 = vmax.f32 %v3833, -1.0
        %v3835 = vmul.f32 %v2445, %v2445
        %v3836 = vmin.f32 16.0, %v3835
        %v3837 = vmul.f32 %v3836, 2.1237322e-06
        %v3838 = vadd.f32 %v3837, 0.00028619796
        %v3839 = vmul.f32 %v3836, %v3838
        %v3840 = vadd.f32 %v3839, 0.0036580483
        %v3841 = vmul.f32 %v3836, %v3840
        %v3842 = vadd.f32 %v3841, 0.05243302
        %v3843 = vmul.f32 %v3836, %v3842
        %v3844 = vadd.f32 %v3843, 0.18741608
        %v3845 = vmul.f32 %v3836, %v3844
        %v3846 = vadd.f32 %v3845, 1.1283791
        %v3847 = vmul.f32 %v2445, %v3846
        %v3848 = vmul.f32 %v3836, 3.8918573e-05
        %v3849 = vadd.f32 %v3848, 0.001143296
        %v3850 = vmul.f32 %v3836, %v3849
        %v3851 = vadd.f32 %v3850, 0.014752088
        %v3852 = vmul.f32 %v3836, %v3851
        %v3853 = vadd.f32 %v3852, 0.112945676
        %v3854 = vmul.f32 %v3836, %v3853
        %v3855 = vadd.f32 %v3854, 0.4994258
        %v3856 = vmul.f32 %v3836, %v3855
        %v3857 = vadd.f32 %v3856, 1.0
        %v3858 = vrcp.pop %v3857
        %v3859 = vmul.f32 %v3857, %v3858
        %v3860 = vsub.f32 1.0, %v3859
        %v3861 = vmul.f32 %v3858, %v3860
        %v3862 = vadd.f32 %v3858, %v3861
        %vm3863 = vweird.f32 %v3857
        %vm3864 = vweird.f32 %v3858
        %vm3865 = vmor %vm3863, %vm3864
        %v3866 = vsel %vm3865, %v3858, %v3862
        %v3867 = vand.u32 2147483647, %v3857
        %vm3868 = vcmp.eq.f32.partialorder %v3867, 8.507059e+37
        %v3869 = vand.u32 %v3857, 2147483648
        %v3870 = vor.u32 1.1754944e-38, %v3869
        %v3871 = vsel %vm3868, %v3870, %v3866
        %v3872 = vmul.f32 %v3847, %v3871
        %v3873 = vmin.f32 %v3872, 1.0
        %v3874 = vmax.f32 %v3873, -1.0
        %v3875 = vmul.f32 %v2446, %v2446
        %v3876 = vmin.f32 16.0, %v3875
        %v3877 = vmul.f32 %v3876, 2.1237322e-06
        %v3878 = vadd.f32 %v3877, 0.00028619796
        %v3879 = vmul.f32 %v3876, %v3878
        %v3880 = vadd.f32 %v3879, 0.0036580483
        %v3881 = vmul.f32 %v3876, %v3880
        %v3882 = vadd.f32 %v3881, 0.05243302
        %v3883 = vmul.f32 %v3876, %v3882
        %v3884 = vadd.f32 %v3883, 0.18741608
        %v3885 = vmul.f32 %v3876, %v3884
        %v3886 = vadd.f32 %v3885, 1.1283791
        %v3887 = vmul.f32 %v2446, %v3886
        %v3888 = vmul.f32 %v3876, 3.8918573e-05
        %v3889 = vadd.f32 %v3888, 0.001143296
        %v3890 = vmul.f32 %v3876, %v3889
        %v3891 = vadd.f32 %v3890, 0.014752088
        %v3892 = vmul.f32 %v3876, %v3891
        %v3893 = vadd.f32 %v3892, 0.112945676
        %v3894 = vmul.f32 %v3876, %v3893
        %v3895 = vadd.f32 %v3894, 0.4994258
        %v3896 = vmul.f32 %v3876, %v3895
        %v3897 = vadd.f32 %v3896, 1.0
        %v3898 = vrcp.pop %v3897
        %v3899 = vmul.f32 %v3897, %v3898
        %v3900 = vsub.f32 1.0, %v3899
        %v3901 = vmul.f32 %v3898, %v3900
        %v3902 = vadd.f32 %v3898, %v3901
        %vm3903 = vweird.f32 %v3897
        %vm3904 = vweird.f32 %v3898
        %vm3905 = vmor %vm3903, %vm3904
        %v3906 = vsel %vm3905, %v3898, %v3902
        %v3907 = vand.u32 2147483647, %v3897
        %vm3908 = vcmp.eq.f32.partialorder %v3907, 8.507059e+37
        %v3909 = vand.u32 %v3897, 2147483648
        %v3910 = vor.u32 1.1754944e-38, %v3909
        %v3911 = vsel %vm3908, %v3910, %v3906
        %v3912 = vmul.f32 %v3887, %v3911
        %v3913 = vmin.f32 %v3912, 1.0
        %v3914 = vmax.f32 %v3913, -1.0
        %v3915 = vmul.f32 %v2447, %v2447
        %v3916 = vmin.f32 16.0, %v3915
        %v3917 = vmul.f32 %v3916, 2.1237322e-06
        %v3918 = vadd.f32 %v3917, 0.00028619796
        %v3919 = vmul.f32 %v3916, %v3918
        %v3920 = vadd.f32 %v3919, 0.0036580483
        %v3921 = vmul.f32 %v3916, %v3920
        %v3922 = vadd.f32 %v3921, 0.05243302
        %v3923 = vmul.f32 %v3916, %v3922
        %v3924 = vadd.f32 %v3923, 0.18741608
        %v3925 = vmul.f32 %v3916, %v3924
        %v3926 = vadd.f32 %v3925, 1.1283791
        %v3927 = vmul.f32 %v2447, %v3926
        %v3928 = vmul.f32 %v3916, 3.8918573e-05
        %v3929 = vadd.f32 %v3928, 0.001143296
        %v3930 = vmul.f32 %v3916, %v3929
        %v3931 = vadd.f32 %v3930, 0.014752088
        %v3932 = vmul.f32 %v3916, %v3931
        %v3933 = vadd.f32 %v3932, 0.112945676
        %v3934 = vmul.f32 %v3916, %v3933
        %v3935 = vadd.f32 %v3934, 0.4994258
        %v3936 = vmul.f32 %v3916, %v3935
        %v3937 = vadd.f32 %v3936, 1.0
        %v3938 = vrcp.pop %v3937
        %v3939 = vmul.f32 %v3937, %v3938
        %v3940 = vsub.f32 1.0, %v3939
        %v3941 = vmul.f32 %v3938, %v3940
        %v3942 = vadd.f32 %v3938, %v3941
        %vm3943 = vweird.f32 %v3937
        %vm3944 = vweird.f32 %v3938
        %vm3945 = vmor %vm3943, %vm3944
        %v3946 = vsel %vm3945, %v3938, %v3942
        %v3947 = vand.u32 2147483647, %v3937
        %vm3948 = vcmp.eq.f32.partialorder %v3947, 8.507059e+37
        %v3949 = vand.u32 %v3937, 2147483648
        %v3950 = vor.u32 1.1754944e-38, %v3949
        %v3951 = vsel %vm3948, %v3950, %v3946
        %v3952 = vmul.f32 %v3927, %v3951
        %v3953 = vmin.f32 %v3952, 1.0
        %v3954 = vmax.f32 %v3953, -1.0
        %v3955 = vmul.f32 %v2448, %v2448
        %v3956 = vmin.f32 16.0, %v3955
        %v3957 = vmul.f32 %v3956, 2.1237322e-06
        %v3958 = vadd.f32 %v3957, 0.00028619796
        %v3959 = vmul.f32 %v3956, %v3958
        %v3960 = vadd.f32 %v3959, 0.0036580483
        %v3961 = vmul.f32 %v3956, %v3960
        %v3962 = vadd.f32 %v3961, 0.05243302
        %v3963 = vmul.f32 %v3956, %v3962
        %v3964 = vadd.f32 %v3963, 0.18741608
        %v3965 = vmul.f32 %v3956, %v3964
        %v3966 = vadd.f32 %v3965, 1.1283791
        %v3967 = vmul.f32 %v2448, %v3966
        %v3968 = vmul.f32 %v3956, 3.8918573e-05
        %v3969 = vadd.f32 %v3968, 0.001143296
        %v3970 = vmul.f32 %v3956, %v3969
        %v3971 = vadd.f32 %v3970, 0.014752088
        %v3972 = vmul.f32 %v3956, %v3971
        %v3973 = vadd.f32 %v3972, 0.112945676
        %v3974 = vmul.f32 %v3956, %v3973
        %v3975 = vadd.f32 %v3974, 0.4994258
        %v3976 = vmul.f32 %v3956, %v3975
        %v3977 = vadd.f32 %v3976, 1.0
        %v3978 = vrcp.pop %v3977
        %v3979 = vmul.f32 %v3977, %v3978
        %v3980 = vsub.f32 1.0, %v3979
        %v3981 = vmul.f32 %v3978, %v3980
        %v3982 = vadd.f32 %v3978, %v3981
        %vm3983 = vweird.f32 %v3977
        %vm3984 = vweird.f32 %v3978
        %vm3985 = vmor %vm3983, %vm3984
        %v3986 = vsel %vm3985, %v3978, %v3982
        %v3987 = vand.u32 2147483647, %v3977
        %vm3988 = vcmp.eq.f32.partialorder %v3987, 8.507059e+37
        %v3989 = vand.u32 %v3977, 2147483648
        %v3990 = vor.u32 1.1754944e-38, %v3989
        %v3991 = vsel %vm3988, %v3990, %v3986
        %v3992 = vmul.f32 %v3967, %v3991
        %v3993 = vmin.f32 %v3992, 1.0
        %v3994 = vmax.f32 %v3993, -1.0
        %v3995 = vmul.f32 %v2449, %v2449
        %v3996 = vmin.f32 16.0, %v3995
        %v3997 = vmul.f32 %v3996, 2.1237322e-06
        %v3998 = vadd.f32 %v3997, 0.00028619796
        %v3999 = vmul.f32 %v3996, %v3998
        %v4000 = vadd.f32 %v3999, 0.0036580483
        %v4001 = vmul.f32 %v3996, %v4000
        %v4002 = vadd.f32 %v4001, 0.05243302
        %v4003 = vmul.f32 %v3996, %v4002
        %v4004 = vadd.f32 %v4003, 0.18741608
        %v4005 = vmul.f32 %v3996, %v4004
        %v4006 = vadd.f32 %v4005, 1.1283791
        %v4007 = vmul.f32 %v2449, %v4006
        %v4008 = vmul.f32 %v3996, 3.8918573e-05
        %v4009 = vadd.f32 %v4008, 0.001143296
        %v4010 = vmul.f32 %v3996, %v4009
        %v4011 = vadd.f32 %v4010, 0.014752088
        %v4012 = vmul.f32 %v3996, %v4011
        %v4013 = vadd.f32 %v4012, 0.112945676
        %v4014 = vmul.f32 %v3996, %v4013
        %v4015 = vadd.f32 %v4014, 0.4994258
        %v4016 = vmul.f32 %v3996, %v4015
        %v4017 = vadd.f32 %v4016, 1.0
        %v4018 = vrcp.pop %v4017
        %v4019 = vmul.f32 %v4017, %v4018
        %v4020 = vsub.f32 1.0, %v4019
        %v4021 = vmul.f32 %v4018, %v4020
        %v4022 = vadd.f32 %v4018, %v4021
        %vm4023 = vweird.f32 %v4017
        %vm4024 = vweird.f32 %v4018
        %vm4025 = vmor %vm4023, %vm4024
        %v4026 = vsel %vm4025, %v4018, %v4022
        %v4027 = vand.u32 2147483647, %v4017
        %vm4028 = vcmp.eq.f32.partialorder %v4027, 8.507059e+37
        %v4029 = vand.u32 %v4017, 2147483648
        %v4030 = vor.u32 1.1754944e-38, %v4029
        %v4031 = vsel %vm4028, %v4030, %v4026
        %v4032 = vmul.f32 %v4007, %v4031
        %v4033 = vmin.f32 %v4032, 1.0
        %v4034 = vmax.f32 %v4033, -1.0
        %v4035 = vmul.f32 %v2450, %v2450
        %v4036 = vmin.f32 16.0, %v4035
        %v4037 = vmul.f32 %v4036, 2.1237322e-06
        %v4038 = vadd.f32 %v4037, 0.00028619796
        %v4039 = vmul.f32 %v4036, %v4038
        %v4040 = vadd.f32 %v4039, 0.0036580483
        %v4041 = vmul.f32 %v4036, %v4040
        %v4042 = vadd.f32 %v4041, 0.05243302
        %v4043 = vmul.f32 %v4036, %v4042
        %v4044 = vadd.f32 %v4043, 0.18741608
        %v4045 = vmul.f32 %v4036, %v4044
        %v4046 = vadd.f32 %v4045, 1.1283791
        %v4047 = vmul.f32 %v2450, %v4046
        %v4048 = vmul.f32 %v4036, 3.8918573e-05
        %v4049 = vadd.f32 %v4048, 0.001143296
        %v4050 = vmul.f32 %v4036, %v4049
        %v4051 = vadd.f32 %v4050, 0.014752088
        %v4052 = vmul.f32 %v4036, %v4051
        %v4053 = vadd.f32 %v4052, 0.112945676
        %v4054 = vmul.f32 %v4036, %v4053
        %v4055 = vadd.f32 %v4054, 0.4994258
        %v4056 = vmul.f32 %v4036, %v4055
        %v4057 = vadd.f32 %v4056, 1.0
        %v4058 = vrcp.pop %v4057
        %v4059 = vmul.f32 %v4057, %v4058
        %v4060 = vsub.f32 1.0, %v4059
        %v4061 = vmul.f32 %v4058, %v4060
        %v4062 = vadd.f32 %v4058, %v4061
        %vm4063 = vweird.f32 %v4057
        %vm4064 = vweird.f32 %v4058
        %vm4065 = vmor %vm4063, %vm4064
        %v4066 = vsel %vm4065, %v4058, %v4062
        %v4067 = vand.u32 2147483647, %v4057
        %vm4068 = vcmp.eq.f32.partialorder %v4067, 8.507059e+37
        %v4069 = vand.u32 %v4057, 2147483648
        %v4070 = vor.u32 1.1754944e-38, %v4069
        %v4071 = vsel %vm4068, %v4070, %v4066
        %v4072 = vmul.f32 %v4047, %v4071
        %v4073 = vmin.f32 %v4072, 1.0
        %v4074 = vmax.f32 %v4073, -1.0
        %v4075 = vmul.f32 %v2451, %v2451
        %v4076 = vmin.f32 16.0, %v4075
        %v4077 = vmul.f32 %v4076, 2.1237322e-06
        %v4078 = vadd.f32 %v4077, 0.00028619796
        %v4079 = vmul.f32 %v4076, %v4078
        %v4080 = vadd.f32 %v4079, 0.0036580483
        %v4081 = vmul.f32 %v4076, %v4080
        %v4082 = vadd.f32 %v4081, 0.05243302
        %v4083 = vmul.f32 %v4076, %v4082
        %v4084 = vadd.f32 %v4083, 0.18741608
        %v4085 = vmul.f32 %v4076, %v4084
        %v4086 = vadd.f32 %v4085, 1.1283791
        %v4087 = vmul.f32 %v2451, %v4086
        %v4088 = vmul.f32 %v4076, 3.8918573e-05
        %v4089 = vadd.f32 %v4088, 0.001143296
        %v4090 = vmul.f32 %v4076, %v4089
        %v4091 = vadd.f32 %v4090, 0.014752088
        %v4092 = vmul.f32 %v4076, %v4091
        %v4093 = vadd.f32 %v4092, 0.112945676
        %v4094 = vmul.f32 %v4076, %v4093
        %v4095 = vadd.f32 %v4094, 0.4994258
        %v4096 = vmul.f32 %v4076, %v4095
        %v4097 = vadd.f32 %v4096, 1.0
        %v4098 = vrcp.pop %v4097
        %v4099 = vmul.f32 %v4097, %v4098
        %v4100 = vsub.f32 1.0, %v4099
        %v4101 = vmul.f32 %v4098, %v4100
        %v4102 = vadd.f32 %v4098, %v4101
        %vm4103 = vweird.f32 %v4097
        %vm4104 = vweird.f32 %v4098
        %vm4105 = vmor %vm4103, %vm4104
        %v4106 = vsel %vm4105, %v4098, %v4102
        %v4107 = vand.u32 2147483647, %v4097
        %vm4108 = vcmp.eq.f32.partialorder %v4107, 8.507059e+37
        %v4109 = vand.u32 %v4097, 2147483648
        %v4110 = vor.u32 1.1754944e-38, %v4109
        %v4111 = vsel %vm4108, %v4110, %v4106
        %v4112 = vmul.f32 %v4087, %v4111
        %v4113 = vmin.f32 %v4112, 1.0
        %v4114 = vmax.f32 %v4113, -1.0
        %v4115 = vmul.f32 %v2452, %v2452
        %v4116 = vmin.f32 16.0, %v4115
        %v4117 = vmul.f32 %v4116, 2.1237322e-06
        %v4118 = vadd.f32 %v4117, 0.00028619796
        %v4119 = vmul.f32 %v4116, %v4118
        %v4120 = vadd.f32 %v4119, 0.0036580483
        %v4121 = vmul.f32 %v4116, %v4120
        %v4122 = vadd.f32 %v4121, 0.05243302
        %v4123 = vmul.f32 %v4116, %v4122
        %v4124 = vadd.f32 %v4123, 0.18741608
        %v4125 = vmul.f32 %v4116, %v4124
        %v4126 = vadd.f32 %v4125, 1.1283791
        %v4127 = vmul.f32 %v2452, %v4126
        %v4128 = vmul.f32 %v4116, 3.8918573e-05
        %v4129 = vadd.f32 %v4128, 0.001143296
        %v4130 = vmul.f32 %v4116, %v4129
        %v4131 = vadd.f32 %v4130, 0.014752088
        %v4132 = vmul.f32 %v4116, %v4131
        %v4133 = vadd.f32 %v4132, 0.112945676
        %v4134 = vmul.f32 %v4116, %v4133
        %v4135 = vadd.f32 %v4134, 0.4994258
        %v4136 = vmul.f32 %v4116, %v4135
        %v4137 = vadd.f32 %v4136, 1.0
        %v4138 = vrcp.pop %v4137
        %v4139 = vmul.f32 %v4137, %v4138
        %v4140 = vsub.f32 1.0, %v4139
        %v4141 = vmul.f32 %v4138, %v4140
        %v4142 = vadd.f32 %v4138, %v4141
        %vm4143 = vweird.f32 %v4137
        %vm4144 = vweird.f32 %v4138
        %vm4145 = vmor %vm4143, %vm4144
        %v4146 = vsel %vm4145, %v4138, %v4142
        %v4147 = vand.u32 2147483647, %v4137
        %vm4148 = vcmp.eq.f32.partialorder %v4147, 8.507059e+37
        %v4149 = vand.u32 %v4137, 2147483648
        %v4150 = vor.u32 1.1754944e-38, %v4149
        %v4151 = vsel %vm4148, %v4150, %v4146
        %v4152 = vmul.f32 %v4127, %v4151
        %v4153 = vmin.f32 %v4152, 1.0
        %v4154 = vmax.f32 %v4153, -1.0
        %v4155 = vmul.f32 %v2453, %v2453
        %v4156 = vmin.f32 16.0, %v4155
        %v4157 = vmul.f32 %v4156, 2.1237322e-06
        %v4158 = vadd.f32 %v4157, 0.00028619796
        %v4159 = vmul.f32 %v4156, %v4158
        %v4160 = vadd.f32 %v4159, 0.0036580483
        %v4161 = vmul.f32 %v4156, %v4160
        %v4162 = vadd.f32 %v4161, 0.05243302
        %v4163 = vmul.f32 %v4156, %v4162
        %v4164 = vadd.f32 %v4163, 0.18741608
        %v4165 = vmul.f32 %v4156, %v4164
        %v4166 = vadd.f32 %v4165, 1.1283791
        %v4167 = vmul.f32 %v2453, %v4166
        %v4168 = vmul.f32 %v4156, 3.8918573e-05
        %v4169 = vadd.f32 %v4168, 0.001143296
        %v4170 = vmul.f32 %v4156, %v4169
        %v4171 = vadd.f32 %v4170, 0.014752088
        %v4172 = vmul.f32 %v4156, %v4171
        %v4173 = vadd.f32 %v4172, 0.112945676
        %v4174 = vmul.f32 %v4156, %v4173
        %v4175 = vadd.f32 %v4174, 0.4994258
        %v4176 = vmul.f32 %v4156, %v4175
        %v4177 = vadd.f32 %v4176, 1.0
        %v4178 = vrcp.pop %v4177
        %v4179 = vmul.f32 %v4177, %v4178
        %v4180 = vsub.f32 1.0, %v4179
        %v4181 = vmul.f32 %v4178, %v4180
        %v4182 = vadd.f32 %v4178, %v4181
        %vm4183 = vweird.f32 %v4177
        %vm4184 = vweird.f32 %v4178
        %vm4185 = vmor %vm4183, %vm4184
        %v4186 = vsel %vm4185, %v4178, %v4182
        %v4187 = vand.u32 2147483647, %v4177
        %vm4188 = vcmp.eq.f32.partialorder %v4187, 8.507059e+37
        %v4189 = vand.u32 %v4177, 2147483648
        %v4190 = vor.u32 1.1754944e-38, %v4189
        %v4191 = vsel %vm4188, %v4190, %v4186
        %v4192 = vmul.f32 %v4167, %v4191
        %v4193 = vmin.f32 %v4192, 1.0
        %v4194 = vmax.f32 %v4193, -1.0
        %v4195 = vmul.f32 %v2454, %v2454
        %v4196 = vmin.f32 16.0, %v4195
        %v4197 = vmul.f32 %v4196, 2.1237322e-06
        %v4198 = vadd.f32 %v4197, 0.00028619796
        %v4199 = vmul.f32 %v4196, %v4198
        %v4200 = vadd.f32 %v4199, 0.0036580483
        %v4201 = vmul.f32 %v4196, %v4200
        %v4202 = vadd.f32 %v4201, 0.05243302
        %v4203 = vmul.f32 %v4196, %v4202
        %v4204 = vadd.f32 %v4203, 0.18741608
        %v4205 = vmul.f32 %v4196, %v4204
        %v4206 = vadd.f32 %v4205, 1.1283791
        %v4207 = vmul.f32 %v2454, %v4206
        %v4208 = vmul.f32 %v4196, 3.8918573e-05
        %v4209 = vadd.f32 %v4208, 0.001143296
        %v4210 = vmul.f32 %v4196, %v4209
        %v4211 = vadd.f32 %v4210, 0.014752088
        %v4212 = vmul.f32 %v4196, %v4211
        %v4213 = vadd.f32 %v4212, 0.112945676
        %v4214 = vmul.f32 %v4196, %v4213
        %v4215 = vadd.f32 %v4214, 0.4994258
        %v4216 = vmul.f32 %v4196, %v4215
        %v4217 = vadd.f32 %v4216, 1.0
        %v4218 = vrcp.pop %v4217
        %v4219 = vmul.f32 %v4217, %v4218
        %v4220 = vsub.f32 1.0, %v4219
        %v4221 = vmul.f32 %v4218, %v4220
        %v4222 = vadd.f32 %v4218, %v4221
        %vm4223 = vweird.f32 %v4217
        %vm4224 = vweird.f32 %v4218
        %vm4225 = vmor %vm4223, %vm4224
        %v4226 = vsel %vm4225, %v4218, %v4222
        %v4227 = vand.u32 2147483647, %v4217
        %vm4228 = vcmp.eq.f32.partialorder %v4227, 8.507059e+37
        %v4229 = vand.u32 %v4217, 2147483648
        %v4230 = vor.u32 1.1754944e-38, %v4229
        %v4231 = vsel %vm4228, %v4230, %v4226
        %v4232 = vmul.f32 %v4207, %v4231
        %v4233 = vmin.f32 %v4232, 1.0
        %v4234 = vmax.f32 %v4233, -1.0
        %v4235 = vmul.f32 %v2455, %v2455
        %v4236 = vmin.f32 16.0, %v4235
        %v4237 = vmul.f32 %v4236, 2.1237322e-06
        %v4238 = vadd.f32 %v4237, 0.00028619796
        %v4239 = vmul.f32 %v4236, %v4238
        %v4240 = vadd.f32 %v4239, 0.0036580483
        %v4241 = vmul.f32 %v4236, %v4240
        %v4242 = vadd.f32 %v4241, 0.05243302
        %v4243 = vmul.f32 %v4236, %v4242
        %v4244 = vadd.f32 %v4243, 0.18741608
        %v4245 = vmul.f32 %v4236, %v4244
        %v4246 = vadd.f32 %v4245, 1.1283791
        %v4247 = vmul.f32 %v2455, %v4246
        %v4248 = vmul.f32 %v4236, 3.8918573e-05
        %v4249 = vadd.f32 %v4248, 0.001143296
        %v4250 = vmul.f32 %v4236, %v4249
        %v4251 = vadd.f32 %v4250, 0.014752088
        %v4252 = vmul.f32 %v4236, %v4251
        %v4253 = vadd.f32 %v4252, 0.112945676
        %v4254 = vmul.f32 %v4236, %v4253
        %v4255 = vadd.f32 %v4254, 0.4994258
        %v4256 = vmul.f32 %v4236, %v4255
        %v4257 = vadd.f32 %v4256, 1.0
        %v4258 = vrcp.pop %v4257
        %v4259 = vmul.f32 %v4257, %v4258
        %v4260 = vsub.f32 1.0, %v4259
        %v4261 = vmul.f32 %v4258, %v4260
        %v4262 = vadd.f32 %v4258, %v4261
        %vm4263 = vweird.f32 %v4257
        %vm4264 = vweird.f32 %v4258
        %vm4265 = vmor %vm4263, %vm4264
        %v4266 = vsel %vm4265, %v4258, %v4262
        %v4267 = vand.u32 2147483647, %v4257
        %vm4268 = vcmp.eq.f32.partialorder %v4267, 8.507059e+37
        %v4269 = vand.u32 %v4257, 2147483648
        %v4270 = vor.u32 1.1754944e-38, %v4269
        %v4271 = vsel %vm4268, %v4270, %v4266
        %v4272 = vmul.f32 %v4247, %v4271
        %v4273 = vmin.f32 %v4272, 1.0
        %v4274 = vmax.f32 %v4273, -1.0
        %v4275 = vmul.f32 %v2456, %v2456
        %v4276 = vmin.f32 16.0, %v4275
        %v4277 = vmul.f32 %v4276, 2.1237322e-06
        %v4278 = vadd.f32 %v4277, 0.00028619796
        %v4279 = vmul.f32 %v4276, %v4278
        %v4280 = vadd.f32 %v4279, 0.0036580483
        %v4281 = vmul.f32 %v4276, %v4280
        %v4282 = vadd.f32 %v4281, 0.05243302
        %v4283 = vmul.f32 %v4276, %v4282
        %v4284 = vadd.f32 %v4283, 0.18741608
        %v4285 = vmul.f32 %v4276, %v4284
        %v4286 = vadd.f32 %v4285, 1.1283791
        %v4287 = vmul.f32 %v2456, %v4286
        %v4288 = vmul.f32 %v4276, 3.8918573e-05
        %v4289 = vadd.f32 %v4288, 0.001143296
        %v4290 = vmul.f32 %v4276, %v4289
        %v4291 = vadd.f32 %v4290, 0.014752088
        %v4292 = vmul.f32 %v4276, %v4291
        %v4293 = vadd.f32 %v4292, 0.112945676
        %v4294 = vmul.f32 %v4276, %v4293
        %v4295 = vadd.f32 %v4294, 0.4994258
        %v4296 = vmul.f32 %v4276, %v4295
        %v4297 = vadd.f32 %v4296, 1.0
        %v4298 = vrcp.pop %v4297
        %v4299 = vmul.f32 %v4297, %v4298
        %v4300 = vsub.f32 1.0, %v4299
        %v4301 = vmul.f32 %v4298, %v4300
        %v4302 = vadd.f32 %v4298, %v4301
        %vm4303 = vweird.f32 %v4297
        %vm4304 = vweird.f32 %v4298
        %vm4305 = vmor %vm4303, %vm4304
        %v4306 = vsel %vm4305, %v4298, %v4302
        %v4307 = vand.u32 2147483647, %v4297
        %vm4308 = vcmp.eq.f32.partialorder %v4307, 8.507059e+37
        %v4309 = vand.u32 %v4297, 2147483648
        %v4310 = vor.u32 1.1754944e-38, %v4309
        %v4311 = vsel %vm4308, %v4310, %v4306
        %v4312 = vmul.f32 %v4287, %v4311
        %v4313 = vmin.f32 %v4312, 1.0
        %v4314 = vmax.f32 %v4313, -1.0
        %v4315 = vmul.f32 %v2457, %v2457
        %v4316 = vmin.f32 16.0, %v4315
        %v4317 = vmul.f32 %v4316, 2.1237322e-06
        %v4318 = vadd.f32 %v4317, 0.00028619796
        %v4319 = vmul.f32 %v4316, %v4318
        %v4320 = vadd.f32 %v4319, 0.0036580483
        %v4321 = vmul.f32 %v4316, %v4320
        %v4322 = vadd.f32 %v4321, 0.05243302
        %v4323 = vmul.f32 %v4316, %v4322
        %v4324 = vadd.f32 %v4323, 0.18741608
        %v4325 = vmul.f32 %v4316, %v4324
        %v4326 = vadd.f32 %v4325, 1.1283791
        %v4327 = vmul.f32 %v2457, %v4326
        %v4328 = vmul.f32 %v4316, 3.8918573e-05
        %v4329 = vadd.f32 %v4328, 0.001143296
        %v4330 = vmul.f32 %v4316, %v4329
        %v4331 = vadd.f32 %v4330, 0.014752088
        %v4332 = vmul.f32 %v4316, %v4331
        %v4333 = vadd.f32 %v4332, 0.112945676
        %v4334 = vmul.f32 %v4316, %v4333
        %v4335 = vadd.f32 %v4334, 0.4994258
        %v4336 = vmul.f32 %v4316, %v4335
        %v4337 = vadd.f32 %v4336, 1.0
        %v4338 = vrcp.pop %v4337
        %v4339 = vmul.f32 %v4337, %v4338
        %v4340 = vsub.f32 1.0, %v4339
        %v4341 = vmul.f32 %v4338, %v4340
        %v4342 = vadd.f32 %v4338, %v4341
        %vm4343 = vweird.f32 %v4337
        %vm4344 = vweird.f32 %v4338
        %vm4345 = vmor %vm4343, %vm4344
        %v4346 = vsel %vm4345, %v4338, %v4342
        %v4347 = vand.u32 2147483647, %v4337
        %vm4348 = vcmp.eq.f32.partialorder %v4347, 8.507059e+37
        %v4349 = vand.u32 %v4337, 2147483648
        %v4350 = vor.u32 1.1754944e-38, %v4349
        %v4351 = vsel %vm4348, %v4350, %v4346
        %v4352 = vmul.f32 %v4327, %v4351
        %v4353 = vmin.f32 %v4352, 1.0
        %v4354 = vmax.f32 %v4353, -1.0
        %v4355 = vmul.f32 %v2458, %v2458
        %v4356 = vmin.f32 16.0, %v4355
        %v4357 = vmul.f32 %v4356, 2.1237322e-06
        %v4358 = vadd.f32 %v4357, 0.00028619796
        %v4359 = vmul.f32 %v4356, %v4358
        %v4360 = vadd.f32 %v4359, 0.0036580483
        %v4361 = vmul.f32 %v4356, %v4360
        %v4362 = vadd.f32 %v4361, 0.05243302
        %v4363 = vmul.f32 %v4356, %v4362
        %v4364 = vadd.f32 %v4363, 0.18741608
        %v4365 = vmul.f32 %v4356, %v4364
        %v4366 = vadd.f32 %v4365, 1.1283791
        %v4367 = vmul.f32 %v2458, %v4366
        %v4368 = vmul.f32 %v4356, 3.8918573e-05
        %v4369 = vadd.f32 %v4368, 0.001143296
        %v4370 = vmul.f32 %v4356, %v4369
        %v4371 = vadd.f32 %v4370, 0.014752088
        %v4372 = vmul.f32 %v4356, %v4371
        %v4373 = vadd.f32 %v4372, 0.112945676
        %v4374 = vmul.f32 %v4356, %v4373
        %v4375 = vadd.f32 %v4374, 0.4994258
        %v4376 = vmul.f32 %v4356, %v4375
        %v4377 = vadd.f32 %v4376, 1.0
        %v4378 = vrcp.pop %v4377
        %v4379 = vmul.f32 %v4377, %v4378
        %v4380 = vsub.f32 1.0, %v4379
        %v4381 = vmul.f32 %v4378, %v4380
        %v4382 = vadd.f32 %v4378, %v4381
        %vm4383 = vweird.f32 %v4377
        %vm4384 = vweird.f32 %v4378
        %vm4385 = vmor %vm4383, %vm4384
        %v4386 = vsel %vm4385, %v4378, %v4382
        %v4387 = vand.u32 2147483647, %v4377
        %vm4388 = vcmp.eq.f32.partialorder %v4387, 8.507059e+37
        %v4389 = vand.u32 %v4377, 2147483648
        %v4390 = vor.u32 1.1754944e-38, %v4389
        %v4391 = vsel %vm4388, %v4390, %v4386
        %v4392 = vmul.f32 %v4367, %v4391
        %v4393 = vmin.f32 %v4392, 1.0
        %v4394 = vmax.f32 %v4393, -1.0
        %v4395 = vmul.f32 %v2459, %v2459
        %v4396 = vmin.f32 16.0, %v4395
        %v4397 = vmul.f32 %v4396, 2.1237322e-06
        %v4398 = vadd.f32 %v4397, 0.00028619796
        %v4399 = vmul.f32 %v4396, %v4398
        %v4400 = vadd.f32 %v4399, 0.0036580483
        %v4401 = vmul.f32 %v4396, %v4400
        %v4402 = vadd.f32 %v4401, 0.05243302
        %v4403 = vmul.f32 %v4396, %v4402
        %v4404 = vadd.f32 %v4403, 0.18741608
        %v4405 = vmul.f32 %v4396, %v4404
        %v4406 = vadd.f32 %v4405, 1.1283791
        %v4407 = vmul.f32 %v2459, %v4406
        %v4408 = vmul.f32 %v4396, 3.8918573e-05
        %v4409 = vadd.f32 %v4408, 0.001143296
        %v4410 = vmul.f32 %v4396, %v4409
        %v4411 = vadd.f32 %v4410, 0.014752088
        %v4412 = vmul.f32 %v4396, %v4411
        %v4413 = vadd.f32 %v4412, 0.112945676
        %v4414 = vmul.f32 %v4396, %v4413
        %v4415 = vadd.f32 %v4414, 0.4994258
        %v4416 = vmul.f32 %v4396, %v4415
        %v4417 = vadd.f32 %v4416, 1.0
        %v4418 = vrcp.pop %v4417
        %v4419 = vmul.f32 %v4417, %v4418
        %v4420 = vsub.f32 1.0, %v4419
        %v4421 = vmul.f32 %v4418, %v4420
        %v4422 = vadd.f32 %v4418, %v4421
        %vm4423 = vweird.f32 %v4417
        %vm4424 = vweird.f32 %v4418
        %vm4425 = vmor %vm4423, %vm4424
        %v4426 = vsel %vm4425, %v4418, %v4422
        %v4427 = vand.u32 2147483647, %v4417
        %vm4428 = vcmp.eq.f32.partialorder %v4427, 8.507059e+37
        %v4429 = vand.u32 %v4417, 2147483648
        %v4430 = vor.u32 1.1754944e-38, %v4429
        %v4431 = vsel %vm4428, %v4430, %v4426
        %v4432 = vmul.f32 %v4407, %v4431
        %v4433 = vmin.f32 %v4432, 1.0
        %v4434 = vmax.f32 %v4433, -1.0
        %v4435 = vmul.f32 %v2460, %v2460
        %v4436 = vmin.f32 16.0, %v4435
        %v4437 = vmul.f32 %v4436, 2.1237322e-06
        %v4438 = vadd.f32 %v4437, 0.00028619796
        %v4439 = vmul.f32 %v4436, %v4438
        %v4440 = vadd.f32 %v4439, 0.0036580483
        %v4441 = vmul.f32 %v4436, %v4440
        %v4442 = vadd.f32 %v4441, 0.05243302
        %v4443 = vmul.f32 %v4436, %v4442
        %v4444 = vadd.f32 %v4443, 0.18741608
        %v4445 = vmul.f32 %v4436, %v4444
        %v4446 = vadd.f32 %v4445, 1.1283791
        %v4447 = vmul.f32 %v2460, %v4446
        %v4448 = vmul.f32 %v4436, 3.8918573e-05
        %v4449 = vadd.f32 %v4448, 0.001143296
        %v4450 = vmul.f32 %v4436, %v4449
        %v4451 = vadd.f32 %v4450, 0.014752088
        %v4452 = vmul.f32 %v4436, %v4451
        %v4453 = vadd.f32 %v4452, 0.112945676
        %v4454 = vmul.f32 %v4436, %v4453
        %v4455 = vadd.f32 %v4454, 0.4994258
        %v4456 = vmul.f32 %v4436, %v4455
        %v4457 = vadd.f32 %v4456, 1.0
        %v4458 = vrcp.pop %v4457
        %v4459 = vmul.f32 %v4457, %v4458
        %v4460 = vsub.f32 1.0, %v4459
        %v4461 = vmul.f32 %v4458, %v4460
        %v4462 = vadd.f32 %v4458, %v4461
        %vm4463 = vweird.f32 %v4457
        %vm4464 = vweird.f32 %v4458
        %vm4465 = vmor %vm4463, %vm4464
        %v4466 = vsel %vm4465, %v4458, %v4462
        %v4467 = vand.u32 2147483647, %v4457
        %vm4468 = vcmp.eq.f32.partialorder %v4467, 8.507059e+37
        %v4469 = vand.u32 %v4457, 2147483648
        %v4470 = vor.u32 1.1754944e-38, %v4469
        %v4471 = vsel %vm4468, %v4470, %v4466
        %v4472 = vmul.f32 %v4447, %v4471
        %v4473 = vmin.f32 %v4472, 1.0
        %v4474 = vmax.f32 %v4473, -1.0
        %v4475 = vmul.f32 %v2461, %v2461
        %v4476 = vmin.f32 16.0, %v4475
        %v4477 = vmul.f32 %v4476, 2.1237322e-06
        %v4478 = vadd.f32 %v4477, 0.00028619796
        %v4479 = vmul.f32 %v4476, %v4478
        %v4480 = vadd.f32 %v4479, 0.0036580483
        %v4481 = vmul.f32 %v4476, %v4480
        %v4482 = vadd.f32 %v4481, 0.05243302
        %v4483 = vmul.f32 %v4476, %v4482
        %v4484 = vadd.f32 %v4483, 0.18741608
        %v4485 = vmul.f32 %v4476, %v4484
        %v4486 = vadd.f32 %v4485, 1.1283791
        %v4487 = vmul.f32 %v2461, %v4486
        %v4488 = vmul.f32 %v4476, 3.8918573e-05
        %v4489 = vadd.f32 %v4488, 0.001143296
        %v4490 = vmul.f32 %v4476, %v4489
        %v4491 = vadd.f32 %v4490, 0.014752088
        %v4492 = vmul.f32 %v4476, %v4491
        %v4493 = vadd.f32 %v4492, 0.112945676
        %v4494 = vmul.f32 %v4476, %v4493
        %v4495 = vadd.f32 %v4494, 0.4994258
        %v4496 = vmul.f32 %v4476, %v4495
        %v4497 = vadd.f32 %v4496, 1.0
        %v4498 = vrcp.pop %v4497
        %v4499 = vmul.f32 %v4497, %v4498
        %v4500 = vsub.f32 1.0, %v4499
        %v4501 = vmul.f32 %v4498, %v4500
        %v4502 = vadd.f32 %v4498, %v4501
        %vm4503 = vweird.f32 %v4497
        %vm4504 = vweird.f32 %v4498
        %vm4505 = vmor %vm4503, %vm4504
        %v4506 = vsel %vm4505, %v4498, %v4502
        %v4507 = vand.u32 2147483647, %v4497
        %vm4508 = vcmp.eq.f32.partialorder %v4507, 8.507059e+37
        %v4509 = vand.u32 %v4497, 2147483648
        %v4510 = vor.u32 1.1754944e-38, %v4509
        %v4511 = vsel %vm4508, %v4510, %v4506
        %v4512 = vmul.f32 %v4487, %v4511
        %v4513 = vmin.f32 %v4512, 1.0
        %v4514 = vmax.f32 %v4513, -1.0
        %v4515 = vmul.f32 %v2462, %v2462
        %v4516 = vmin.f32 16.0, %v4515
        %v4517 = vmul.f32 %v4516, 2.1237322e-06
        %v4518 = vadd.f32 %v4517, 0.00028619796
        %v4519 = vmul.f32 %v4516, %v4518
        %v4520 = vadd.f32 %v4519, 0.0036580483
        %v4521 = vmul.f32 %v4516, %v4520
        %v4522 = vadd.f32 %v4521, 0.05243302
        %v4523 = vmul.f32 %v4516, %v4522
        %v4524 = vadd.f32 %v4523, 0.18741608
        %v4525 = vmul.f32 %v4516, %v4524
        %v4526 = vadd.f32 %v4525, 1.1283791
        %v4527 = vmul.f32 %v2462, %v4526
        %v4528 = vmul.f32 %v4516, 3.8918573e-05
        %v4529 = vadd.f32 %v4528, 0.001143296
        %v4530 = vmul.f32 %v4516, %v4529
        %v4531 = vadd.f32 %v4530, 0.014752088
        %v4532 = vmul.f32 %v4516, %v4531
        %v4533 = vadd.f32 %v4532, 0.112945676
        %v4534 = vmul.f32 %v4516, %v4533
        %v4535 = vadd.f32 %v4534, 0.4994258
        %v4536 = vmul.f32 %v4516, %v4535
        %v4537 = vadd.f32 %v4536, 1.0
        %v4538 = vrcp.pop %v4537
        %v4539 = vmul.f32 %v4537, %v4538
        %v4540 = vsub.f32 1.0, %v4539
        %v4541 = vmul.f32 %v4538, %v4540
        %v4542 = vadd.f32 %v4538, %v4541
        %vm4543 = vweird.f32 %v4537
        %vm4544 = vweird.f32 %v4538
        %vm4545 = vmor %vm4543, %vm4544
        %v4546 = vsel %vm4545, %v4538, %v4542
        %v4547 = vand.u32 2147483647, %v4537
        %vm4548 = vcmp.eq.f32.partialorder %v4547, 8.507059e+37
        %v4549 = vand.u32 %v4537, 2147483648
        %v4550 = vor.u32 1.1754944e-38, %v4549
        %v4551 = vsel %vm4548, %v4550, %v4546
        %v4552 = vmul.f32 %v4527, %v4551
        %v4553 = vmin.f32 %v4552, 1.0
        %v4554 = vmax.f32 %v4553, -1.0
        %v4555 = vmul.f32 %v2463, %v2463
        %v4556 = vmin.f32 16.0, %v4555
        %v4557 = vmul.f32 %v4556, 2.1237322e-06
        %v4558 = vadd.f32 %v4557, 0.00028619796
        %v4559 = vmul.f32 %v4556, %v4558
        %v4560 = vadd.f32 %v4559, 0.0036580483
        %v4561 = vmul.f32 %v4556, %v4560
        %v4562 = vadd.f32 %v4561, 0.05243302
        %v4563 = vmul.f32 %v4556, %v4562
        %v4564 = vadd.f32 %v4563, 0.18741608
        %v4565 = vmul.f32 %v4556, %v4564
        %v4566 = vadd.f32 %v4565, 1.1283791
        %v4567 = vmul.f32 %v2463, %v4566
        %v4568 = vmul.f32 %v4556, 3.8918573e-05
        %v4569 = vadd.f32 %v4568, 0.001143296
        %v4570 = vmul.f32 %v4556, %v4569
        %v4571 = vadd.f32 %v4570, 0.014752088
        %v4572 = vmul.f32 %v4556, %v4571
        %v4573 = vadd.f32 %v4572, 0.112945676
        %v4574 = vmul.f32 %v4556, %v4573
        %v4575 = vadd.f32 %v4574, 0.4994258
        %v4576 = vmul.f32 %v4556, %v4575
        %v4577 = vadd.f32 %v4576, 1.0
        %v4578 = vrcp.pop %v4577
        %v4579 = vmul.f32 %v4577, %v4578
        %v4580 = vsub.f32 1.0, %v4579
        %v4581 = vmul.f32 %v4578, %v4580
        %v4582 = vadd.f32 %v4578, %v4581
        %vm4583 = vweird.f32 %v4577
        %vm4584 = vweird.f32 %v4578
        %vm4585 = vmor %vm4583, %vm4584
        %v4586 = vsel %vm4585, %v4578, %v4582
        %v4587 = vand.u32 2147483647, %v4577
        %vm4588 = vcmp.eq.f32.partialorder %v4587, 8.507059e+37
        %v4589 = vand.u32 %v4577, 2147483648
        %v4590 = vor.u32 1.1754944e-38, %v4589
        %v4591 = vsel %vm4588, %v4590, %v4586
        %v4592 = vmul.f32 %v4567, %v4591
        %v4593 = vmin.f32 %v4592, 1.0
        %v4594 = vmax.f32 %v4593, -1.0
        %v4595 = vmul.f32 %v2464, %v2464
        %v4596 = vmin.f32 16.0, %v4595
        %v4597 = vmul.f32 %v4596, 2.1237322e-06
        %v4598 = vadd.f32 %v4597, 0.00028619796
        %v4599 = vmul.f32 %v4596, %v4598
        %v4600 = vadd.f32 %v4599, 0.0036580483
        %v4601 = vmul.f32 %v4596, %v4600
        %v4602 = vadd.f32 %v4601, 0.05243302
        %v4603 = vmul.f32 %v4596, %v4602
        %v4604 = vadd.f32 %v4603, 0.18741608
        %v4605 = vmul.f32 %v4596, %v4604
        %v4606 = vadd.f32 %v4605, 1.1283791
        %v4607 = vmul.f32 %v2464, %v4606
        %v4608 = vmul.f32 %v4596, 3.8918573e-05
        %v4609 = vadd.f32 %v4608, 0.001143296
        %v4610 = vmul.f32 %v4596, %v4609
        %v4611 = vadd.f32 %v4610, 0.014752088
        %v4612 = vmul.f32 %v4596, %v4611
        %v4613 = vadd.f32 %v4612, 0.112945676
        %v4614 = vmul.f32 %v4596, %v4613
        %v4615 = vadd.f32 %v4614, 0.4994258
        %v4616 = vmul.f32 %v4596, %v4615
        %v4617 = vadd.f32 %v4616, 1.0
        %v4618 = vrcp.pop %v4617
        %v4619 = vmul.f32 %v4617, %v4618
        %v4620 = vsub.f32 1.0, %v4619
        %v4621 = vmul.f32 %v4618, %v4620
        %v4622 = vadd.f32 %v4618, %v4621
        %vm4623 = vweird.f32 %v4617
        %vm4624 = vweird.f32 %v4618
        %vm4625 = vmor %vm4623, %vm4624
        %v4626 = vsel %vm4625, %v4618, %v4622
        %v4627 = vand.u32 2147483647, %v4617
        %vm4628 = vcmp.eq.f32.partialorder %v4627, 8.507059e+37
        %v4629 = vand.u32 %v4617, 2147483648
        %v4630 = vor.u32 1.1754944e-38, %v4629
        %v4631 = vsel %vm4628, %v4630, %v4626
        %v4632 = vmul.f32 %v4607, %v4631
        %v4633 = vmin.f32 %v4632, 1.0
        %v4634 = vmax.f32 %v4633, -1.0
        %v4635 = vmul.f32 %v2465, %v2465
        %v4636 = vmin.f32 16.0, %v4635
        %v4637 = vmul.f32 %v4636, 2.1237322e-06
        %v4638 = vadd.f32 %v4637, 0.00028619796
        %v4639 = vmul.f32 %v4636, %v4638
        %v4640 = vadd.f32 %v4639, 0.0036580483
        %v4641 = vmul.f32 %v4636, %v4640
        %v4642 = vadd.f32 %v4641, 0.05243302
        %v4643 = vmul.f32 %v4636, %v4642
        %v4644 = vadd.f32 %v4643, 0.18741608
        %v4645 = vmul.f32 %v4636, %v4644
        %v4646 = vadd.f32 %v4645, 1.1283791
        %v4647 = vmul.f32 %v2465, %v4646
        %v4648 = vmul.f32 %v4636, 3.8918573e-05
        %v4649 = vadd.f32 %v4648, 0.001143296
        %v4650 = vmul.f32 %v4636, %v4649
        %v4651 = vadd.f32 %v4650, 0.014752088
        %v4652 = vmul.f32 %v4636, %v4651
        %v4653 = vadd.f32 %v4652, 0.112945676
        %v4654 = vmul.f32 %v4636, %v4653
        %v4655 = vadd.f32 %v4654, 0.4994258
        %v4656 = vmul.f32 %v4636, %v4655
        %v4657 = vadd.f32 %v4656, 1.0
        %v4658 = vrcp.pop %v4657
        %v4659 = vmul.f32 %v4657, %v4658
        %v4660 = vsub.f32 1.0, %v4659
        %v4661 = vmul.f32 %v4658, %v4660
        %v4662 = vadd.f32 %v4658, %v4661
        %vm4663 = vweird.f32 %v4657
        %vm4664 = vweird.f32 %v4658
        %vm4665 = vmor %vm4663, %vm4664
        %v4666 = vsel %vm4665, %v4658, %v4662
        %v4667 = vand.u32 2147483647, %v4657
        %vm4668 = vcmp.eq.f32.partialorder %v4667, 8.507059e+37
        %v4669 = vand.u32 %v4657, 2147483648
        %v4670 = vor.u32 1.1754944e-38, %v4669
        %v4671 = vsel %vm4668, %v4670, %v4666
        %v4672 = vmul.f32 %v4647, %v4671
        %v4673 = vmin.f32 %v4672, 1.0
        %v4674 = vmax.f32 %v4673, -1.0
        %v4675 = vmul.f32 %v2466, %v2466
        %v4676 = vmin.f32 16.0, %v4675
        %v4677 = vmul.f32 %v4676, 2.1237322e-06
        %v4678 = vadd.f32 %v4677, 0.00028619796
        %v4679 = vmul.f32 %v4676, %v4678
        %v4680 = vadd.f32 %v4679, 0.0036580483
        %v4681 = vmul.f32 %v4676, %v4680
        %v4682 = vadd.f32 %v4681, 0.05243302
        %v4683 = vmul.f32 %v4676, %v4682
        %v4684 = vadd.f32 %v4683, 0.18741608
        %v4685 = vmul.f32 %v4676, %v4684
        %v4686 = vadd.f32 %v4685, 1.1283791
        %v4687 = vmul.f32 %v2466, %v4686
        %v4688 = vmul.f32 %v4676, 3.8918573e-05
        %v4689 = vadd.f32 %v4688, 0.001143296
        %v4690 = vmul.f32 %v4676, %v4689
        %v4691 = vadd.f32 %v4690, 0.014752088
        %v4692 = vmul.f32 %v4676, %v4691
        %v4693 = vadd.f32 %v4692, 0.112945676
        %v4694 = vmul.f32 %v4676, %v4693
        %v4695 = vadd.f32 %v4694, 0.4994258
        %v4696 = vmul.f32 %v4676, %v4695
        %v4697 = vadd.f32 %v4696, 1.0
        %v4698 = vrcp.pop %v4697
        %v4699 = vmul.f32 %v4697, %v4698
        %v4700 = vsub.f32 1.0, %v4699
        %v4701 = vmul.f32 %v4698, %v4700
        %v4702 = vadd.f32 %v4698, %v4701
        %vm4703 = vweird.f32 %v4697
        %vm4704 = vweird.f32 %v4698
        %vm4705 = vmor %vm4703, %vm4704
        %v4706 = vsel %vm4705, %v4698, %v4702
        %v4707 = vand.u32 2147483647, %v4697
        %vm4708 = vcmp.eq.f32.partialorder %v4707, 8.507059e+37
        %v4709 = vand.u32 %v4697, 2147483648
        %v4710 = vor.u32 1.1754944e-38, %v4709
        %v4711 = vsel %vm4708, %v4710, %v4706
        %v4712 = vmul.f32 %v4687, %v4711
        %v4713 = vmin.f32 %v4712, 1.0
        %v4714 = vmax.f32 %v4713, -1.0
        %v4715 = vmul.f32 %v2467, %v2467
        %v4716 = vmin.f32 16.0, %v4715
        %v4717 = vmul.f32 %v4716, 2.1237322e-06
        %v4718 = vadd.f32 %v4717, 0.00028619796
        %v4719 = vmul.f32 %v4716, %v4718
        %v4720 = vadd.f32 %v4719, 0.0036580483
        %v4721 = vmul.f32 %v4716, %v4720
        %v4722 = vadd.f32 %v4721, 0.05243302
        %v4723 = vmul.f32 %v4716, %v4722
        %v4724 = vadd.f32 %v4723, 0.18741608
        %v4725 = vmul.f32 %v4716, %v4724
        %v4726 = vadd.f32 %v4725, 1.1283791
        %v4727 = vmul.f32 %v2467, %v4726
        %v4728 = vmul.f32 %v4716, 3.8918573e-05
        %v4729 = vadd.f32 %v4728, 0.001143296
        %v4730 = vmul.f32 %v4716, %v4729
        %v4731 = vadd.f32 %v4730, 0.014752088
        %v4732 = vmul.f32 %v4716, %v4731
        %v4733 = vadd.f32 %v4732, 0.112945676
        %v4734 = vmul.f32 %v4716, %v4733
        %v4735 = vadd.f32 %v4734, 0.4994258
        %v4736 = vmul.f32 %v4716, %v4735
        %v4737 = vadd.f32 %v4736, 1.0
        %v4738 = vrcp.pop %v4737
        %v4739 = vmul.f32 %v4737, %v4738
        %v4740 = vsub.f32 1.0, %v4739
        %v4741 = vmul.f32 %v4738, %v4740
        %v4742 = vadd.f32 %v4738, %v4741
        %vm4743 = vweird.f32 %v4737
        %vm4744 = vweird.f32 %v4738
        %vm4745 = vmor %vm4743, %vm4744
        %v4746 = vsel %vm4745, %v4738, %v4742
        %v4747 = vand.u32 2147483647, %v4737
        %vm4748 = vcmp.eq.f32.partialorder %v4747, 8.507059e+37
        %v4749 = vand.u32 %v4737, 2147483648
        %v4750 = vor.u32 1.1754944e-38, %v4749
        %v4751 = vsel %vm4748, %v4750, %v4746
        %v4752 = vmul.f32 %v4727, %v4751
        %v4753 = vmin.f32 %v4752, 1.0
        %v4754 = vmax.f32 %v4753, -1.0
        %v4755 = vmul.f32 %v2468, %v2468
        %v4756 = vmin.f32 16.0, %v4755
        %v4757 = vmul.f32 %v4756, 2.1237322e-06
        %v4758 = vadd.f32 %v4757, 0.00028619796
        %v4759 = vmul.f32 %v4756, %v4758
        %v4760 = vadd.f32 %v4759, 0.0036580483
        %v4761 = vmul.f32 %v4756, %v4760
        %v4762 = vadd.f32 %v4761, 0.05243302
        %v4763 = vmul.f32 %v4756, %v4762
        %v4764 = vadd.f32 %v4763, 0.18741608
        %v4765 = vmul.f32 %v4756, %v4764
        %v4766 = vadd.f32 %v4765, 1.1283791
        %v4767 = vmul.f32 %v2468, %v4766
        %v4768 = vmul.f32 %v4756, 3.8918573e-05
        %v4769 = vadd.f32 %v4768, 0.001143296
        %v4770 = vmul.f32 %v4756, %v4769
        %v4771 = vadd.f32 %v4770, 0.014752088
        %v4772 = vmul.f32 %v4756, %v4771
        %v4773 = vadd.f32 %v4772, 0.112945676
        %v4774 = vmul.f32 %v4756, %v4773
        %v4775 = vadd.f32 %v4774, 0.4994258
        %v4776 = vmul.f32 %v4756, %v4775
        %v4777 = vadd.f32 %v4776, 1.0
        %v4778 = vrcp.pop %v4777
        %v4779 = vmul.f32 %v4777, %v4778
        %v4780 = vsub.f32 1.0, %v4779
        %v4781 = vmul.f32 %v4778, %v4780
        %v4782 = vadd.f32 %v4778, %v4781
        %vm4783 = vweird.f32 %v4777
        %vm4784 = vweird.f32 %v4778
        %vm4785 = vmor %vm4783, %vm4784
        %v4786 = vsel %vm4785, %v4778, %v4782
        %v4787 = vand.u32 2147483647, %v4777
        %vm4788 = vcmp.eq.f32.partialorder %v4787, 8.507059e+37
        %v4789 = vand.u32 %v4777, 2147483648
        %v4790 = vor.u32 1.1754944e-38, %v4789
        %v4791 = vsel %vm4788, %v4790, %v4786
        %v4792 = vmul.f32 %v4767, %v4791
        %v4793 = vmin.f32 %v4792, 1.0
        %v4794 = vmax.f32 %v4793, -1.0
        %v4795 = vmul.f32 %v2469, %v2469
        %v4796 = vmin.f32 16.0, %v4795
        %v4797 = vmul.f32 %v4796, 2.1237322e-06
        %v4798 = vadd.f32 %v4797, 0.00028619796
        %v4799 = vmul.f32 %v4796, %v4798
        %v4800 = vadd.f32 %v4799, 0.0036580483
        %v4801 = vmul.f32 %v4796, %v4800
        %v4802 = vadd.f32 %v4801, 0.05243302
        %v4803 = vmul.f32 %v4796, %v4802
        %v4804 = vadd.f32 %v4803, 0.18741608
        %v4805 = vmul.f32 %v4796, %v4804
        %v4806 = vadd.f32 %v4805, 1.1283791
        %v4807 = vmul.f32 %v2469, %v4806
        %v4808 = vmul.f32 %v4796, 3.8918573e-05
        %v4809 = vadd.f32 %v4808, 0.001143296
        %v4810 = vmul.f32 %v4796, %v4809
        %v4811 = vadd.f32 %v4810, 0.014752088
        %v4812 = vmul.f32 %v4796, %v4811
        %v4813 = vadd.f32 %v4812, 0.112945676
        %v4814 = vmul.f32 %v4796, %v4813
        %v4815 = vadd.f32 %v4814, 0.4994258
        %v4816 = vmul.f32 %v4796, %v4815
        %v4817 = vadd.f32 %v4816, 1.0
        %v4818 = vrcp.pop %v4817
        %v4819 = vmul.f32 %v4817, %v4818
        %v4820 = vsub.f32 1.0, %v4819
        %v4821 = vmul.f32 %v4818, %v4820
        %v4822 = vadd.f32 %v4818, %v4821
        %vm4823 = vweird.f32 %v4817
        %vm4824 = vweird.f32 %v4818
        %vm4825 = vmor %vm4823, %vm4824
        %v4826 = vsel %vm4825, %v4818, %v4822
        %v4827 = vand.u32 2147483647, %v4817
        %vm4828 = vcmp.eq.f32.partialorder %v4827, 8.507059e+37
        %v4829 = vand.u32 %v4817, 2147483648
        %v4830 = vor.u32 1.1754944e-38, %v4829
        %v4831 = vsel %vm4828, %v4830, %v4826
        %v4832 = vmul.f32 %v4807, %v4831
        %v4833 = vmin.f32 %v4832, 1.0
        %v4834 = vmax.f32 %v4833, -1.0
        %v4835 = vmul.f32 %v2470, %v2470
        %v4836 = vmin.f32 16.0, %v4835
        %v4837 = vmul.f32 %v4836, 2.1237322e-06
        %v4838 = vadd.f32 %v4837, 0.00028619796
        %v4839 = vmul.f32 %v4836, %v4838
        %v4840 = vadd.f32 %v4839, 0.0036580483
        %v4841 = vmul.f32 %v4836, %v4840
        %v4842 = vadd.f32 %v4841, 0.05243302
        %v4843 = vmul.f32 %v4836, %v4842
        %v4844 = vadd.f32 %v4843, 0.18741608
        %v4845 = vmul.f32 %v4836, %v4844
        %v4846 = vadd.f32 %v4845, 1.1283791
        %v4847 = vmul.f32 %v2470, %v4846
        %v4848 = vmul.f32 %v4836, 3.8918573e-05
        %v4849 = vadd.f32 %v4848, 0.001143296
        %v4850 = vmul.f32 %v4836, %v4849
        %v4851 = vadd.f32 %v4850, 0.014752088
        %v4852 = vmul.f32 %v4836, %v4851
        %v4853 = vadd.f32 %v4852, 0.112945676
        %v4854 = vmul.f32 %v4836, %v4853
        %v4855 = vadd.f32 %v4854, 0.4994258
        %v4856 = vmul.f32 %v4836, %v4855
        %v4857 = vadd.f32 %v4856, 1.0
        %v4858 = vrcp.pop %v4857
        %v4859 = vmul.f32 %v4857, %v4858
        %v4860 = vsub.f32 1.0, %v4859
        %v4861 = vmul.f32 %v4858, %v4860
        %v4862 = vadd.f32 %v4858, %v4861
        %vm4863 = vweird.f32 %v4857
        %vm4864 = vweird.f32 %v4858
        %vm4865 = vmor %vm4863, %vm4864
        %v4866 = vsel %vm4865, %v4858, %v4862
        %v4867 = vand.u32 2147483647, %v4857
        %vm4868 = vcmp.eq.f32.partialorder %v4867, 8.507059e+37
        %v4869 = vand.u32 %v4857, 2147483648
        %v4870 = vor.u32 1.1754944e-38, %v4869
        %v4871 = vsel %vm4868, %v4870, %v4866
        %v4872 = vmul.f32 %v4847, %v4871
        %v4873 = vmin.f32 %v4872, 1.0
        %v4874 = vmax.f32 %v4873, -1.0
        %v4875 = vmul.f32 %v2471, %v2471
        %v4876 = vmin.f32 16.0, %v4875
        %v4877 = vmul.f32 %v4876, 2.1237322e-06
        %v4878 = vadd.f32 %v4877, 0.00028619796
        %v4879 = vmul.f32 %v4876, %v4878
        %v4880 = vadd.f32 %v4879, 0.0036580483
        %v4881 = vmul.f32 %v4876, %v4880
        %v4882 = vadd.f32 %v4881, 0.05243302
        %v4883 = vmul.f32 %v4876, %v4882
        %v4884 = vadd.f32 %v4883, 0.18741608
        %v4885 = vmul.f32 %v4876, %v4884
        %v4886 = vadd.f32 %v4885, 1.1283791
        %v4887 = vmul.f32 %v2471, %v4886
        %v4888 = vmul.f32 %v4876, 3.8918573e-05
        %v4889 = vadd.f32 %v4888, 0.001143296
        %v4890 = vmul.f32 %v4876, %v4889
        %v4891 = vadd.f32 %v4890, 0.014752088
        %v4892 = vmul.f32 %v4876, %v4891
        %v4893 = vadd.f32 %v4892, 0.112945676
        %v4894 = vmul.f32 %v4876, %v4893
        %v4895 = vadd.f32 %v4894, 0.4994258
        %v4896 = vmul.f32 %v4876, %v4895
        %v4897 = vadd.f32 %v4896, 1.0
        %v4898 = vrcp.pop %v4897
        %v4899 = vmul.f32 %v4897, %v4898
        %v4900 = vsub.f32 1.0, %v4899
        %v4901 = vmul.f32 %v4898, %v4900
        %v4902 = vadd.f32 %v4898, %v4901
        %vm4903 = vweird.f32 %v4897
        %vm4904 = vweird.f32 %v4898
        %vm4905 = vmor %vm4903, %vm4904
        %v4906 = vsel %vm4905, %v4898, %v4902
        %v4907 = vand.u32 2147483647, %v4897
        %vm4908 = vcmp.eq.f32.partialorder %v4907, 8.507059e+37
        %v4909 = vand.u32 %v4897, 2147483648
        %v4910 = vor.u32 1.1754944e-38, %v4909
        %v4911 = vsel %vm4908, %v4910, %v4906
        %v4912 = vmul.f32 %v4887, %v4911
        %v4913 = vmin.f32 %v4912, 1.0
        %v4914 = vmax.f32 %v4913, -1.0
        %v4915 = vmul.f32 %v2472, %v2472
        %v4916 = vmin.f32 16.0, %v4915
        %v4917 = vmul.f32 %v4916, 2.1237322e-06
        %v4918 = vadd.f32 %v4917, 0.00028619796
        %v4919 = vmul.f32 %v4916, %v4918
        %v4920 = vadd.f32 %v4919, 0.0036580483
        %v4921 = vmul.f32 %v4916, %v4920
        %v4922 = vadd.f32 %v4921, 0.05243302
        %v4923 = vmul.f32 %v4916, %v4922
        %v4924 = vadd.f32 %v4923, 0.18741608
        %v4925 = vmul.f32 %v4916, %v4924
        %v4926 = vadd.f32 %v4925, 1.1283791
        %v4927 = vmul.f32 %v2472, %v4926
        %v4928 = vmul.f32 %v4916, 3.8918573e-05
        %v4929 = vadd.f32 %v4928, 0.001143296
        %v4930 = vmul.f32 %v4916, %v4929
        %v4931 = vadd.f32 %v4930, 0.014752088
        %v4932 = vmul.f32 %v4916, %v4931
        %v4933 = vadd.f32 %v4932, 0.112945676
        %v4934 = vmul.f32 %v4916, %v4933
        %v4935 = vadd.f32 %v4934, 0.4994258
        %v4936 = vmul.f32 %v4916, %v4935
        %v4937 = vadd.f32 %v4936, 1.0
        %v4938 = vrcp.pop %v4937
        %v4939 = vmul.f32 %v4937, %v4938
        %v4940 = vsub.f32 1.0, %v4939
        %v4941 = vmul.f32 %v4938, %v4940
        %v4942 = vadd.f32 %v4938, %v4941
        %vm4943 = vweird.f32 %v4937
        %vm4944 = vweird.f32 %v4938
        %vm4945 = vmor %vm4943, %vm4944
        %v4946 = vsel %vm4945, %v4938, %v4942
        %v4947 = vand.u32 2147483647, %v4937
        %vm4948 = vcmp.eq.f32.partialorder %v4947, 8.507059e+37
        %v4949 = vand.u32 %v4937, 2147483648
        %v4950 = vor.u32 1.1754944e-38, %v4949
        %v4951 = vsel %vm4948, %v4950, %v4946
        %v4952 = vmul.f32 %v4927, %v4951
        %v4953 = vmin.f32 %v4952, 1.0
        %v4954 = vmax.f32 %v4953, -1.0
        %v4955 = vmul.f32 %v2473, %v2473
        %v4956 = vmin.f32 16.0, %v4955
        %v4957 = vmul.f32 %v4956, 2.1237322e-06
        %v4958 = vadd.f32 %v4957, 0.00028619796
        %v4959 = vmul.f32 %v4956, %v4958
        %v4960 = vadd.f32 %v4959, 0.0036580483
        %v4961 = vmul.f32 %v4956, %v4960
        %v4962 = vadd.f32 %v4961, 0.05243302
        %v4963 = vmul.f32 %v4956, %v4962
        %v4964 = vadd.f32 %v4963, 0.18741608
        %v4965 = vmul.f32 %v4956, %v4964
        %v4966 = vadd.f32 %v4965, 1.1283791
        %v4967 = vmul.f32 %v2473, %v4966
        %v4968 = vmul.f32 %v4956, 3.8918573e-05
        %v4969 = vadd.f32 %v4968, 0.001143296
        %v4970 = vmul.f32 %v4956, %v4969
        %v4971 = vadd.f32 %v4970, 0.014752088
        %v4972 = vmul.f32 %v4956, %v4971
        %v4973 = vadd.f32 %v4972, 0.112945676
        %v4974 = vmul.f32 %v4956, %v4973
        %v4975 = vadd.f32 %v4974, 0.4994258
        %v4976 = vmul.f32 %v4956, %v4975
        %v4977 = vadd.f32 %v4976, 1.0
        %v4978 = vrcp.pop %v4977
        %v4979 = vmul.f32 %v4977, %v4978
        %v4980 = vsub.f32 1.0, %v4979
        %v4981 = vmul.f32 %v4978, %v4980
        %v4982 = vadd.f32 %v4978, %v4981
        %vm4983 = vweird.f32 %v4977
        %vm4984 = vweird.f32 %v4978
        %vm4985 = vmor %vm4983, %vm4984
        %v4986 = vsel %vm4985, %v4978, %v4982
        %v4987 = vand.u32 2147483647, %v4977
        %vm4988 = vcmp.eq.f32.partialorder %v4987, 8.507059e+37
        %v4989 = vand.u32 %v4977, 2147483648
        %v4990 = vor.u32 1.1754944e-38, %v4989
        %v4991 = vsel %vm4988, %v4990, %v4986
        %v4992 = vmul.f32 %v4967, %v4991
        %v4993 = vmin.f32 %v4992, 1.0
        %v4994 = vmax.f32 %v4993, -1.0
        %v4995 = vmul.f32 %v2474, %v2474
        %v4996 = vmin.f32 16.0, %v4995
        %v4997 = vmul.f32 %v4996, 2.1237322e-06
        %v4998 = vadd.f32 %v4997, 0.00028619796
        %v4999 = vmul.f32 %v4996, %v4998
        %v5000 = vadd.f32 %v4999, 0.0036580483
        %v5001 = vmul.f32 %v4996, %v5000
        %v5002 = vadd.f32 %v5001, 0.05243302
        %v5003 = vmul.f32 %v4996, %v5002
        %v5004 = vadd.f32 %v5003, 0.18741608
        %v5005 = vmul.f32 %v4996, %v5004
        %v5006 = vadd.f32 %v5005, 1.1283791
        %v5007 = vmul.f32 %v2474, %v5006
        %v5008 = vmul.f32 %v4996, 3.8918573e-05
        %v5009 = vadd.f32 %v5008, 0.001143296
        %v5010 = vmul.f32 %v4996, %v5009
        %v5011 = vadd.f32 %v5010, 0.014752088
        %v5012 = vmul.f32 %v4996, %v5011
        %v5013 = vadd.f32 %v5012, 0.112945676
        %v5014 = vmul.f32 %v4996, %v5013
        %v5015 = vadd.f32 %v5014, 0.4994258
        %v5016 = vmul.f32 %v4996, %v5015
        %v5017 = vadd.f32 %v5016, 1.0
        %v5018 = vrcp.pop %v5017
        %v5019 = vmul.f32 %v5017, %v5018
        %v5020 = vsub.f32 1.0, %v5019
        %v5021 = vmul.f32 %v5018, %v5020
        %v5022 = vadd.f32 %v5018, %v5021
        %vm5023 = vweird.f32 %v5017
        %vm5024 = vweird.f32 %v5018
        %vm5025 = vmor %vm5023, %vm5024
        %v5026 = vsel %vm5025, %v5018, %v5022
        %v5027 = vand.u32 2147483647, %v5017
        %vm5028 = vcmp.eq.f32.partialorder %v5027, 8.507059e+37
        %v5029 = vand.u32 %v5017, 2147483648
        %v5030 = vor.u32 1.1754944e-38, %v5029
        %v5031 = vsel %vm5028, %v5030, %v5026
        %v5032 = vmul.f32 %v5007, %v5031
        %v5033 = vmin.f32 %v5032, 1.0
        %v5034 = vmax.f32 %v5033, -1.0
        %v5035 = vadd.f32 %v2514, 1.0
        %v5036 = vadd.f32 %v2554, 1.0
        %v5037 = vadd.f32 %v2594, 1.0
        %v5038 = vadd.f32 %v2634, 1.0
        %v5039 = vadd.f32 %v2674, 1.0
        %v5040 = vadd.f32 %v2714, 1.0
        %v5041 = vadd.f32 %v2754, 1.0
        %v5042 = vadd.f32 %v2794, 1.0
        %v5043 = vadd.f32 %v2834, 1.0
        %v5044 = vadd.f32 %v2874, 1.0
        %v5045 = vadd.f32 %v2914, 1.0
        %v5046 = vadd.f32 %v2954, 1.0
        %v5047 = vadd.f32 %v2994, 1.0
        %v5048 = vadd.f32 %v3034, 1.0
        %v5049 = vadd.f32 %v3074, 1.0
        %v5050 = vadd.f32 %v3114, 1.0
        %v5051 = vadd.f32 %v3154, 1.0
        %v5052 = vadd.f32 %v3194, 1.0
        %v5053 = vadd.f32 %v3234, 1.0
        %v5054 = vadd.f32 %v3274, 1.0
        %v5055 = vadd.f32 %v3314, 1.0
        %v5056 = vadd.f32 %v3354, 1.0
        %v5057 = vadd.f32 %v3394, 1.0
        %v5058 = vadd.f32 %v3434, 1.0
        %v5059 = vadd.f32 %v3474, 1.0
        %v5060 = vadd.f32 %v3514, 1.0
        %v5061 = vadd.f32 %v3554, 1.0
        %v5062 = vadd.f32 %v3594, 1.0
        %v5063 = vadd.f32 %v3634, 1.0
        %v5064 = vadd.f32 %v3674, 1.0
        %v5065 = vadd.f32 %v3714, 1.0
        %v5066 = vadd.f32 %v3754, 1.0
        %v5067 = vadd.f32 %v3794, 1.0
        %v5068 = vadd.f32 %v3834, 1.0
        %v5069 = vadd.f32 %v3874, 1.0
        %v5070 = vadd.f32 %v3914, 1.0
        %v5071 = vadd.f32 %v3954, 1.0
        %v5072 = vadd.f32 %v3994, 1.0
        %v5073 = vadd.f32 %v4034, 1.0
        %v5074 = vadd.f32 %v4074, 1.0
        %v5075 = vadd.f32 %v4114, 1.0
        %v5076 = vadd.f32 %v4154, 1.0
        %v5077 = vadd.f32 %v4194, 1.0
        %v5078 = vadd.f32 %v4234, 1.0
        %v5079 = vadd.f32 %v4274, 1.0
        %v5080 = vadd.f32 %v4314, 1.0
        %v5081 = vadd.f32 %v4354, 1.0
        %v5082 = vadd.f32 %v4394, 1.0
        %v5083 = vadd.f32 %v4434, 1.0
        %v5084 = vadd.f32 %v4474, 1.0
        %v5085 = vadd.f32 %v4514, 1.0
        %v5086 = vadd.f32 %v4554, 1.0
        %v5087 = vadd.f32 %v4594, 1.0
        %v5088 = vadd.f32 %v4634, 1.0
        %v5089 = vadd.f32 %v4674, 1.0
        %v5090 = vadd.f32 %v4714, 1.0
        %v5091 = vadd.f32 %v4754, 1.0
        %v5092 = vadd.f32 %v4794, 1.0
        %v5093 = vadd.f32 %v4834, 1.0
        %v5094 = vadd.f32 %v4874, 1.0
        %v5095 = vadd.f32 %v4914, 1.0
        %v5096 = vadd.f32 %v4954, 1.0
        %v5097 = vadd.f32 %v4994, 1.0
        %v5098 = vadd.f32 %v5034, 1.0
        %v5099 = vmul.f32 %v2347, %v5035
        %v5100 = vmul.f32 %v2348, %v5036
        %v5101 = vmul.f32 %v2349, %v5037
        %v5102 = vmul.f32 %v2350, %v5038
        %v5103 = vmul.f32 %v2351, %v5039
        %v5104 = vmul.f32 %v2352, %v5040
        %v5105 = vmul.f32 %v2353, %v5041
        %v5106 = vmul.f32 %v2354, %v5042
        %v5107 = vmul.f32 %v2355, %v5043
        %v5108 = vmul.f32 %v2356, %v5044
        %v5109 = vmul.f32 %v2357, %v5045
        %v5110 = vmul.f32 %v2358, %v5046
        %v5111 = vmul.f32 %v2359, %v5047
        %v5112 = vmul.f32 %v2360, %v5048
        %v5113 = vmul.f32 %v2361, %v5049
        %v5114 = vmul.f32 %v2362, %v5050
        %v5115 = vmul.f32 %v2363, %v5051
        %v5116 = vmul.f32 %v2364, %v5052
        %v5117 = vmul.f32 %v2365, %v5053
        %v5118 = vmul.f32 %v2366, %v5054
        %v5119 = vmul.f32 %v2367, %v5055
        %v5120 = vmul.f32 %v2368, %v5056
        %v5121 = vmul.f32 %v2369, %v5057
        %v5122 = vmul.f32 %v2370, %v5058
        %v5123 = vmul.f32 %v2371, %v5059
        %v5124 = vmul.f32 %v2372, %v5060
        %v5125 = vmul.f32 %v2373, %v5061
        %v5126 = vmul.f32 %v2374, %v5062
        %v5127 = vmul.f32 %v2375, %v5063
        %v5128 = vmul.f32 %v2376, %v5064
        %v5129 = vmul.f32 %v2377, %v5065
        %v5130 = vmul.f32 %v2378, %v5066
        %v5131 = vmul.f32 %v2379, %v5067
        %v5132 = vmul.f32 %v2380, %v5068
        %v5133 = vmul.f32 %v2381, %v5069
        %v5134 = vmul.f32 %v2382, %v5070
        %v5135 = vmul.f32 %v2383, %v5071
        %v5136 = vmul.f32 %v2384, %v5072
        %v5137 = vmul.f32 %v2385, %v5073
        %v5138 = vmul.f32 %v2386, %v5074
        %v5139 = vmul.f32 %v2387, %v5075
        %v5140 = vmul.f32 %v2388, %v5076
        %v5141 = vmul.f32 %v2389, %v5077
        %v5142 = vmul.f32 %v2390, %v5078
        %v5143 = vmul.f32 %v2391, %v5079
        %v5144 = vmul.f32 %v2392, %v5080
        %v5145 = vmul.f32 %v2393, %v5081
        %v5146 = vmul.f32 %v2394, %v5082
        %v5147 = vmul.f32 %v2395, %v5083
        %v5148 = vmul.f32 %v2396, %v5084
        %v5149 = vmul.f32 %v2397, %v5085
        %v5150 = vmul.f32 %v2398, %v5086
        %v5151 = vmul.f32 %v2399, %v5087
        %v5152 = vmul.f32 %v2400, %v5088
        %v5153 = vmul.f32 %v2401, %v5089
        %v5154 = vmul.f32 %v2402, %v5090
        %v5155 = vmul.f32 %v2403, %v5091
        %v5156 = vmul.f32 %v2404, %v5092
        %v5157 = vmul.f32 %v2405, %v5093
        %v5158 = vmul.f32 %v2406, %v5094
        %v5159 = vmul.f32 %v2407, %v5095
        %v5160 = vmul.f32 %v2408, %v5096
        %v5161 = vmul.f32 %v2409, %v5097
        %v5162 = vmul.f32 %v2410, %v5098
        %v5163 = vld [vmem:[%s6] sm:$0x1]
        %v5165 = vperm.slane %v5163, 0
        %v5167 = vmul.f32 %v5099, %v5165
        %v5168 = vmul.f32 %v5100, %v5165
        %v5169 = vmul.f32 %v5101, %v5165
        %v5170 = vmul.f32 %v5102, %v5165
        %v5171 = vmul.f32 %v5103, %v5165
        %v5172 = vmul.f32 %v5104, %v5165
        %v5173 = vmul.f32 %v5105, %v5165
        %v5174 = vmul.f32 %v5106, %v5165
        %v5175 = vmul.f32 %v5107, %v5165
        %v5176 = vmul.f32 %v5108, %v5165
        %v5177 = vmul.f32 %v5109, %v5165
        %v5178 = vmul.f32 %v5110, %v5165
        %v5179 = vmul.f32 %v5111, %v5165
        %v5180 = vmul.f32 %v5112, %v5165
        %v5181 = vmul.f32 %v5113, %v5165
        %v5182 = vmul.f32 %v5114, %v5165
        %v5183 = vmul.f32 %v5115, %v5165
        %v5184 = vmul.f32 %v5116, %v5165
        %v5185 = vmul.f32 %v5117, %v5165
        %v5186 = vmul.f32 %v5118, %v5165
        %v5187 = vmul.f32 %v5119, %v5165
        %v5188 = vmul.f32 %v5120, %v5165
        %v5189 = vmul.f32 %v5121, %v5165
        %v5190 = vmul.f32 %v5122, %v5165
        %v5191 = vmul.f32 %v5123, %v5165
        %v5192 = vmul.f32 %v5124, %v5165
        %v5193 = vmul.f32 %v5125, %v5165
        %v5194 = vmul.f32 %v5126, %v5165
        %v5195 = vmul.f32 %v5127, %v5165
        %v5196 = vmul.f32 %v5128, %v5165
        %v5197 = vmul.f32 %v5129, %v5165
        %v5198 = vmul.f32 %v5130, %v5165
        %v5199 = vmul.f32 %v5131, %v5165
        %v5200 = vmul.f32 %v5132, %v5165
        %v5201 = vmul.f32 %v5133, %v5165
        %v5202 = vmul.f32 %v5134, %v5165
        %v5203 = vmul.f32 %v5135, %v5165
        %v5204 = vmul.f32 %v5136, %v5165
        %v5205 = vmul.f32 %v5137, %v5165
        %v5206 = vmul.f32 %v5138, %v5165
        %v5207 = vmul.f32 %v5139, %v5165
        %v5208 = vmul.f32 %v5140, %v5165
        %v5209 = vmul.f32 %v5141, %v5165
        %v5210 = vmul.f32 %v5142, %v5165
        %v5211 = vmul.f32 %v5143, %v5165
        %v5212 = vmul.f32 %v5144, %v5165
        %v5213 = vmul.f32 %v5145, %v5165
        %v5214 = vmul.f32 %v5146, %v5165
        %v5215 = vmul.f32 %v5147, %v5165
        %v5216 = vmul.f32 %v5148, %v5165
        %v5217 = vmul.f32 %v5149, %v5165
        %v5218 = vmul.f32 %v5150, %v5165
        %v5219 = vmul.f32 %v5151, %v5165
        %v5220 = vmul.f32 %v5152, %v5165
        %v5221 = vmul.f32 %v5153, %v5165
        %v5222 = vmul.f32 %v5154, %v5165
        %v5223 = vmul.f32 %v5155, %v5165
        %v5224 = vmul.f32 %v5156, %v5165
        %v5225 = vmul.f32 %v5157, %v5165
        %v5226 = vmul.f32 %v5158, %v5165
        %v5227 = vmul.f32 %v5159, %v5165
        %v5228 = vmul.f32 %v5160, %v5165
        %v5229 = vmul.f32 %v5161, %v5165
        %v5230 = vmul.f32 %v5162, %v5165
        %5231 = vadd.xlane.f32.xlu0 %v5167
        %v5232 = vpop.xlane.xlu0 %5231
        %5233 = vadd.xlane.f32.xlu0 %v5168
        %v5234 = vpop.xlane.xlu0 %5233
        %5235 = vadd.xlane.f32.xlu0 %v5169
        %v5236 = vpop.xlane.xlu0 %5235
        %5237 = vadd.xlane.f32.xlu0 %v5170
        %v5238 = vpop.xlane.xlu0 %5237
        %5239 = vadd.xlane.f32.xlu0 %v5171
        %v5240 = vpop.xlane.xlu0 %5239
        %5241 = vadd.xlane.f32.xlu0 %v5172
        %v5242 = vpop.xlane.xlu0 %5241
        %5243 = vadd.xlane.f32.xlu0 %v5173
        %v5244 = vpop.xlane.xlu0 %5243
        %5245 = vadd.xlane.f32.xlu0 %v5174
        %v5246 = vpop.xlane.xlu0 %5245
        %5247 = vadd.xlane.f32.xlu0 %v5175
        %v5248 = vpop.xlane.xlu0 %5247
        %5249 = vadd.xlane.f32.xlu0 %v5176
        %v5250 = vpop.xlane.xlu0 %5249
        %5251 = vadd.xlane.f32.xlu0 %v5177
        %v5252 = vpop.xlane.xlu0 %5251
        %5253 = vadd.xlane.f32.xlu0 %v5178
        %v5254 = vpop.xlane.xlu0 %5253
        %5255 = vadd.xlane.f32.xlu0 %v5179
        %v5256 = vpop.xlane.xlu0 %5255
        %5257 = vadd.xlane.f32.xlu0 %v5180
        %v5258 = vpop.xlane.xlu0 %5257
        %5259 = vadd.xlane.f32.xlu0 %v5181
        %v5260 = vpop.xlane.xlu0 %5259
        %5261 = vadd.xlane.f32.xlu0 %v5182
        %v5262 = vpop.xlane.xlu0 %5261
        %5263 = vadd.xlane.f32.xlu0 %v5183
        %v5264 = vpop.xlane.xlu0 %5263
        %5265 = vadd.xlane.f32.xlu0 %v5184
        %v5266 = vpop.xlane.xlu0 %5265
        %5267 = vadd.xlane.f32.xlu0 %v5185
        %v5268 = vpop.xlane.xlu0 %5267
        %5269 = vadd.xlane.f32.xlu0 %v5186
        %v5270 = vpop.xlane.xlu0 %5269
        %5271 = vadd.xlane.f32.xlu0 %v5187
        %v5272 = vpop.xlane.xlu0 %5271
        %5273 = vadd.xlane.f32.xlu0 %v5188
        %v5274 = vpop.xlane.xlu0 %5273
        %5275 = vadd.xlane.f32.xlu0 %v5189
        %v5276 = vpop.xlane.xlu0 %5275
        %5277 = vadd.xlane.f32.xlu0 %v5190
        %v5278 = vpop.xlane.xlu0 %5277
        %5279 = vadd.xlane.f32.xlu0 %v5191
        %v5280 = vpop.xlane.xlu0 %5279
        %5281 = vadd.xlane.f32.xlu0 %v5192
        %v5282 = vpop.xlane.xlu0 %5281
        %5283 = vadd.xlane.f32.xlu0 %v5193
        %v5284 = vpop.xlane.xlu0 %5283
        %5285 = vadd.xlane.f32.xlu0 %v5194
        %v5286 = vpop.xlane.xlu0 %5285
        %5287 = vadd.xlane.f32.xlu0 %v5195
        %v5288 = vpop.xlane.xlu0 %5287
        %5289 = vadd.xlane.f32.xlu0 %v5196
        %v5290 = vpop.xlane.xlu0 %5289
        %5291 = vadd.xlane.f32.xlu0 %v5197
        %v5292 = vpop.xlane.xlu0 %5291
        %5293 = vadd.xlane.f32.xlu0 %v5198
        %v5294 = vpop.xlane.xlu0 %5293
        %5295 = vadd.xlane.f32.xlu0 %v5199
        %v5296 = vpop.xlane.xlu0 %5295
        %5297 = vadd.xlane.f32.xlu0 %v5200
        %v5298 = vpop.xlane.xlu0 %5297
        %5299 = vadd.xlane.f32.xlu0 %v5201
        %v5300 = vpop.xlane.xlu0 %5299
        %5301 = vadd.xlane.f32.xlu0 %v5202
        %v5302 = vpop.xlane.xlu0 %5301
        %5303 = vadd.xlane.f32.xlu0 %v5203
        %v5304 = vpop.xlane.xlu0 %5303
        %5305 = vadd.xlane.f32.xlu0 %v5204
        %v5306 = vpop.xlane.xlu0 %5305
        %5307 = vadd.xlane.f32.xlu0 %v5205
        %v5308 = vpop.xlane.xlu0 %5307
        %5309 = vadd.xlane.f32.xlu0 %v5206
        %v5310 = vpop.xlane.xlu0 %5309
        %5311 = vadd.xlane.f32.xlu0 %v5207
        %v5312 = vpop.xlane.xlu0 %5311
        %5313 = vadd.xlane.f32.xlu0 %v5208
        %v5314 = vpop.xlane.xlu0 %5313
        %5315 = vadd.xlane.f32.xlu0 %v5209
        %v5316 = vpop.xlane.xlu0 %5315
        %5317 = vadd.xlane.f32.xlu0 %v5210
        %v5318 = vpop.xlane.xlu0 %5317
        %5319 = vadd.xlane.f32.xlu0 %v5211
        %v5320 = vpop.xlane.xlu0 %5319
        %5321 = vadd.xlane.f32.xlu0 %v5212
        %v5322 = vpop.xlane.xlu0 %5321
        %5323 = vadd.xlane.f32.xlu0 %v5213
        %v5324 = vpop.xlane.xlu0 %5323
        %5325 = vadd.xlane.f32.xlu0 %v5214
        %v5326 = vpop.xlane.xlu0 %5325
        %5327 = vadd.xlane.f32.xlu0 %v5215
        %v5328 = vpop.xlane.xlu0 %5327
        %5329 = vadd.xlane.f32.xlu0 %v5216
        %v5330 = vpop.xlane.xlu0 %5329
        %5331 = vadd.xlane.f32.xlu0 %v5217
        %v5332 = vpop.xlane.xlu0 %5331
        %5333 = vadd.xlane.f32.xlu0 %v5218
        %v5334 = vpop.xlane.xlu0 %5333
        %5335 = vadd.xlane.f32.xlu0 %v5219
        %v5336 = vpop.xlane.xlu0 %5335
        %5337 = vadd.xlane.f32.xlu0 %v5220
        %v5338 = vpop.xlane.xlu0 %5337
        %5339 = vadd.xlane.f32.xlu0 %v5221
        %v5340 = vpop.xlane.xlu0 %5339
        %5341 = vadd.xlane.f32.xlu0 %v5222
        %v5342 = vpop.xlane.xlu0 %5341
        %5343 = vadd.xlane.f32.xlu0 %v5223
        %v5344 = vpop.xlane.xlu0 %5343
        %5345 = vadd.xlane.f32.xlu0 %v5224
        %v5346 = vpop.xlane.xlu0 %5345
        %5347 = vadd.xlane.f32.xlu0 %v5225
        %v5348 = vpop.xlane.xlu0 %5347
        %5349 = vadd.xlane.f32.xlu0 %v5226
        %v5350 = vpop.xlane.xlu0 %5349
        %5351 = vadd.xlane.f32.xlu0 %v5227
        %v5352 = vpop.xlane.xlu0 %5351
        %5353 = vadd.xlane.f32.xlu0 %v5228
        %v5354 = vpop.xlane.xlu0 %5353
        %5355 = vadd.xlane.f32.xlu0 %v5229
        %v5356 = vpop.xlane.xlu0 %5355
        %5357 = vadd.xlane.f32.xlu0 %v5230
        %v5358 = vpop.xlane.xlu0 %5357
        %s5359 = sld [smem:[#allocation5]]
        %v5360 = vstv %s5359
        %v5361 = vadd.f32 %v5232, %v5360
        %v5362 = vadd.f32 %v5234, %v5360
        %v5363 = vadd.f32 %v5236, %v5360
        %v5364 = vadd.f32 %v5238, %v5360
        %v5365 = vadd.f32 %v5240, %v5360
        %v5366 = vadd.f32 %v5242, %v5360
        %v5367 = vadd.f32 %v5244, %v5360
        %v5368 = vadd.f32 %v5246, %v5360
        %v5369 = vadd.f32 %v5248, %v5360
        %v5370 = vadd.f32 %v5250, %v5360
        %v5371 = vadd.f32 %v5252, %v5360
        %v5372 = vadd.f32 %v5254, %v5360
        %v5373 = vadd.f32 %v5256, %v5360
        %v5374 = vadd.f32 %v5258, %v5360
        %v5375 = vadd.f32 %v5260, %v5360
        %v5376 = vadd.f32 %v5262, %v5360
        %v5377 = vadd.f32 %v5264, %v5360
        %v5378 = vadd.f32 %v5266, %v5360
        %v5379 = vadd.f32 %v5268, %v5360
        %v5380 = vadd.f32 %v5270, %v5360
        %v5381 = vadd.f32 %v5272, %v5360
        %v5382 = vadd.f32 %v5274, %v5360
        %v5383 = vadd.f32 %v5276, %v5360
        %v5384 = vadd.f32 %v5278, %v5360
        %v5385 = vadd.f32 %v5280, %v5360
        %v5386 = vadd.f32 %v5282, %v5360
        %v5387 = vadd.f32 %v5284, %v5360
        %v5388 = vadd.f32 %v5286, %v5360
        %v5389 = vadd.f32 %v5288, %v5360
        %v5390 = vadd.f32 %v5290, %v5360
        %v5391 = vadd.f32 %v5292, %v5360
        %v5392 = vadd.f32 %v5294, %v5360
        %v5393 = vadd.f32 %v5296, %v5360
        %v5394 = vadd.f32 %v5298, %v5360
        %v5395 = vadd.f32 %v5300, %v5360
        %v5396 = vadd.f32 %v5302, %v5360
        %v5397 = vadd.f32 %v5304, %v5360
        %v5398 = vadd.f32 %v5306, %v5360
        %v5399 = vadd.f32 %v5308, %v5360
        %v5400 = vadd.f32 %v5310, %v5360
        %v5401 = vadd.f32 %v5312, %v5360
        %v5402 = vadd.f32 %v5314, %v5360
        %v5403 = vadd.f32 %v5316, %v5360
        %v5404 = vadd.f32 %v5318, %v5360
        %v5405 = vadd.f32 %v5320, %v5360
        %v5406 = vadd.f32 %v5322, %v5360
        %v5407 = vadd.f32 %v5324, %v5360
        %v5408 = vadd.f32 %v5326, %v5360
        %v5409 = vadd.f32 %v5328, %v5360
        %v5410 = vadd.f32 %v5330, %v5360
        %v5411 = vadd.f32 %v5332, %v5360
        %v5412 = vadd.f32 %v5334, %v5360
        %v5413 = vadd.f32 %v5336, %v5360
        %v5414 = vadd.f32 %v5338, %v5360
        %v5415 = vadd.f32 %v5340, %v5360
        %v5416 = vadd.f32 %v5342, %v5360
        %v5417 = vadd.f32 %v5344, %v5360
        %v5418 = vadd.f32 %v5346, %v5360
        %v5419 = vadd.f32 %v5348, %v5360
        %v5420 = vadd.f32 %v5350, %v5360
        %v5421 = vadd.f32 %v5352, %v5360
        %v5422 = vadd.f32 %v5354, %v5360
        %v5423 = vadd.f32 %v5356, %v5360
        %v5424 = vadd.f32 %v5358, %v5360
        %v5425 = vld [vmem:[%s382] sm:$0xf]
        %vm5426 = vcmp.eq.f32.partialorder %v5425, 0.0
        %v5491 = vlaneseq
        %v5492 = vand.u32 %v5491, 127
        %v5493 = vperm.slane %v5361, %v5492
        %v5494 = vadd.s32 %v5492, 4294967288
        %v5495 = vperm.slane %v5362, %v5494
        %vm5496 = vcmask 130112
        %v5497 = vsel %vm5496, %v5495, %v5493
        %v5498 = vadd.s32 %v5492, 4294967280
        %v5499 = vperm.slane %v5363, %v5498
        %vm5500 = vcmask 195712
        %v5501 = vsel %vm5500, %v5499, %v5497
        %v5502 = vadd.s32 %v5492, 4294967272
        %v5503 = vperm.slane %v5364, %v5502
        %vm5504 = vcmask 261312
        %v5505 = vsel %vm5504, %v5503, %v5501
        %v5506 = vadd.s32 %v5492, 4294967264
        %v5507 = vperm.slane %v5365, %v5506
        %vm5508 = vcmask 326912
        %v5509 = vsel %vm5508, %v5507, %v5505
        %v5510 = vadd.s32 %v5492, 4294967256
        %v5511 = vperm.slane %v5366, %v5510
        %vm5512 = vcmask 392512
        %v5513 = vsel %vm5512, %v5511, %v5509
        %v5514 = vadd.s32 %v5492, 4294967248
        %v5515 = vperm.slane %v5367, %v5514
        %vm5516 = vcmask 458112
        %v5517 = vsel %vm5516, %v5515, %v5513
        %v5518 = vadd.s32 %v5492, 4294967240
        %v5519 = vperm.slane %v5368, %v5518
        %vm5520 = vcmask 523712
        %v5521 = vsel %vm5520, %v5519, %v5517
        %v5522 = vadd.s32 %v5492, 4294967232
        %v5523 = vperm.slane %v5369, %v5522
        %vm5524 = vcmask 589312
        %v5525 = vsel %vm5524, %v5523, %v5521
        %v5526 = vadd.s32 %v5492, 4294967224
        %v5527 = vperm.slane %v5370, %v5526
        %vm5528 = vcmask 654912
        %v5529 = vsel %vm5528, %v5527, %v5525
        %v5530 = vadd.s32 %v5492, 4294967216
        %v5531 = vperm.slane %v5371, %v5530
        %vm5532 = vcmask 720512
        %v5533 = vsel %vm5532, %v5531, %v5529
        %v5534 = vadd.s32 %v5492, 4294967208
        %v5535 = vperm.slane %v5372, %v5534
        %vm5536 = vcmask 786112
        %v5537 = vsel %vm5536, %v5535, %v5533
        %v5538 = vadd.s32 %v5492, 4294967200
        %v5539 = vperm.slane %v5373, %v5538
        %vm5540 = vcmask 851712
        %v5541 = vsel %vm5540, %v5539, %v5537
        %v5542 = vadd.s32 %v5492, 4294967192
        %v5543 = vperm.slane %v5374, %v5542
        %vm5544 = vcmask 917312
        %v5545 = vsel %vm5544, %v5543, %v5541
        %v5546 = vadd.s32 %v5492, 4294967184
        %v5547 = vperm.slane %v5375, %v5546
        %vm5548 = vcmask 982912
        %v5549 = vsel %vm5548, %v5547, %v5545
        %v5550 = vadd.s32 %v5492, 4294967176
        %v5551 = vperm.slane %v5376, %v5550
        %vm5552 = vcmask 1048512
        %v5553 = vsel %vm5552, %v5551, %v5549
        %v5554 = vperm.slane %v5377, %v5492
        %v5555 = vperm.slane %v5378, %v5494
        %v5556 = vsel %vm5496, %v5555, %v5554
        %v5557 = vperm.slane %v5379, %v5498
        %v5558 = vsel %vm5500, %v5557, %v5556
        %v5559 = vperm.slane %v5380, %v5502
        %v5560 = vsel %vm5504, %v5559, %v5558
        %v5561 = vperm.slane %v5381, %v5506
        %v5562 = vsel %vm5508, %v5561, %v5560
        %v5563 = vperm.slane %v5382, %v5510
        %v5564 = vsel %vm5512, %v5563, %v5562
        %v5565 = vperm.slane %v5383, %v5514
        %v5566 = vsel %vm5516, %v5565, %v5564
        %v5567 = vperm.slane %v5384, %v5518
        %v5568 = vsel %vm5520, %v5567, %v5566
        %v5569 = vperm.slane %v5385, %v5522
        %v5570 = vsel %vm5524, %v5569, %v5568
        %v5571 = vperm.slane %v5386, %v5526
        %v5572 = vsel %vm5528, %v5571, %v5570
        %v5573 = vperm.slane %v5387, %v5530
        %v5574 = vsel %vm5532, %v5573, %v5572
        %v5575 = vperm.slane %v5388, %v5534
        %v5576 = vsel %vm5536, %v5575, %v5574
        %v5577 = vperm.slane %v5389, %v5538
        %v5578 = vsel %vm5540, %v5577, %v5576
        %v5579 = vperm.slane %v5390, %v5542
        %v5580 = vsel %vm5544, %v5579, %v5578
        %v5581 = vperm.slane %v5391, %v5546
        %v5582 = vsel %vm5548, %v5581, %v5580
        %v5583 = vperm.slane %v5392, %v5550
        %v5584 = vsel %vm5552, %v5583, %v5582
        %v5585 = vperm.slane %v5393, %v5492
        %v5586 = vperm.slane %v5394, %v5494
        %v5587 = vsel %vm5496, %v5586, %v5585
        %v5588 = vperm.slane %v5395, %v5498
        %v5589 = vsel %vm5500, %v5588, %v5587
        %v5590 = vperm.slane %v5396, %v5502
        %v5591 = vsel %vm5504, %v5590, %v5589
        %v5592 = vperm.slane %v5397, %v5506
        %v5593 = vsel %vm5508, %v5592, %v5591
        %v5594 = vperm.slane %v5398, %v5510
        %v5595 = vsel %vm5512, %v5594, %v5593
        %v5596 = vperm.slane %v5399, %v5514
        %v5597 = vsel %vm5516, %v5596, %v5595
        %v5598 = vperm.slane %v5400, %v5518
        %v5599 = vsel %vm5520, %v5598, %v5597
        %v5600 = vperm.slane %v5401, %v5522
        %v5601 = vsel %vm5524, %v5600, %v5599
        %v5602 = vperm.slane %v5402, %v5526
        %v5603 = vsel %vm5528, %v5602, %v5601
        %v5604 = vperm.slane %v5403, %v5530
        %v5605 = vsel %vm5532, %v5604, %v5603
        %v5606 = vperm.slane %v5404, %v5534
        %v5607 = vsel %vm5536, %v5606, %v5605
        %v5608 = vperm.slane %v5405, %v5538
        %v5609 = vsel %vm5540, %v5608, %v5607
        %v5610 = vperm.slane %v5406, %v5542
        %v5611 = vsel %vm5544, %v5610, %v5609
        %v5612 = vperm.slane %v5407, %v5546
        %v5613 = vsel %vm5548, %v5612, %v5611
        %v5614 = vperm.slane %v5408, %v5550
        %v5615 = vsel %vm5552, %v5614, %v5613
        %v5616 = vperm.slane %v5409, %v5492
        %v5617 = vperm.slane %v5410, %v5494
        %v5618 = vsel %vm5496, %v5617, %v5616
        %v5619 = vperm.slane %v5411, %v5498
        %v5620 = vsel %vm5500, %v5619, %v5618
        %v5621 = vperm.slane %v5412, %v5502
        %v5622 = vsel %vm5504, %v5621, %v5620
        %v5623 = vperm.slane %v5413, %v5506
        %v5624 = vsel %vm5508, %v5623, %v5622
        %v5625 = vperm.slane %v5414, %v5510
        %v5626 = vsel %vm5512, %v5625, %v5624
        %v5627 = vperm.slane %v5415, %v5514
        %v5628 = vsel %vm5516, %v5627, %v5626
        %v5629 = vperm.slane %v5416, %v5518
        %v5630 = vsel %vm5520, %v5629, %v5628
        %v5631 = vperm.slane %v5417, %v5522
        %v5632 = vsel %vm5524, %v5631, %v5630
        %v5633 = vperm.slane %v5418, %v5526
        %v5634 = vsel %vm5528, %v5633, %v5632
        %v5635 = vperm.slane %v5419, %v5530
        %v5636 = vsel %vm5532, %v5635, %v5634
        %v5637 = vperm.slane %v5420, %v5534
        %v5638 = vsel %vm5536, %v5637, %v5636
        %v5639 = vperm.slane %v5421, %v5538
        %v5640 = vsel %vm5540, %v5639, %v5638
        %v5641 = vperm.slane %v5422, %v5542
        %v5642 = vsel %vm5544, %v5641, %v5640
        %v5643 = vperm.slane %v5423, %v5546
        %v5644 = vsel %vm5548, %v5643, %v5642
        %v5645 = vperm.slane %v5424, %v5550
        %v5646 = vsel %vm5552, %v5645, %v5644
        %vm5647 = vcmask 1041409
        %v5648 = vsel %vm5647, %v5584, %v5553
        %vm5649 = vcmask 1042434
        %v5650 = vsel %vm5649, %v5615, %v5648
        %vm5651 = vcmask 1043459
        %v5652 = vsel %vm5651, %v5646, %v5650
        %v5654 = vsel %vm5426, -inf, %v5652
        %v5655 = vld [vmem:[#allocation2] sm:$0xf]
        %vm5656 = vcmask 1043456
        %v5657 = vsel %vm5656, %v5654, -inf
        %5658 = vmax.xlane.f32.xlu0 %v5657
        %v5659 = vpop.xlane.xlu0 %5658
        %v5660 = vmax.f32 %v5655, %v5659
        %v5661 = vsub.f32 %v5655, %v5660
        %v5662 = vmul.f32 %v5661, 1.442695
        %v5663 = vpow.pop %v5662
        %5665 = vset.pattern.permute.xlu0 0
        %5666 = vperm.xlu0 %5665, %v5660
        %v5667 = vpop.permute.xlu0 %5666
        %v5669 = vsub.f32 %v5654, %v5667
        %v5670 = vmul.f32 %v5669, 1.442695
        %v5671 = vpow.pop %v5670
        %v5672 = vld [vmem:[#allocation3] sm:$0xf]
        %v5673 = vmul.f32 %v5663, %v5672
        %v5674 = vsel %vm5656, %v5671, 0.0
        %5675 = vadd.xlane.f32.xlu0 %v5674
        %v5676 = vpop.xlane.xlu0 %5675
        %v5677 = vadd.f32 %v5673, %v5676
        %vm5678 = vcmask 3072
        %5679 = vst.msk [vmem:[#allocation3] sm:$0xf] %vm5678, %v5677
        %v5681 = vrot.slane %v5671, 1
        %v5682 = vrot.slane %v5671, 2
        %v5683 = vrot.slane %v5671, 3
        %v5687 = vpack.c.bf16 %v5671, %v5671
        %v5688 = vpack.c.bf16 %v5681, %v5681
        %v5689 = vpack.c.bf16 %v5682, %v5682
        %v5690 = vpack.c.bf16 %v5683, %v5683
        %5691 = vmatpush.bf16.msra.mxu0 %v650
        %5692 = vmatpush.bf16.msra.mxu0 %v649
        %5693 = vmatpush.bf16.msra.mxu0 %v648
        %5694 = vmatpush.bf16.msra.mxu0 %v647
        %5695 = vmatpush.bf16.msra.mxu0 %v646
        %5696 = vmatpush.bf16.msra.mxu0 %v645
        %5697 = vmatpush.bf16.msra.mxu0 %v644
        %5698 = vmatpush.bf16.msra.mxu0 %v643
        %5699 = vmatmul.bf16.gmra.mxu0 %v5687
        %v5700 = vpop.f32.mrf.mxu0
        %v5701 = vadd.f32 0.0, %v5700
        %v5702 = vpop.f32.mrf.mxu0
        %5703 = vdwg.mxu0
        %5704 = vmatpush.bf16.msra.mxu0 %v658
        %5705 = vmatpush.bf16.msra.mxu0 %v657
        %5706 = vmatpush.bf16.msra.mxu0 %v656
        %5707 = vmatpush.bf16.msra.mxu0 %v655
        %5708 = vmatpush.bf16.msra.mxu0 %v654
        %5709 = vmatpush.bf16.msra.mxu0 %v653
        %5710 = vmatpush.bf16.msra.mxu0 %v652
        %5711 = vmatpush.bf16.msra.mxu0 %v651
        %5712 = vmatmul.bf16.gmra.mxu0 %v5688
        %v5713 = vpop.f32.mrf.mxu0
        %v5714 = vadd.f32 0.0, %v5713
        %v5715 = vpop.f32.mrf.mxu0
        %5716 = vdwg.mxu0
        %5717 = vmatpush.bf16.msra.mxu0 %v666
        %5718 = vmatpush.bf16.msra.mxu0 %v665
        %5719 = vmatpush.bf16.msra.mxu0 %v664
        %5720 = vmatpush.bf16.msra.mxu0 %v663
        %5721 = vmatpush.bf16.msra.mxu0 %v662
        %5722 = vmatpush.bf16.msra.mxu0 %v661
        %5723 = vmatpush.bf16.msra.mxu0 %v660
        %5724 = vmatpush.bf16.msra.mxu0 %v659
        %5725 = vmatmul.bf16.gmra.mxu0 %v5689
        %v5726 = vpop.f32.mrf.mxu0
        %v5727 = vadd.f32 0.0, %v5726
        %v5728 = vpop.f32.mrf.mxu0
        %5729 = vdwg.mxu0
        %5730 = vmatpush.bf16.msra.mxu0 %v674
        %5731 = vmatpush.bf16.msra.mxu0 %v673
        %5732 = vmatpush.bf16.msra.mxu0 %v672
        %5733 = vmatpush.bf16.msra.mxu0 %v671
        %5734 = vmatpush.bf16.msra.mxu0 %v670
        %5735 = vmatpush.bf16.msra.mxu0 %v669
        %5736 = vmatpush.bf16.msra.mxu0 %v668
        %5737 = vmatpush.bf16.msra.mxu0 %v667
        %5738 = vmatmul.bf16.gmra.mxu0 %v5690
        %v5739 = vpop.f32.mrf.mxu0
        %v5740 = vadd.f32 0.0, %v5739
        %v5741 = vpop.f32.mrf.mxu0
        %5742 = vdwg.mxu0
        %v5743 = vld [vmem:[#allocation4] sm:$0xf]
        %5745 = vset.pattern.permute.xlu0 0
        %5746 = vperm.xlu0 %5745, %v5663
        %v5747 = vpop.permute.xlu0 %5746
        %v5749 = vmul.f32 %v5747, %v5743
        %v5754 = vrot.slane %v5714, 7
        %v5755 = vsel %vm5647, %v5754, %v5701
        %v5756 = vrot.slane %v5727, 6
        %v5757 = vsel %vm5649, %v5756, %v5755
        %v5758 = vrot.slane %v5740, 5
        %v5759 = vsel %vm5651, %v5758, %v5757
        %v5761 = vadd.f32 %v5749, %v5759
        %5762 = vst [vmem:[#allocation4] sm:$0xf] %v5761
        %5763 = vst.msk [vmem:[#allocation2] sm:$0xf] %vm5678, %v5660
        %p5764 = scmp.eq.s32.totalorder %s32, 1
        // Predicated region
        $region69: #{tpu_custom_call.1} parent=51 // pred_check
          %p5765 = pneg %p5764
        $region70: #{tpu_custom_call.1} parent=51 // pred_check_branch
          %5767 = sbr.rel (%p5765) target = $region72
        $region71: #{tpu_custom_call.1} parent=51 // pred_region
          %v5768 = vld [vmem:[#allocation4] sm:$0xf]
          %v5769 = vld [vmem:[#allocation3] sm:$0xf]
          %v5770 = vrcp.pop %v5769
          %5772 = vset.pattern.permute.xlu0 0
          %5773 = vperm.xlu0 %5772, %v5770
          %v5774 = vpop.permute.xlu0 %5773
          %v5776 = vmul.f32 %v5768, %v5774
          %5777 = vst [vmem:[#allocation12] sm:$0xf] %v5776
        $region72: #{tpu_custom_call.1} parent=51 // pred_fallthru
          _
        // Predicated region
        $region73: #{tpu_custom_call.1} parent=51 // pred_check
          %p5778 = pneg %p239
        $region74: #{tpu_custom_call.1} parent=51 // pred_check_branch
          %5780 = sbr.rel (%p5778) target = $region76
        $region75: #{tpu_custom_call.1} parent=51 // pred_region
          %5782 = vsyncadd [#allocation8], 0
          %s5783 = smul.addr %s31, 4
          %s5784 = scalar_lea.hbm %s8, %s5783
          %s5786 = sshll.u32 [#allocation12], 4
          %s5787 = int_to_ptr.vmem [resolvable:$true] %s5786
          %s5788 = sshll.u32 %s5784, 4
          %s5789 = int_to_ptr.hbm [resolvable:$true] %s5788
          %5791 = dma.vmem_to_hbm [thread:$0]  %s5787, 64, %s5789, [#allocation8]
        $region76: #{tpu_custom_call.1} parent=51 // pred_fallthru
          _
        // Predicated region
        $region77: #{tpu_custom_call.1} parent=51 // pred_check
          %p5792 = pneg %p239
        $region78: #{tpu_custom_call.1} parent=51 // pred_check_branch
          %5794 = sbr.rel (%p5792) target = $region80
        $region79: #{tpu_custom_call.1} parent=51 // pred_region
          %5796 = dma.done [#allocation8], 64
        $region80: #{tpu_custom_call.1} parent=51 // pred_fallthru
          _
      $region52: #{tpu_custom_call.1} parent=5 // pred_fallthru
        _
      %p5797 = scmp.le.s32.totalorder 2, %s22
      // Predicated region
      $region81: #{tpu_custom_call.1} parent=5 // pred_check
        %p5798 = pneg %p5797
      $region82: #{tpu_custom_call.1} parent=5 // pred_check_branch
        %5800 = sbr.rel (%p5798) target = $region84
      $region83: #{tpu_custom_call.1} parent=5 // pred_region
        %s5801 = ssub.s32 %s22, 2
      $region84: #{tpu_custom_call.1} parent=5 // pred_fallthru
        _
    $region6: #{tpu_custom_call.1} parent=1 // loop_footer
      %s26 = sadd.s32 1, %s22
    $region7: #{tpu_custom_call.1} parent=1 // loop_footer_branch
      %21 = sbr.rel target = $region3
    $region8: #{tpu_custom_call.1} parent=1 // loop_exit
      _
    %5802 = vsyncpa [#allocation7], 1
    %s5803 = scalar_lea.sflag [#allocation7], 1
    %5804 = vsyncpa %s5803, 1
    %5805 = vsyncpa [#allocation10], 1
    %s5806 = scalar_lea.sflag [#allocation10], 1
    %5807 = vsyncpa %s5806, 1
    %5808 = vsyncpa [#allocation8], 1
    %s5809 = scalar_lea.sflag [#allocation8], 1
    %5810 = vsyncpa %s5809, 1

</llo_original>
